<compile_context>
chip_gen: v7x
topology: tpu7x:2x2x1
jax: 0.10.0
libtpu: 0.0.40
codegen_flags: <defaults>
</compile_context>

<pallas_src>
import jax
import jax.numpy as jnp
from jax.experimental import pallas as pl
from jax.experimental.pallas import tpu as pltpu  # noqa: F401  (TPU backend assumed)

# ---- tiny synthetic "llama" config -----------------------------------------
B = 2            # batch
S = 8            # sequence length
BS = B * S       # flattened batch*seq
H = 32           # hidden size
N_HEADS = 4
HEAD_DIM = H // N_HEADS
HD2 = HEAD_DIM // 2
INTER = 64       # MLP intermediate size
N_LAYERS = 2
VOCAB = 128
OUT_DIM = 11     # regressor output dim
OUT_PAD = 128    # lane-dense padded regressor width
ROWS_PAD = 8     # sublane-dense padded logits rows
LORA_R = 16
LORA_ALPHA = 32
LORA_SCALE = LORA_ALPHA / LORA_R
EPS = 1e-6
ROPE_THETA = 10000.0


# ---- in-kernel helpers ------------------------------------------------------
def _rmsnorm(x, w):
    # x: [..., H] f32, w broadcastable to x
    var = jnp.mean(x * x, axis=-1, keepdims=True)
    return x * jax.lax.rsqrt(var + EPS) * w


def _dot(a, b):
    return jnp.dot(a, b, preferred_element_type=jnp.float32)


def _dot_t(a, b):
    # a @ b.T without an explicit in-kernel transpose
    return jax.lax.dot_general(a, b, (((1,), (1,)), ((), ())),
                               preferred_element_type=jnp.float32)


# ---- fused forward body (runs once; everything VMEM-resident) ---------------
def _forward_body(x_ref, allow_ref, cos_ref, sin_ref,
                  ln1_ref, wqk_ref, wv_ref, wo_ref,
                  ln2_ref, wg_ref, wu_ref, wd_ref,
                  lnf_ref, sel_ref, wr_ref, br_ref):
    x = x_ref[...]                      # [BS, H] f32 residual stream
    cosf = cos_ref[...]                 # [BS, H] per-head-tiled RoPE cos (f32)
    sinf = sin_ref[...]                 # [BS, H] per-head-tiled RoPE sin (f32)
    allow = allow_ref[...]              # [BS, BS] 0/1 causal+padding mask (f32)
    # head-stacked mask for one vectorized softmax over all heads
    allow_h = jnp.concatenate([allow] * N_HEADS, axis=0)   # [N_HEADS*BS, BS]

    for l in range(N_LAYERS):
        # ---- self-attention block ----
        xn = _rmsnorm(x, ln1_ref[l]).astype(jnp.bfloat16)
        # 128-lane fused projection: [q*inv_sqrt_d | rot(q)*inv_sqrt_d | k | rot(k)]
        qk = _dot(xn, wqk_ref[l])                       # [BS, 4H] = [16,128] f32
        v = _dot(xn, wv_ref[l])                         # [BS, H] f32
        q = qk[:, 0:H] * cosf + qk[:, H:2 * H] * sinf         # RoPE'd, pre-scaled
        k = qk[:, 2 * H:3 * H] * cosf + qk[:, 3 * H:4 * H] * sinf
        qb = q.astype(jnp.bfloat16)
        kb = k.astype(jnp.bfloat16)
        vb = v.astype(jnp.bfloat16)

        # per-head score tiles stacked along sublanes -> one softmax pipeline
        s_all = jnp.concatenate(
            [_dot_t(qb[:, h * HEAD_DIM:(h + 1) * HEAD_DIM],
                    kb[:, h * HEAD_DIM:(h + 1) * HEAD_DIM])
             for h in range(N_HEADS)], axis=0)           # [N_HEADS*BS, BS] f32
        m = jnp.max(s_all, axis=-1, keepdims=True)
        p = jnp.exp(s_all - m) * allow_h                 # multiplicative mask
        denom = jnp.sum(p, axis=-1, keepdims=True) + 1e-9   # fully-masked rows -> 0
        p = p * pl.reciprocal(denom, approx=True)
        pb = p.astype(jnp.bfloat16)

        # per-head context + o_proj accumulation (no lane-concat of heads)
        wo_l = wo_ref[l]                                 # [H, H] bf16
        for h in range(N_HEADS):
            lo = h * HEAD_DIM
            ctx = _dot(pb[h * BS:(h + 1) * BS],          # [BS, BS] bf16
                       vb[:, lo:lo + HEAD_DIM])          # [BS, HEAD_DIM] f32
            x = x + _dot(ctx.astype(jnp.bfloat16),
                         wo_l[lo:lo + HEAD_DIM, :])      # [BS, H] f32

        # ---- SwiGLU MLP block (gate / up as two separate 64-lane dots) ----
        xn2 = _rmsnorm(x, ln2_ref[l]).astype(jnp.bfloat16)
        g = _dot(xn2, wg_ref[l])                         # [BS, INTER] f32
        u = _dot(xn2, wu_ref[l])                         # [BS, INTER] f32
        hmlp = (jax.nn.silu(g) * u).astype(jnp.bfloat16)
        x = x + _dot(hmlp, wd_ref[l])                    # [BS, H] f32

    # ---- last-position pooling (one-hot dot) + final RMSNorm + regressor ----
    x_last = _dot(sel_ref[...], x)                       # [ROWS_PAD, H] f32 (pad rows 0)
    xn_f = _rmsnorm(x_last, lnf_ref[...])
    logits = _dot(xn_f.astype(jnp.bfloat16), wr_ref[...]) + br_ref[...]
    return logits                                        # [ROWS_PAD, OUT_PAD] f32


def fused_forward_kernel(x_ref, allow_ref, cos_ref, sin_ref,
                         ln1_ref, wqk_ref, wv_ref, wo_ref,
                         ln2_ref, wg_ref, wu_ref, wd_ref,
                         lnf_ref, sel_ref, wr_ref, br_ref, logits_ref):
    logits_ref[...] = _forward_body(
        x_ref, allow_ref, cos_ref, sin_ref,
        ln1_ref, wqk_ref, wv_ref, wo_ref,
        ln2_ref, wg_ref, wu_ref, wd_ref,
        lnf_ref, sel_ref, wr_ref, br_ref)


def fused_forward_loss_kernel(x_ref, allow_ref, cos_ref, sin_ref,
                              ln1_ref, wqk_ref, wv_ref, wo_ref,
                              ln2_ref, wg_ref, wu_ref, wd_ref,
                              lnf_ref, sel_ref, wr_ref, br_ref,
                              labels_ref, lmask_ref,
                              logits_ref, loss_ref):
    logits = _forward_body(
        x_ref, allow_ref, cos_ref, sin_ref,
        ln1_ref, wqk_ref, wv_ref, wo_ref,
        ln2_ref, wg_ref, wu_ref, wd_ref,
        lnf_ref, sel_ref, wr_ref, br_ref)
    logits_ref[...] = logits
    # explicit mask over valid (row < B, col < OUT_DIM) region -> robust to padding
    diff = (logits - labels_ref[...]) * lmask_ref[...]
    loss_ref[...] = jnp.sum(diff * diff, keepdims=True) * (1.0 / (B * OUT_DIM))


# ---- one-time wrapper-side weight fusion (hoisted out of the per-call jit) ---
def _rotate_half_cols(w):
    # Output-column permutation-with-sign so that x @ _rotate_half_cols(W)
    # == rotate_half(x @ W) with per-head halves [q1|q2] -> [-q2|q1].
    w4 = w.reshape(H, N_HEADS, 2, HD2)
    return jnp.concatenate([-w4[:, :, 1, :], w4[:, :, 0, :]], axis=2).reshape(H, H)


def _rope_tables():
    inv_freq = 1.0 / (ROPE_THETA ** (jnp.arange(0, HEAD_DIM, 2, dtype=jnp.float32)
                                     / HEAD_DIM))                 # [HD2]
    pos = jnp.arange(S, dtype=jnp.float32)
    freqs = pos[:, None] * inv_freq[None, :]                      # [S, HD2]
    cos_h = jnp.concatenate([jnp.cos(freqs), jnp.cos(freqs)], axis=-1)  # [S, HEAD_DIM]
    sin_h = jnp.concatenate([jnp.sin(freqs), jnp.sin(freqs)], axis=-1)
    cos_full = jnp.tile(jnp.tile(cos_h, (1, N_HEADS)), (B, 1))    # [BS, H]
    sin_full = jnp.tile(jnp.tile(sin_h, (1, N_HEADS)), (B, 1))
    return cos_full, sin_full


def prepare_params(params):
    """Run once per model: merge LoRA, fuse/pre-cast weights, build constants."""
    inv_sqrt_d = 1.0 / (HEAD_DIM ** 0.5)
    ln1, wqk, wv, wo, ln2, wg, wu, wd = ([] for _ in range(8))
    for p in params["layers"]:
        # merge LoRA adapters (eval-mode: dropout is identity)
        wq_eff = (p["wq"] + LORA_SCALE * (p["aq"] @ p["bq"])) * inv_sqrt_d
        wv_eff = p["wv"] + LORA_SCALE * (p["av"] @ p["bv"])
        wqk.append(jnp.concatenate(
            [wq_eff, _rotate_half_cols(wq_eff),
             p["wk"], _rotate_half_cols(p["wk"])], axis=1))        # [H, 4H] = 128 lanes
        wv.append(wv_eff)
        wo.append(p["wo"])
        ln1.append(p["ln1"])
        ln2.append(p["ln2"])
        wg.append(p["wg"])
        wu.append(p["wu"])
        wd.append(p["wd"])

    stk_bf = lambda xs: jnp.stack(xs, axis=0).astype(jnp.bfloat16)
    stk_f32 = lambda xs: jnp.stack(xs, axis=0).astype(jnp.float32)
    cosf, sinf = _rope_tables()

    # one-hot last-token selection matrix, padded to 8 sublanes
    sel = jnp.zeros((ROWS_PAD, BS), jnp.float32)
    sel = sel.at[jnp.arange(B), jnp.arange(B) * S + S - 1].set(1.0)

    wr_pad = jnp.zeros((H, OUT_PAD), jnp.float32).at[:, :OUT_DIM].set(params["wr"])
    br_pad = jnp.zeros((1, OUT_PAD), jnp.float32).at[:, :OUT_DIM].set(params["br"])
    loss_mask = jnp.zeros((ROWS_PAD, OUT_PAD), jnp.float32).at[:B, :OUT_DIM].set(1.0)

    return {
        "embed": params["embed"].astype(jnp.float32),
        "cos": cosf, "sin": sinf,
        "ln1": stk_f32(ln1), "wqk": stk_bf(wqk), "wv": stk_bf(wv), "wo": stk_bf(wo),
        "ln2": stk_f32(ln2), "wg": stk_bf(wg), "wu": stk_bf(wu), "wd": stk_bf(wd),
        "lnf": params["final_norm"].astype(jnp.float32),
        "sel": sel,
        "wr": wr_pad.astype(jnp.bfloat16),
        "br": br_pad,
        "loss_mask": loss_mask,
    }


# ---- per-call wrapper (embedding gather + mask build + one pallas_call) ------
def _allow_matrix(attention_mask):
    # Block-diagonal (per-batch) causal + key-padding 0/1 mask on [BS, BS].
    idx = jnp.arange(BS)
    batch = idx // S
    posn = idx % S
    same_batch = batch[:, None] == batch[None, :]
    causal = posn[None, :] <= posn[:, None]
    key_ok = attention_mask.reshape(BS).astype(bool)[None, :]
    return (same_batch & causal & key_ok).astype(jnp.float32)


def _kernel_inputs(fused, input_ids, attention_mask):
    x0 = fused["embed"][input_ids].reshape(BS, H)
    allow = _allow_matrix(attention_mask)
    return (x0, allow, fused["cos"], fused["sin"],
            fused["ln1"], fused["wqk"], fused["wv"], fused["wo"],
            fused["ln2"], fused["wg"], fused["wu"], fused["wd"],
            fused["lnf"], fused["sel"], fused["wr"], fused["br"])


@jax.jit
def forward_logits(fused, input_ids, attention_mask):
    args = _kernel_inputs(fused, input_ids, attention_mask)
    logits_pad = pl.pallas_call(
        fused_forward_kernel,
        out_shape=jax.ShapeDtypeStruct((ROWS_PAD, OUT_PAD), jnp.float32),
    )(*args)
    return logits_pad[:B, :OUT_DIM]


@jax.jit
def forward_with_loss(fused, input_ids, attention_mask, labels):
    args = _kernel_inputs(fused, input_ids, attention_mask)
    labels_pad = jnp.zeros((ROWS_PAD, OUT_PAD), jnp.float32).at[:B, :OUT_DIM].set(labels)
    logits_pad, loss = pl.pallas_call(
        fused_forward_loss_kernel,
        out_shape=(jax.ShapeDtypeStruct((ROWS_PAD, OUT_PAD), jnp.float32),
                   jax.ShapeDtypeStruct((1, 1), jnp.float32)),
    )(*args, labels_pad, fused["loss_mask"])
    return loss[0, 0], logits_pad[:B, :OUT_DIM]


def forward(fused, input_ids, attention_mask, labels=None):
    if labels is None:
        return forward_logits(fused, input_ids, attention_mask)
    return forward_with_loss(fused, input_ids, attention_mask, labels)


# ---- parameter init ----------------------------------------------------------
def init_params(key):
    def normal(k, shape, scale=0.05):
        return scale * jax.random.normal(k, shape, dtype=jnp.float32)

    keys = iter(jax.random.split(key, 16 * N_LAYERS + 8))
    params = {"embed": normal(next(keys), (VOCAB, H)), "layers": []}
    for _ in range(N_LAYERS):
        layer = {
            "ln1": jnp.ones((1, H), jnp.float32),
            "wq": normal(next(keys), (H, H)),
            "wk": normal(next(keys), (H, H)),
            "wv": normal(next(keys), (H, H)),
            "wo": normal(next(keys), (H, H)),
            # LoRA adapters on q_proj / v_proj (PEFT inits B=0; use small
            # deterministic values so the adapter path is exercised).
            "aq": normal(next(keys), (H, LORA_R)),
            "bq": normal(next(keys), (LORA_R, H), scale=0.01),
            "av": normal(next(keys), (H, LORA_R)),
            "bv": normal(next(keys), (LORA_R, H), scale=0.01),
            "ln2": jnp.ones((1, H), jnp.float32),
            "wg": normal(next(keys), (H, INTER)),
            "wu": normal(next(keys), (H, INTER)),
            "wd": normal(next(keys), (INTER, H)),
        }
        params["layers"].append(layer)
    params["final_norm"] = jnp.ones((1, H), jnp.float32)
    params["wr"] = normal(next(keys), (H, OUT_DIM))
    params["br"] = normal(next(keys), (1, OUT_DIM))
    return params


if __name__ == "__main__":
    key = jax.random.PRNGKey(0)
    k_par, k_ids, k_lab = jax.random.split(key, 3)

    params = init_params(k_par)
    fused = prepare_params(params)          # one-time weight fusion (hoisted)
    fused = jax.block_until_ready(fused)

    input_ids = jax.random.randint(k_ids, (B, S), 0, VOCAB, dtype=jnp.int32)
    # second example is left-padded (first two positions masked out)
    attention_mask = jnp.array([[1] * S, [0, 0] + [1] * (S - 2)], dtype=jnp.int32)
    labels = jax.random.normal(k_lab, (B, OUT_DIM), dtype=jnp.float32)

    loss, logits = forward(fused, input_ids, attention_mask, labels)
    jax.block_until_ready((loss, logits))
    assert logits.shape == (B, OUT_DIM) and loss.shape == ()
    assert bool(jnp.isfinite(loss)) and bool(jnp.all(jnp.isfinite(logits)))

    logits_only = forward(fused, input_ids, attention_mask)
    jax.block_until_ready(logits_only)
    assert logits_only.shape == (B, OUT_DIM)
    assert bool(jnp.all(jnp.isfinite(logits_only)))

    print("KERNEL_OK")
</pallas_src>

<mosaic_0001>
module attributes {stable_mosaic.version = 11 : i64} {
  func.func @fused_forward_loss_kernel(%arg0: memref<16x32xf32, #tpu.memory_space<vmem>>, %arg1: memref<16x16xf32, #tpu.memory_space<vmem>>, %arg2: memref<16x32xf32, #tpu.memory_space<vmem>>, %arg3: memref<16x32xf32, #tpu.memory_space<vmem>>, %arg4: memref<2x1x32xf32, #tpu.memory_space<vmem>>, %arg5: memref<2x32x128xbf16, #tpu.memory_space<vmem>>, %arg6: memref<2x32x32xbf16, #tpu.memory_space<vmem>>, %arg7: memref<2x32x32xbf16, #tpu.memory_space<vmem>>, %arg8: memref<2x1x32xf32, #tpu.memory_space<vmem>>, %arg9: memref<2x32x64xbf16, #tpu.memory_space<vmem>>, %arg10: memref<2x32x64xbf16, #tpu.memory_space<vmem>>, %arg11: memref<2x64x32xbf16, #tpu.memory_space<vmem>>, %arg12: memref<1x32xf32, #tpu.memory_space<vmem>>, %arg13: memref<8x16xf32, #tpu.memory_space<vmem>>, %arg14: memref<32x128xbf16, #tpu.memory_space<vmem>>, %arg15: memref<1x128xf32, #tpu.memory_space<vmem>>, %arg16: memref<8x128xf32, #tpu.memory_space<vmem>>, %arg17: memref<8x128xf32, #tpu.memory_space<vmem>>, %arg18: memref<8x128xf32, #tpu.memory_space<vmem>>, %arg19: memref<1x1xf32, #tpu.memory_space<vmem>>) attributes {dimension_semantics = [], scalar_prefetch = 0 : i64, scratch_operands = 0 : i64, tpu.core_type = #tpu.core_type<tc>} {
    %c0 = arith.constant 0 : index
    %c0_0 = arith.constant 0 : index
    %0 = vector.load %arg0[%c0, %c0_0] : memref<16x32xf32, #tpu.memory_space<vmem>>, vector<16x32xf32>
    %c0_1 = arith.constant 0 : index
    %c0_2 = arith.constant 0 : index
    %1 = vector.load %arg2[%c0_1, %c0_2] : memref<16x32xf32, #tpu.memory_space<vmem>>, vector<16x32xf32>
    %c0_3 = arith.constant 0 : index
    %c0_4 = arith.constant 0 : index
    %2 = vector.load %arg3[%c0_3, %c0_4] : memref<16x32xf32, #tpu.memory_space<vmem>>, vector<16x32xf32>
    %c0_5 = arith.constant 0 : index
    %c0_6 = arith.constant 0 : index
    %3 = vector.load %arg1[%c0_5, %c0_6] : memref<16x16xf32, #tpu.memory_space<vmem>>, vector<16x16xf32>
    %4 = tpu.concatenate %3, %3, %3, %3 in 0 : vector<16x16xf32>, vector<16x16xf32>, vector<16x16xf32>, vector<16x16xf32> -> vector<64x16xf32>
    %c0_7 = arith.constant 0 : index
    %c0_8 = arith.constant 0 : index
    %c0_9 = arith.constant 0 : index
    %5 = vector.load %arg4[%c0_7, %c0_8, %c0_9] : memref<2x1x32xf32, #tpu.memory_space<vmem>>, vector<1x1x32xf32>
    %6 = vector.shape_cast %5 : vector<1x1x32xf32> to vector<1x32xf32>
    %7 = arith.mulf %0, %0 : vector<16x32xf32>
    %cst = arith.constant dense<0.000000e+00> : vector<16xf32>
    %8 = vector.multi_reduction <add>, %7, %cst [1] : vector<16x32xf32> to vector<16xf32>
    %9 = vector.shape_cast %8 : vector<16xf32> to vector<16x1xf32>
    %cst_10 = arith.constant 3.200000e+01 : f32
    %10 = vector.broadcast %cst_10 : f32 to vector<16x1xf32>
    %11 = arith.divf %9, %10 : vector<16x1xf32>
    %cst_11 = arith.constant 9.99999997E-7 : f32
    %12 = vector.broadcast %cst_11 : f32 to vector<16x1xf32>
    %13 = arith.addf %11, %12 : vector<16x1xf32>
    %14 = math.rsqrt %13 : vector<16x1xf32>
    %15 = vector.broadcast %14 : vector<16x1xf32> to vector<16x32xf32>
    %16 = arith.mulf %0, %15 : vector<16x32xf32>
    %17 = vector.broadcast %6 : vector<1x32xf32> to vector<16x32xf32>
    %18 = arith.mulf %16, %17 : vector<16x32xf32>
    %19 = arith.truncf %18 : vector<16x32xf32> to vector<16x32xbf16>
    %c0_12 = arith.constant 0 : index
    %c0_13 = arith.constant 0 : index
    %c0_14 = arith.constant 0 : index
    %20 = vector.load %arg5[%c0_12, %c0_13, %c0_14] : memref<2x32x128xbf16, #tpu.memory_space<vmem>>, vector<1x32x128xbf16>
    %21 = vector.shape_cast %20 : vector<1x32x128xbf16> to vector<32x128xbf16>
    %cst_15 = arith.constant dense<0.000000e+00> : vector<16x128xf32>
    %22 = tpu.matmul %19, %21, %cst_15 {dimension_numbers = #tpu.dot_dimension_numbers<[1], [0], [0], [1], [0, 0, 1, 1], [], []>} : vector<16x32xbf16>, vector<32x128xbf16>, vector<16x128xf32> -> vector<16x128xf32>
    %c0_16 = arith.constant 0 : index
    %c0_17 = arith.constant 0 : index
    %c0_18 = arith.constant 0 : index
    %23 = vector.load %arg6[%c0_16, %c0_17, %c0_18] : memref<2x32x32xbf16, #tpu.memory_space<vmem>>, vector<1x32x32xbf16>
    %24 = vector.shape_cast %23 : vector<1x32x32xbf16> to vector<32x32xbf16>
    %cst_19 = arith.constant dense<0.000000e+00> : vector<16x32xf32>
    %25 = tpu.matmul %19, %24, %cst_19 {dimension_numbers = #tpu.dot_dimension_numbers<[1], [0], [0], [1], [0, 0, 1, 1], [], []>} : vector<16x32xbf16>, vector<32x32xbf16>, vector<16x32xf32> -> vector<16x32xf32>
    %26 = vector.extract_strided_slice %22 {offsets = [0, 0], sizes = [16, 32], strides = [1, 1]} : vector<16x128xf32> to vector<16x32xf32>
    %27 = arith.mulf %26, %1 : vector<16x32xf32>
    %28 = vector.extract_strided_slice %22 {offsets = [0, 32], sizes = [16, 32], strides = [1, 1]} : vector<16x128xf32> to vector<16x32xf32>
    %29 = arith.mulf %28, %2 : vector<16x32xf32>
    %30 = arith.addf %27, %29 : vector<16x32xf32>
    %31 = vector.extract_strided_slice %22 {offsets = [0, 64], sizes = [16, 32], strides = [1, 1]} : vector<16x128xf32> to vector<16x32xf32>
    %32 = arith.mulf %31, %1 : vector<16x32xf32>
    %33 = vector.extract_strided_slice %22 {offsets = [0, 96], sizes = [16, 32], strides = [1, 1]} : vector<16x128xf32> to vector<16x32xf32>
    %34 = arith.mulf %33, %2 : vector<16x32xf32>
    %35 = arith.addf %32, %34 : vector<16x32xf32>
    %36 = arith.truncf %30 : vector<16x32xf32> to vector<16x32xbf16>
    %37 = arith.truncf %35 : vector<16x32xf32> to vector<16x32xbf16>
    %38 = arith.truncf %25 : vector<16x32xf32> to vector<16x32xbf16>
    %39 = vector.extract_strided_slice %36 {offsets = [0, 0], sizes = [16, 8], strides = [1, 1]} : vector<16x32xbf16> to vector<16x8xbf16>
    %40 = vector.extract_strided_slice %37 {offsets = [0, 0], sizes = [16, 8], strides = [1, 1]} : vector<16x32xbf16> to vector<16x8xbf16>
    %cst_20 = arith.constant dense<0.000000e+00> : vector<16x16xf32>
    %41 = tpu.matmul %39, %40, %cst_20 {dimension_numbers = #tpu.dot_dimension_numbers<[1], [1], [0], [0], [0, 0, 1, 0], [], []>} : vector<16x8xbf16>, vector<16x8xbf16>, vector<16x16xf32> -> vector<16x16xf32>
    %42 = vector.extract_strided_slice %36 {offsets = [0, 8], sizes = [16, 8], strides = [1, 1]} : vector<16x32xbf16> to vector<16x8xbf16>
    %43 = vector.extract_strided_slice %37 {offsets = [0, 8], sizes = [16, 8], strides = [1, 1]} : vector<16x32xbf16> to vector<16x8xbf16>
    %cst_21 = arith.constant dense<0.000000e+00> : vector<16x16xf32>
    %44 = tpu.matmul %42, %43, %cst_21 {dimension_numbers = #tpu.dot_dimension_numbers<[1], [1], [0], [0], [0, 0, 1, 0], [], []>} : vector<16x8xbf16>, vector<16x8xbf16>, vector<16x16xf32> -> vector<16x16xf32>
    %45 = vector.extract_strided_slice %36 {offsets = [0, 16], sizes = [16, 8], strides = [1, 1]} : vector<16x32xbf16> to vector<16x8xbf16>
    %46 = vector.extract_strided_slice %37 {offsets = [0, 16], sizes = [16, 8], strides = [1, 1]} : vector<16x32xbf16> to vector<16x8xbf16>
    %cst_22 = arith.constant dense<0.000000e+00> : vector<16x16xf32>
    %47 = tpu.matmul %45, %46, %cst_22 {dimension_numbers = #tpu.dot_dimension_numbers<[1], [1], [0], [0], [0, 0, 1, 0], [], []>} : vector<16x8xbf16>, vector<16x8xbf16>, vector<16x16xf32> -> vector<16x16xf32>
    %48 = vector.extract_strided_slice %36 {offsets = [0, 24], sizes = [16, 8], strides = [1, 1]} : vector<16x32xbf16> to vector<16x8xbf16>
    %49 = vector.extract_strided_slice %37 {offsets = [0, 24], sizes = [16, 8], strides = [1, 1]} : vector<16x32xbf16> to vector<16x8xbf16>
    %cst_23 = arith.constant dense<0.000000e+00> : vector<16x16xf32>
    %50 = tpu.matmul %48, %49, %cst_23 {dimension_numbers = #tpu.dot_dimension_numbers<[1], [1], [0], [0], [0, 0, 1, 0], [], []>} : vector<16x8xbf16>, vector<16x8xbf16>, vector<16x16xf32> -> vector<16x16xf32>
    %51 = tpu.concatenate %41, %44, %47, %50 in 0 : vector<16x16xf32>, vector<16x16xf32>, vector<16x16xf32>, vector<16x16xf32> -> vector<64x16xf32>
    %cst_24 = arith.constant dense<0xFF800000> : vector<64xf32>
    %52 = vector.multi_reduction <maximumf>, %51, %cst_24 [1] : vector<64x16xf32> to vector<64xf32>
    %53 = vector.shape_cast %52 : vector<64xf32> to vector<64x1xf32>
    %54 = vector.broadcast %53 : vector<64x1xf32> to vector<64x16xf32>
    %55 = arith.subf %51, %54 : vector<64x16xf32>
    %56 = math.exp %55 : vector<64x16xf32>
    %57 = arith.mulf %56, %4 : vector<64x16xf32>
    %cst_25 = arith.constant dense<0.000000e+00> : vector<64xf32>
    %58 = vector.multi_reduction <add>, %57, %cst_25 [1] : vector<64x16xf32> to vector<64xf32>
    %59 = vector.shape_cast %58 : vector<64xf32> to vector<64x1xf32>
    %cst_26 = arith.constant 9.99999971E-10 : f32
    %60 = vector.broadcast %cst_26 : f32 to vector<64x1xf32>
    %61 = arith.addf %59, %60 : vector<64x1xf32>
    %62 = tpu.reciprocal %61 {approx = true} : vector<64x1xf32> -> vector<64x1xf32>
    %63 = vector.broadcast %62 : vector<64x1xf32> to vector<64x16xf32>
    %64 = arith.mulf %57, %63 : vector<64x16xf32>
    %65 = arith.truncf %64 : vector<64x16xf32> to vector<64x16xbf16>
    %c0_27 = arith.constant 0 : index
    %c0_28 = arith.constant 0 : index
    %c0_29 = arith.constant 0 : index
    %66 = vector.load %arg7[%c0_27, %c0_28, %c0_29] : memref<2x32x32xbf16, #tpu.memory_space<vmem>>, vector<1x32x32xbf16>
    %67 = vector.shape_cast %66 : vector<1x32x32xbf16> to vector<32x32xbf16>
    %68 = vector.extract_strided_slice %65 {offsets = [0, 0], sizes = [16, 16], strides = [1, 1]} : vector<64x16xbf16> to vector<16x16xbf16>
    %69 = vector.extract_strided_slice %38 {offsets = [0, 0], sizes = [16, 8], strides = [1, 1]} : vector<16x32xbf16> to vector<16x8xbf16>
    %cst_30 = arith.constant dense<0.000000e+00> : vector<16x8xf32>
    %70 = tpu.matmul %68, %69, %cst_30 {dimension_numbers = #tpu.dot_dimension_numbers<[1], [0], [0], [1], [0, 0, 1, 1], [], []>} : vector<16x16xbf16>, vector<16x8xbf16>, vector<16x8xf32> -> vector<16x8xf32>
    %71 = arith.truncf %70 : vector<16x8xf32> to vector<16x8xbf16>
    %72 = vector.extract_strided_slice %67 {offsets = [0, 0], sizes = [8, 32], strides = [1, 1]} : vector<32x32xbf16> to vector<8x32xbf16>
    %cst_31 = arith.constant dense<0.000000e+00> : vector<16x32xf32>
    %73 = tpu.matmul %71, %72, %cst_31 {dimension_numbers = #tpu.dot_dimension_numbers<[1], [0], [0], [1], [0, 0, 1, 1], [], []>} : vector<16x8xbf16>, vector<8x32xbf16>, vector<16x32xf32> -> vector<16x32xf32>
    %74 = arith.addf %0, %73 : vector<16x32xf32>
    %75 = vector.extract_strided_slice %65 {offsets = [16, 0], sizes = [16, 16], strides = [1, 1]} : vector<64x16xbf16> to vector<16x16xbf16>
    %76 = vector.extract_strided_slice %38 {offsets = [0, 8], sizes = [16, 8], strides = [1, 1]} : vector<16x32xbf16> to vector<16x8xbf16>
    %cst_32 = arith.constant dense<0.000000e+00> : vector<16x8xf32>
    %77 = tpu.matmul %75, %76, %cst_32 {dimension_numbers = #tpu.dot_dimension_numbers<[1], [0], [0], [1], [0, 0, 1, 1], [], []>} : vector<16x16xbf16>, vector<16x8xbf16>, vector<16x8xf32> -> vector<16x8xf32>
    %78 = arith.truncf %77 : vector<16x8xf32> to vector<16x8xbf16>
    %79 = vector.extract_strided_slice %67 {offsets = [8, 0], sizes = [8, 32], strides = [1, 1]} : vector<32x32xbf16> to vector<8x32xbf16>
    %cst_33 = arith.constant dense<0.000000e+00> : vector<16x32xf32>
    %80 = tpu.matmul %78, %79, %cst_33 {dimension_numbers = #tpu.dot_dimension_numbers<[1], [0], [0], [1], [0, 0, 1, 1], [], []>} : vector<16x8xbf16>, vector<8x32xbf16>, vector<16x32xf32> -> vector<16x32xf32>
    %81 = arith.addf %74, %80 : vector<16x32xf32>
    %82 = vector.extract_strided_slice %65 {offsets = [32, 0], sizes = [16, 16], strides = [1, 1]} : vector<64x16xbf16> to vector<16x16xbf16>
    %83 = vector.extract_strided_slice %38 {offsets = [0, 16], sizes = [16, 8], strides = [1, 1]} : vector<16x32xbf16> to vector<16x8xbf16>
    %cst_34 = arith.constant dense<0.000000e+00> : vector<16x8xf32>
    %84 = tpu.matmul %82, %83, %cst_34 {dimension_numbers = #tpu.dot_dimension_numbers<[1], [0], [0], [1], [0, 0, 1, 1], [], []>} : vector<16x16xbf16>, vector<16x8xbf16>, vector<16x8xf32> -> vector<16x8xf32>
    %85 = arith.truncf %84 : vector<16x8xf32> to vector<16x8xbf16>
    %86 = vector.extract_strided_slice %67 {offsets = [16, 0], sizes = [8, 32], strides = [1, 1]} : vector<32x32xbf16> to vector<8x32xbf16>
    %cst_35 = arith.constant dense<0.000000e+00> : vector<16x32xf32>
    %87 = tpu.matmul %85, %86, %cst_35 {dimension_numbers = #tpu.dot_dimension_numbers<[1], [0], [0], [1], [0, 0, 1, 1], [], []>} : vector<16x8xbf16>, vector<8x32xbf16>, vector<16x32xf32> -> vector<16x32xf32>
    %88 = arith.addf %81, %87 : vector<16x32xf32>
    %89 = vector.extract_strided_slice %65 {offsets = [48, 0], sizes = [16, 16], strides = [1, 1]} : vector<64x16xbf16> to vector<16x16xbf16>
    %90 = vector.extract_strided_slice %38 {offsets = [0, 24], sizes = [16, 8], strides = [1, 1]} : vector<16x32xbf16> to vector<16x8xbf16>
    %cst_36 = arith.constant dense<0.000000e+00> : vector<16x8xf32>
    %91 = tpu.matmul %89, %90, %cst_36 {dimension_numbers = #tpu.dot_dimension_numbers<[1], [0], [0], [1], [0, 0, 1, 1], [], []>} : vector<16x16xbf16>, vector<16x8xbf16>, vector<16x8xf32> -> vector<16x8xf32>
    %92 = arith.truncf %91 : vector<16x8xf32> to vector<16x8xbf16>
    %93 = vector.extract_strided_slice %67 {offsets = [24, 0], sizes = [8, 32], strides = [1, 1]} : vector<32x32xbf16> to vector<8x32xbf16>
    %cst_37 = arith.constant dense<0.000000e+00> : vector<16x32xf32>
    %94 = tpu.matmul %92, %93, %cst_37 {dimension_numbers = #tpu.dot_dimension_numbers<[1], [0], [0], [1], [0, 0, 1, 1], [], []>} : vector<16x8xbf16>, vector<8x32xbf16>, vector<16x32xf32> -> vector<16x32xf32>
    %95 = arith.addf %88, %94 : vector<16x32xf32>
    %c0_38 = arith.constant 0 : index
    %c0_39 = arith.constant 0 : index
    %c0_40 = arith.constant 0 : index
    %96 = vector.load %arg8[%c0_38, %c0_39, %c0_40] : memref<2x1x32xf32, #tpu.memory_space<vmem>>, vector<1x1x32xf32>
    %97 = vector.shape_cast %96 : vector<1x1x32xf32> to vector<1x32xf32>
    %98 = arith.mulf %95, %95 : vector<16x32xf32>
    %cst_41 = arith.constant dense<0.000000e+00> : vector<16xf32>
    %99 = vector.multi_reduction <add>, %98, %cst_41 [1] : vector<16x32xf32> to vector<16xf32>
    %100 = vector.shape_cast %99 : vector<16xf32> to vector<16x1xf32>
    %cst_42 = arith.constant 3.200000e+01 : f32
    %101 = vector.broadcast %cst_42 : f32 to vector<16x1xf32>
    %102 = arith.divf %100, %101 : vector<16x1xf32>
    %cst_43 = arith.constant 9.99999997E-7 : f32
    %103 = vector.broadcast %cst_43 : f32 to vector<16x1xf32>
    %104 = arith.addf %102, %103 : vector<16x1xf32>
    %105 = math.rsqrt %104 : vector<16x1xf32>
    %106 = vector.broadcast %105 : vector<16x1xf32> to vector<16x32xf32>
    %107 = arith.mulf %95, %106 : vector<16x32xf32>
    %108 = vector.broadcast %97 : vector<1x32xf32> to vector<16x32xf32>
    %109 = arith.mulf %107, %108 : vector<16x32xf32>
    %110 = arith.truncf %109 : vector<16x32xf32> to vector<16x32xbf16>
    %c0_44 = arith.constant 0 : index
    %c0_45 = arith.constant 0 : index
    %c0_46 = arith.constant 0 : index
    %111 = vector.load %arg9[%c0_44, %c0_45, %c0_46] : memref<2x32x64xbf16, #tpu.memory_space<vmem>>, vector<1x32x64xbf16>
    %112 = vector.shape_cast %111 : vector<1x32x64xbf16> to vector<32x64xbf16>
    %cst_47 = arith.constant dense<0.000000e+00> : vector<16x64xf32>
    %113 = tpu.matmul %110, %112, %cst_47 {dimension_numbers = #tpu.dot_dimension_numbers<[1], [0], [0], [1], [0, 0, 1, 1], [], []>} : vector<16x32xbf16>, vector<32x64xbf16>, vector<16x64xf32> -> vector<16x64xf32>
    %c0_48 = arith.constant 0 : index
    %c0_49 = arith.constant 0 : index
    %c0_50 = arith.constant 0 : index
    %114 = vector.load %arg10[%c0_48, %c0_49, %c0_50] : memref<2x32x64xbf16, #tpu.memory_space<vmem>>, vector<1x32x64xbf16>
    %115 = vector.shape_cast %114 : vector<1x32x64xbf16> to vector<32x64xbf16>
    %cst_51 = arith.constant dense<0.000000e+00> : vector<16x64xf32>
    %116 = tpu.matmul %110, %115, %cst_51 {dimension_numbers = #tpu.dot_dimension_numbers<[1], [0], [0], [1], [0, 0, 1, 1], [], []>} : vector<16x32xbf16>, vector<32x64xbf16>, vector<16x64xf32> -> vector<16x64xf32>
    %117 = arith.negf %113 : vector<16x64xf32>
    %118 = math.exp %117 : vector<16x64xf32>
    %cst_52 = arith.constant 1.000000e+00 : f32
    %119 = vector.broadcast %cst_52 : f32 to vector<16x64xf32>
    %120 = arith.addf %119, %118 : vector<16x64xf32>
    %121 = arith.divf %119, %120 : vector<16x64xf32>
    %122 = arith.mulf %113, %121 : vector<16x64xf32>
    %123 = arith.mulf %122, %116 : vector<16x64xf32>
    %124 = arith.truncf %123 : vector<16x64xf32> to vector<16x64xbf16>
    %c0_53 = arith.constant 0 : index
    %c0_54 = arith.constant 0 : index
    %c0_55 = arith.constant 0 : index
    %125 = vector.load %arg11[%c0_53, %c0_54, %c0_55] : memref<2x64x32xbf16, #tpu.memory_space<vmem>>, vector<1x64x32xbf16>
    %126 = vector.shape_cast %125 : vector<1x64x32xbf16> to vector<64x32xbf16>
    %cst_56 = arith.constant dense<0.000000e+00> : vector<16x32xf32>
    %127 = tpu.matmul %124, %126, %cst_56 {dimension_numbers = #tpu.dot_dimension_numbers<[1], [0], [0], [1], [0, 0, 1, 1], [], []>} : vector<16x64xbf16>, vector<64x32xbf16>, vector<16x32xf32> -> vector<16x32xf32>
    %128 = arith.addf %95, %127 : vector<16x32xf32>
    %c1 = arith.constant 1 : index
    %c0_57 = arith.constant 0 : index
    %c0_58 = arith.constant 0 : index
    %129 = vector.load %arg4[%c1, %c0_57, %c0_58] : memref<2x1x32xf32, #tpu.memory_space<vmem>>, vector<1x1x32xf32>
    %130 = vector.shape_cast %129 : vector<1x1x32xf32> to vector<1x32xf32>
    %131 = arith.mulf %128, %128 : vector<16x32xf32>
    %cst_59 = arith.constant dense<0.000000e+00> : vector<16xf32>
    %132 = vector.multi_reduction <add>, %131, %cst_59 [1] : vector<16x32xf32> to vector<16xf32>
    %133 = vector.shape_cast %132 : vector<16xf32> to vector<16x1xf32>
    %cst_60 = arith.constant 3.200000e+01 : f32
    %134 = vector.broadcast %cst_60 : f32 to vector<16x1xf32>
    %135 = arith.divf %133, %134 : vector<16x1xf32>
    %cst_61 = arith.constant 9.99999997E-7 : f32
    %136 = vector.broadcast %cst_61 : f32 to vector<16x1xf32>
    %137 = arith.addf %135, %136 : vector<16x1xf32>
    %138 = math.rsqrt %137 : vector<16x1xf32>
    %139 = vector.broadcast %138 : vector<16x1xf32> to vector<16x32xf32>
    %140 = arith.mulf %128, %139 : vector<16x32xf32>
    %141 = vector.broadcast %130 : vector<1x32xf32> to vector<16x32xf32>
    %142 = arith.mulf %140, %141 : vector<16x32xf32>
    %143 = arith.truncf %142 : vector<16x32xf32> to vector<16x32xbf16>
    %c1_62 = arith.constant 1 : index
    %c0_63 = arith.constant 0 : index
    %c0_64 = arith.constant 0 : index
    %144 = vector.load %arg5[%c1_62, %c0_63, %c0_64] : memref<2x32x128xbf16, #tpu.memory_space<vmem>>, vector<1x32x128xbf16>
    %145 = vector.shape_cast %144 : vector<1x32x128xbf16> to vector<32x128xbf16>
    %cst_65 = arith.constant dense<0.000000e+00> : vector<16x128xf32>
    %146 = tpu.matmul %143, %145, %cst_65 {dimension_numbers = #tpu.dot_dimension_numbers<[1], [0], [0], [1], [0, 0, 1, 1], [], []>} : vector<16x32xbf16>, vector<32x128xbf16>, vector<16x128xf32> -> vector<16x128xf32>
    %c1_66 = arith.constant 1 : index
    %c0_67 = arith.constant 0 : index
    %c0_68 = arith.constant 0 : index
    %147 = vector.load %arg6[%c1_66, %c0_67, %c0_68] : memref<2x32x32xbf16, #tpu.memory_space<vmem>>, vector<1x32x32xbf16>
    %148 = vector.shape_cast %147 : vector<1x32x32xbf16> to vector<32x32xbf16>
    %cst_69 = arith.constant dense<0.000000e+00> : vector<16x32xf32>
    %149 = tpu.matmul %143, %148, %cst_69 {dimension_numbers = #tpu.dot_dimension_numbers<[1], [0], [0], [1], [0, 0, 1, 1], [], []>} : vector<16x32xbf16>, vector<32x32xbf16>, vector<16x32xf32> -> vector<16x32xf32>
    %150 = vector.extract_strided_slice %146 {offsets = [0, 0], sizes = [16, 32], strides = [1, 1]} : vector<16x128xf32> to vector<16x32xf32>
    %151 = arith.mulf %150, %1 : vector<16x32xf32>
    %152 = vector.extract_strided_slice %146 {offsets = [0, 32], sizes = [16, 32], strides = [1, 1]} : vector<16x128xf32> to vector<16x32xf32>
    %153 = arith.mulf %152, %2 : vector<16x32xf32>
    %154 = arith.addf %151, %153 : vector<16x32xf32>
    %155 = vector.extract_strided_slice %146 {offsets = [0, 64], sizes = [16, 32], strides = [1, 1]} : vector<16x128xf32> to vector<16x32xf32>
    %156 = arith.mulf %155, %1 : vector<16x32xf32>
    %157 = vector.extract_strided_slice %146 {offsets = [0, 96], sizes = [16, 32], strides = [1, 1]} : vector<16x128xf32> to vector<16x32xf32>
    %158 = arith.mulf %157, %2 : vector<16x32xf32>
    %159 = arith.addf %156, %158 : vector<16x32xf32>
    %160 = arith.truncf %154 : vector<16x32xf32> to vector<16x32xbf16>
    %161 = arith.truncf %159 : vector<16x32xf32> to vector<16x32xbf16>
    %162 = arith.truncf %149 : vector<16x32xf32> to vector<16x32xbf16>
    %163 = vector.extract_strided_slice %160 {offsets = [0, 0], sizes = [16, 8], strides = [1, 1]} : vector<16x32xbf16> to vector<16x8xbf16>
    %164 = vector.extract_strided_slice %161 {offsets = [0, 0], sizes = [16, 8], strides = [1, 1]} : vector<16x32xbf16> to vector<16x8xbf16>
    %cst_70 = arith.constant dense<0.000000e+00> : vector<16x16xf32>
    %165 = tpu.matmul %163, %164, %cst_70 {dimension_numbers = #tpu.dot_dimension_numbers<[1], [1], [0], [0], [0, 0, 1, 0], [], []>} : vector<16x8xbf16>, vector<16x8xbf16>, vector<16x16xf32> -> vector<16x16xf32>
    %166 = vector.extract_strided_slice %160 {offsets = [0, 8], sizes = [16, 8], strides = [1, 1]} : vector<16x32xbf16> to vector<16x8xbf16>
    %167 = vector.extract_strided_slice %161 {offsets = [0, 8], sizes = [16, 8], strides = [1, 1]} : vector<16x32xbf16> to vector<16x8xbf16>
    %cst_71 = arith.constant dense<0.000000e+00> : vector<16x16xf32>
    %168 = tpu.matmul %166, %167, %cst_71 {dimension_numbers = #tpu.dot_dimension_numbers<[1], [1], [0], [0], [0, 0, 1, 0], [], []>} : vector<16x8xbf16>, vector<16x8xbf16>, vector<16x16xf32> -> vector<16x16xf32>
    %169 = vector.extract_strided_slice %160 {offsets = [0, 16], sizes = [16, 8], strides = [1, 1]} : vector<16x32xbf16> to vector<16x8xbf16>
    %170 = vector.extract_strided_slice %161 {offsets = [0, 16], sizes = [16, 8], strides = [1, 1]} : vector<16x32xbf16> to vector<16x8xbf16>
    %cst_72 = arith.constant dense<0.000000e+00> : vector<16x16xf32>
    %171 = tpu.matmul %169, %170, %cst_72 {dimension_numbers = #tpu.dot_dimension_numbers<[1], [1], [0], [0], [0, 0, 1, 0], [], []>} : vector<16x8xbf16>, vector<16x8xbf16>, vector<16x16xf32> -> vector<16x16xf32>
    %172 = vector.extract_strided_slice %160 {offsets = [0, 24], sizes = [16, 8], strides = [1, 1]} : vector<16x32xbf16> to vector<16x8xbf16>
    %173 = vector.extract_strided_slice %161 {offsets = [0, 24], sizes = [16, 8], strides = [1, 1]} : vector<16x32xbf16> to vector<16x8xbf16>
    %cst_73 = arith.constant dense<0.000000e+00> : vector<16x16xf32>
    %174 = tpu.matmul %172, %173, %cst_73 {dimension_numbers = #tpu.dot_dimension_numbers<[1], [1], [0], [0], [0, 0, 1, 0], [], []>} : vector<16x8xbf16>, vector<16x8xbf16>, vector<16x16xf32> -> vector<16x16xf32>
    %175 = tpu.concatenate %165, %168, %171, %174 in 0 : vector<16x16xf32>, vector<16x16xf32>, vector<16x16xf32>, vector<16x16xf32> -> vector<64x16xf32>
    %cst_74 = arith.constant dense<0xFF800000> : vector<64xf32>
    %176 = vector.multi_reduction <maximumf>, %175, %cst_74 [1] : vector<64x16xf32> to vector<64xf32>
    %177 = vector.shape_cast %176 : vector<64xf32> to vector<64x1xf32>
    %178 = vector.broadcast %177 : vector<64x1xf32> to vector<64x16xf32>
    %179 = arith.subf %175, %178 : vector<64x16xf32>
    %180 = math.exp %179 : vector<64x16xf32>
    %181 = arith.mulf %180, %4 : vector<64x16xf32>
    %cst_75 = arith.constant dense<0.000000e+00> : vector<64xf32>
    %182 = vector.multi_reduction <add>, %181, %cst_75 [1] : vector<64x16xf32> to vector<64xf32>
    %183 = vector.shape_cast %182 : vector<64xf32> to vector<64x1xf32>
    %cst_76 = arith.constant 9.99999971E-10 : f32
    %184 = vector.broadcast %cst_76 : f32 to vector<64x1xf32>
    %185 = arith.addf %183, %184 : vector<64x1xf32>
    %186 = tpu.reciprocal %185 {approx = true} : vector<64x1xf32> -> vector<64x1xf32>
    %187 = vector.broadcast %186 : vector<64x1xf32> to vector<64x16xf32>
    %188 = arith.mulf %181, %187 : vector<64x16xf32>
    %189 = arith.truncf %188 : vector<64x16xf32> to vector<64x16xbf16>
    %c1_77 = arith.constant 1 : index
    %c0_78 = arith.constant 0 : index
    %c0_79 = arith.constant 0 : index
    %190 = vector.load %arg7[%c1_77, %c0_78, %c0_79] : memref<2x32x32xbf16, #tpu.memory_space<vmem>>, vector<1x32x32xbf16>
    %191 = vector.shape_cast %190 : vector<1x32x32xbf16> to vector<32x32xbf16>
    %192 = vector.extract_strided_slice %189 {offsets = [0, 0], sizes = [16, 16], strides = [1, 1]} : vector<64x16xbf16> to vector<16x16xbf16>
    %193 = vector.extract_strided_slice %162 {offsets = [0, 0], sizes = [16, 8], strides = [1, 1]} : vector<16x32xbf16> to vector<16x8xbf16>
    %cst_80 = arith.constant dense<0.000000e+00> : vector<16x8xf32>
    %194 = tpu.matmul %192, %193, %cst_80 {dimension_numbers = #tpu.dot_dimension_numbers<[1], [0], [0], [1], [0, 0, 1, 1], [], []>} : vector<16x16xbf16>, vector<16x8xbf16>, vector<16x8xf32> -> vector<16x8xf32>
    %195 = arith.truncf %194 : vector<16x8xf32> to vector<16x8xbf16>
    %196 = vector.extract_strided_slice %191 {offsets = [0, 0], sizes = [8, 32], strides = [1, 1]} : vector<32x32xbf16> to vector<8x32xbf16>
    %cst_81 = arith.constant dense<0.000000e+00> : vector<16x32xf32>
    %197 = tpu.matmul %195, %196, %cst_81 {dimension_numbers = #tpu.dot_dimension_numbers<[1], [0], [0], [1], [0, 0, 1, 1], [], []>} : vector<16x8xbf16>, vector<8x32xbf16>, vector<16x32xf32> -> vector<16x32xf32>
    %198 = arith.addf %128, %197 : vector<16x32xf32>
    %199 = vector.extract_strided_slice %189 {offsets = [16, 0], sizes = [16, 16], strides = [1, 1]} : vector<64x16xbf16> to vector<16x16xbf16>
    %200 = vector.extract_strided_slice %162 {offsets = [0, 8], sizes = [16, 8], strides = [1, 1]} : vector<16x32xbf16> to vector<16x8xbf16>
    %cst_82 = arith.constant dense<0.000000e+00> : vector<16x8xf32>
    %201 = tpu.matmul %199, %200, %cst_82 {dimension_numbers = #tpu.dot_dimension_numbers<[1], [0], [0], [1], [0, 0, 1, 1], [], []>} : vector<16x16xbf16>, vector<16x8xbf16>, vector<16x8xf32> -> vector<16x8xf32>
    %202 = arith.truncf %201 : vector<16x8xf32> to vector<16x8xbf16>
    %203 = vector.extract_strided_slice %191 {offsets = [8, 0], sizes = [8, 32], strides = [1, 1]} : vector<32x32xbf16> to vector<8x32xbf16>
    %cst_83 = arith.constant dense<0.000000e+00> : vector<16x32xf32>
    %204 = tpu.matmul %202, %203, %cst_83 {dimension_numbers = #tpu.dot_dimension_numbers<[1], [0], [0], [1], [0, 0, 1, 1], [], []>} : vector<16x8xbf16>, vector<8x32xbf16>, vector<16x32xf32> -> vector<16x32xf32>
    %205 = arith.addf %198, %204 : vector<16x32xf32>
    %206 = vector.extract_strided_slice %189 {offsets = [32, 0], sizes = [16, 16], strides = [1, 1]} : vector<64x16xbf16> to vector<16x16xbf16>
    %207 = vector.extract_strided_slice %162 {offsets = [0, 16], sizes = [16, 8], strides = [1, 1]} : vector<16x32xbf16> to vector<16x8xbf16>
    %cst_84 = arith.constant dense<0.000000e+00> : vector<16x8xf32>
    %208 = tpu.matmul %206, %207, %cst_84 {dimension_numbers = #tpu.dot_dimension_numbers<[1], [0], [0], [1], [0, 0, 1, 1], [], []>} : vector<16x16xbf16>, vector<16x8xbf16>, vector<16x8xf32> -> vector<16x8xf32>
    %209 = arith.truncf %208 : vector<16x8xf32> to vector<16x8xbf16>
    %210 = vector.extract_strided_slice %191 {offsets = [16, 0], sizes = [8, 32], strides = [1, 1]} : vector<32x32xbf16> to vector<8x32xbf16>
    %cst_85 = arith.constant dense<0.000000e+00> : vector<16x32xf32>
    %211 = tpu.matmul %209, %210, %cst_85 {dimension_numbers = #tpu.dot_dimension_numbers<[1], [0], [0], [1], [0, 0, 1, 1], [], []>} : vector<16x8xbf16>, vector<8x32xbf16>, vector<16x32xf32> -> vector<16x32xf32>
    %212 = arith.addf %205, %211 : vector<16x32xf32>
    %213 = vector.extract_strided_slice %189 {offsets = [48, 0], sizes = [16, 16], strides = [1, 1]} : vector<64x16xbf16> to vector<16x16xbf16>
    %214 = vector.extract_strided_slice %162 {offsets = [0, 24], sizes = [16, 8], strides = [1, 1]} : vector<16x32xbf16> to vector<16x8xbf16>
    %cst_86 = arith.constant dense<0.000000e+00> : vector<16x8xf32>
    %215 = tpu.matmul %213, %214, %cst_86 {dimension_numbers = #tpu.dot_dimension_numbers<[1], [0], [0], [1], [0, 0, 1, 1], [], []>} : vector<16x16xbf16>, vector<16x8xbf16>, vector<16x8xf32> -> vector<16x8xf32>
    %216 = arith.truncf %215 : vector<16x8xf32> to vector<16x8xbf16>
    %217 = vector.extract_strided_slice %191 {offsets = [24, 0], sizes = [8, 32], strides = [1, 1]} : vector<32x32xbf16> to vector<8x32xbf16>
    %cst_87 = arith.constant dense<0.000000e+00> : vector<16x32xf32>
    %218 = tpu.matmul %216, %217, %cst_87 {dimension_numbers = #tpu.dot_dimension_numbers<[1], [0], [0], [1], [0, 0, 1, 1], [], []>} : vector<16x8xbf16>, vector<8x32xbf16>, vector<16x32xf32> -> vector<16x32xf32>
    %219 = arith.addf %212, %218 : vector<16x32xf32>
    %c1_88 = arith.constant 1 : index
    %c0_89 = arith.constant 0 : index
    %c0_90 = arith.constant 0 : index
    %220 = vector.load %arg8[%c1_88, %c0_89, %c0_90] : memref<2x1x32xf32, #tpu.memory_space<vmem>>, vector<1x1x32xf32>
    %221 = vector.shape_cast %220 : vector<1x1x32xf32> to vector<1x32xf32>
    %222 = arith.mulf %219, %219 : vector<16x32xf32>
    %cst_91 = arith.constant dense<0.000000e+00> : vector<16xf32>
    %223 = vector.multi_reduction <add>, %222, %cst_91 [1] : vector<16x32xf32> to vector<16xf32>
    %224 = vector.shape_cast %223 : vector<16xf32> to vector<16x1xf32>
    %cst_92 = arith.constant 3.200000e+01 : f32
    %225 = vector.broadcast %cst_92 : f32 to vector<16x1xf32>
    %226 = arith.divf %224, %225 : vector<16x1xf32>
    %cst_93 = arith.constant 9.99999997E-7 : f32
    %227 = vector.broadcast %cst_93 : f32 to vector<16x1xf32>
    %228 = arith.addf %226, %227 : vector<16x1xf32>
    %229 = math.rsqrt %228 : vector<16x1xf32>
    %230 = vector.broadcast %229 : vector<16x1xf32> to vector<16x32xf32>
    %231 = arith.mulf %219, %230 : vector<16x32xf32>
    %232 = vector.broadcast %221 : vector<1x32xf32> to vector<16x32xf32>
    %233 = arith.mulf %231, %232 : vector<16x32xf32>
    %234 = arith.truncf %233 : vector<16x32xf32> to vector<16x32xbf16>
    %c1_94 = arith.constant 1 : index
    %c0_95 = arith.constant 0 : index
    %c0_96 = arith.constant 0 : index
    %235 = vector.load %arg9[%c1_94, %c0_95, %c0_96] : memref<2x32x64xbf16, #tpu.memory_space<vmem>>, vector<1x32x64xbf16>
    %236 = vector.shape_cast %235 : vector<1x32x64xbf16> to vector<32x64xbf16>
    %cst_97 = arith.constant dense<0.000000e+00> : vector<16x64xf32>
    %237 = tpu.matmul %234, %236, %cst_97 {dimension_numbers = #tpu.dot_dimension_numbers<[1], [0], [0], [1], [0, 0, 1, 1], [], []>} : vector<16x32xbf16>, vector<32x64xbf16>, vector<16x64xf32> -> vector<16x64xf32>
    %c1_98 = arith.constant 1 : index
    %c0_99 = arith.constant 0 : index
    %c0_100 = arith.constant 0 : index
    %238 = vector.load %arg10[%c1_98, %c0_99, %c0_100] : memref<2x32x64xbf16, #tpu.memory_space<vmem>>, vector<1x32x64xbf16>
    %239 = vector.shape_cast %238 : vector<1x32x64xbf16> to vector<32x64xbf16>
    %cst_101 = arith.constant dense<0.000000e+00> : vector<16x64xf32>
    %240 = tpu.matmul %234, %239, %cst_101 {dimension_numbers = #tpu.dot_dimension_numbers<[1], [0], [0], [1], [0, 0, 1, 1], [], []>} : vector<16x32xbf16>, vector<32x64xbf16>, vector<16x64xf32> -> vector<16x64xf32>
    %241 = arith.negf %237 : vector<16x64xf32>
    %242 = math.exp %241 : vector<16x64xf32>
    %cst_102 = arith.constant 1.000000e+00 : f32
    %243 = vector.broadcast %cst_102 : f32 to vector<16x64xf32>
    %244 = arith.addf %243, %242 : vector<16x64xf32>
    %245 = arith.divf %243, %244 : vector<16x64xf32>
    %246 = arith.mulf %237, %245 : vector<16x64xf32>
    %247 = arith.mulf %246, %240 : vector<16x64xf32>
    %248 = arith.truncf %247 : vector<16x64xf32> to vector<16x64xbf16>
    %c1_103 = arith.constant 1 : index
    %c0_104 = arith.constant 0 : index
    %c0_105 = arith.constant 0 : index
    %249 = vector.load %arg11[%c1_103, %c0_104, %c0_105] : memref<2x64x32xbf16, #tpu.memory_space<vmem>>, vector<1x64x32xbf16>
    %250 = vector.shape_cast %249 : vector<1x64x32xbf16> to vector<64x32xbf16>
    %cst_106 = arith.constant dense<0.000000e+00> : vector<16x32xf32>
    %251 = tpu.matmul %248, %250, %cst_106 {dimension_numbers = #tpu.dot_dimension_numbers<[1], [0], [0], [1], [0, 0, 1, 1], [], []>} : vector<16x64xbf16>, vector<64x32xbf16>, vector<16x32xf32> -> vector<16x32xf32>
    %252 = arith.addf %219, %251 : vector<16x32xf32>
    %c0_107 = arith.constant 0 : index
    %c0_108 = arith.constant 0 : index
    %253 = vector.load %arg13[%c0_107, %c0_108] : memref<8x16xf32, #tpu.memory_space<vmem>>, vector<8x16xf32>
    %cst_109 = arith.constant dense<0.000000e+00> : vector<8x32xf32>
    %254 = tpu.matmul %253, %252, %cst_109 {dimension_numbers = #tpu.dot_dimension_numbers<[1], [0], [0], [1], [0, 0, 1, 1], [], []>} : vector<8x16xf32>, vector<16x32xf32>, vector<8x32xf32> -> vector<8x32xf32>
    %c0_110 = arith.constant 0 : index
    %c0_111 = arith.constant 0 : index
    %255 = vector.load %arg12[%c0_110, %c0_111] : memref<1x32xf32, #tpu.memory_space<vmem>>, vector<1x32xf32>
    %256 = arith.mulf %254, %254 : vector<8x32xf32>
    %cst_112 = arith.constant dense<0.000000e+00> : vector<8xf32>
    %257 = vector.multi_reduction <add>, %256, %cst_112 [1] : vector<8x32xf32> to vector<8xf32>
    %258 = vector.shape_cast %257 : vector<8xf32> to vector<8x1xf32>
    %cst_113 = arith.constant 3.200000e+01 : f32
    %259 = vector.broadcast %cst_113 : f32 to vector<8x1xf32>
    %260 = arith.divf %258, %259 : vector<8x1xf32>
    %cst_114 = arith.constant 9.99999997E-7 : f32
    %261 = vector.broadcast %cst_114 : f32 to vector<8x1xf32>
    %262 = arith.addf %260, %261 : vector<8x1xf32>
    %263 = math.rsqrt %262 : vector<8x1xf32>
    %264 = vector.broadcast %263 : vector<8x1xf32> to vector<8x32xf32>
    %265 = arith.mulf %254, %264 : vector<8x32xf32>
    %266 = vector.broadcast %255 : vector<1x32xf32> to vector<8x32xf32>
    %267 = arith.mulf %265, %266 : vector<8x32xf32>
    %268 = arith.truncf %267 : vector<8x32xf32> to vector<8x32xbf16>
    %c0_115 = arith.constant 0 : index
    %c0_116 = arith.constant 0 : index
    %269 = vector.load %arg14[%c0_115, %c0_116] : memref<32x128xbf16, #tpu.memory_space<vmem>>, vector<32x128xbf16>
    %cst_117 = arith.constant dense<0.000000e+00> : vector<8x128xf32>
    %270 = tpu.matmul %268, %269, %cst_117 {dimension_numbers = #tpu.dot_dimension_numbers<[1], [0], [0], [1], [0, 0, 1, 1], [], []>} : vector<8x32xbf16>, vector<32x128xbf16>, vector<8x128xf32> -> vector<8x128xf32>
    %c0_118 = arith.constant 0 : index
    %c0_119 = arith.constant 0 : index
    %271 = vector.load %arg15[%c0_118, %c0_119] : memref<1x128xf32, #tpu.memory_space<vmem>>, vector<1x128xf32>
    %272 = vector.broadcast %271 : vector<1x128xf32> to vector<8x128xf32>
    %273 = arith.addf %270, %272 : vector<8x128xf32>
    %c0_120 = arith.constant 0 : index
    %c0_121 = arith.constant 0 : index
    %274 = vector.load %arg18[%c0_120, %c0_121] : memref<8x128xf32, #tpu.memory_space<vmem>>, vector<8x128xf32>
    tpu.vector_store %arg18[%c0_120, %c0_121], %273 {strides = array<i32>} : memref<8x128xf32, #tpu.memory_space<vmem>>, vector<8x128xf32>,
    %c0_122 = arith.constant 0 : index
    %c0_123 = arith.constant 0 : index
    %275 = vector.load %arg16[%c0_122, %c0_123] : memref<8x128xf32, #tpu.memory_space<vmem>>, vector<8x128xf32>
    %276 = arith.subf %273, %275 : vector<8x128xf32>
    %c0_124 = arith.constant 0 : index
    %c0_125 = arith.constant 0 : index
    %277 = vector.load %arg17[%c0_124, %c0_125] : memref<8x128xf32, #tpu.memory_space<vmem>>, vector<8x128xf32>
    %278 = arith.mulf %276, %277 : vector<8x128xf32>
    %279 = arith.mulf %278, %278 : vector<8x128xf32>
    %280 = vector.shape_cast %279 : vector<8x128xf32> to vector<1x8x128xf32>
    %cst_126 = arith.constant dense<0.000000e+00> : vector<1xf32>
    %281 = vector.multi_reduction <add>, %280, %cst_126 [1, 2] : vector<1x8x128xf32> to vector<1xf32>
    %282 = vector.shape_cast %281 : vector<1xf32> to vector<1x1x1xf32>
    %283 = vector.extract %282[0, 0, 0] : f32 from vector<1x1x1xf32>
    %284 = vector.broadcast %283 : f32 to vector<1x1xf32>
    %cst_127 = arith.constant 0.0454545468 : f32
    %285 = vector.broadcast %cst_127 : f32 to vector<1x1xf32>
    %286 = arith.mulf %284, %285 : vector<1x1xf32>
    %c0_128 = arith.constant 0 : index
    %c0_129 = arith.constant 0 : index
    %287 = vector.load %arg19[%c0_128, %c0_129] : memref<1x1xf32, #tpu.memory_space<vmem>>, vector<1x1xf32>
    tpu.vector_store %arg19[%c0_128, %c0_129], %286 {strides = array<i32>} : memref<1x1xf32, #tpu.memory_space<vmem>>, vector<1x1xf32>,
    return
  }
}

</mosaic_0001>

<llo_original>
// kernel: forward_with_loss.1
$region0: #{forward_with_loss.1}
  #allocation0 [shape = 'u32[]', space=smem, size = 0x4, offset = 0x4, fixed_abs, tag = 'smem constant byte address 0x4 - core index']
  #allocation1 [shape = 'u32[144,128]{1,0:T(1,128)}', space=vmem, size = 0x12000, scoped, tag = 'internal scratch']
  %s0 = inlined_call_operand.vmem [shape: f32[16,32], index: 0, kind: input, shape index: {}]
  %s1 = inlined_call_operand.vmem [shape: f32[16,16], index: 1, kind: input, shape index: {}]
  %s2 = inlined_call_operand.vmem [shape: f32[16,32], index: 2, kind: input, shape index: {}]
  %s3 = inlined_call_operand.vmem [shape: f32[16,32], index: 3, kind: input, shape index: {}]
  %s4 = inlined_call_operand.vmem [shape: f32[2,1,32], index: 4, kind: input, shape index: {}]
  %s5 = inlined_call_operand.vmem [shape: bf16[2,32,128], index: 5, kind: input, shape index: {}]
  %s6 = inlined_call_operand.vmem [shape: bf16[2,32,32], index: 6, kind: input, shape index: {}]
  %s7 = inlined_call_operand.vmem [shape: bf16[2,32,32], index: 7, kind: input, shape index: {}]
  %s8 = inlined_call_operand.vmem [shape: f32[2,1,32], index: 8, kind: input, shape index: {}]
  %s9 = inlined_call_operand.vmem [shape: bf16[2,32,64], index: 9, kind: input, shape index: {}]
  %s10 = inlined_call_operand.vmem [shape: bf16[2,32,64], index: 10, kind: input, shape index: {}]
  %s11 = inlined_call_operand.vmem [shape: bf16[2,64,32], index: 11, kind: input, shape index: {}]
  %s12 = inlined_call_operand.vmem [shape: f32[1,32], index: 12, kind: input, shape index: {}]
  %s13 = inlined_call_operand.vmem [shape: f32[8,16], index: 13, kind: input, shape index: {}]
  %s14 = inlined_call_operand.vmem [shape: bf16[32,128], index: 14, kind: input, shape index: {}]
  %s15 = inlined_call_operand.vmem [shape: f32[1,128], index: 15, kind: input, shape index: {}]
  %s16 = inlined_call_operand.vmem [shape: f32[8,128], index: 16, kind: input, shape index: {}]
  %s17 = inlined_call_operand.vmem [shape: f32[8,128], index: 17, kind: input, shape index: {}]
  %s18 = inlined_call_operand.vmem [shape: f32[8,128], index: 18, kind: output, shape index: {0}]
  %s19 = inlined_call_operand.hbm [shape: f32[1,1], index: 19, kind: output, shape index: {1}]
  %20 = xla_tuple %s18, %s19
  %s21 = sld [smem:[#allocation0]]
  $region90: #{forward_with_loss.1} parent=0
    _
  %s23 = ssub.s32 1, %s21
  %s24 = scalar_select 0, %s23, %s21
  $region1: #{forward_with_loss.1} parent=0
    #allocation2 [shape = 'u8[512]{0}', space=vmem, size = 0x400, scoped, tag = 'output window, operand 1, single buffered']
    #allocation3 [shape = 's32[1]{0}', space=sflag, size = 0x4, scoped, tag = 'scoped memory for forward_with_loss.1']
    %25 = vsyncpa [#allocation3], 0
    // Predicated region
    $region2: #{forward_with_loss.1} parent=1 // pred_check
      _
    $region3: #{forward_with_loss.1} parent=1 // pred_check_branch
      %27 = sbr.rel (0) target = $region5
    $region4: #{forward_with_loss.1} parent=1 // pred_region
      _
    $region5: #{forward_with_loss.1} parent=1 // pred_fallthru
      _
    // Predicated region
    $region6: #{forward_with_loss.1} parent=1 // pred_check
      _
    $region7: #{forward_with_loss.1} parent=1 // pred_check_branch
      %29 = sbr.rel (0) target = $region9
    $region8: #{forward_with_loss.1} parent=1 // pred_region
      _
    $region9: #{forward_with_loss.1} parent=1 // pred_fallthru
      _
    // Predicated region
    $region10: #{forward_with_loss.1} parent=1 // pred_check
      _
    $region11: #{forward_with_loss.1} parent=1 // pred_check_branch
      %31 = sbr.rel (0) target = $region13
    $region12: #{forward_with_loss.1} parent=1 // pred_region
      _
    $region13: #{forward_with_loss.1} parent=1 // pred_fallthru
      _
    // Predicated region
    $region14: #{forward_with_loss.1} parent=1 // pred_check
      _
    $region15: #{forward_with_loss.1} parent=1 // pred_check_branch
      %33 = sbr.rel (0) target = $region17
    $region16: #{forward_with_loss.1} parent=1 // pred_region
      _
    $region17: #{forward_with_loss.1} parent=1 // pred_fallthru
      _
    // Predicated region
    $region18: #{forward_with_loss.1} parent=1 // pred_check
      _
    $region19: #{forward_with_loss.1} parent=1 // pred_check_branch
      %35 = sbr.rel (0) target = $region21
    $region20: #{forward_with_loss.1} parent=1 // pred_region
      _
    $region21: #{forward_with_loss.1} parent=1 // pred_fallthru
      _
    // Predicated region
    $region22: #{forward_with_loss.1} parent=1 // pred_check
      _
    $region23: #{forward_with_loss.1} parent=1 // pred_check_branch
      %37 = sbr.rel (0) target = $region25
    $region24: #{forward_with_loss.1} parent=1 // pred_region
      _
    $region25: #{forward_with_loss.1} parent=1 // pred_fallthru
      _
    // Predicated region
    $region26: #{forward_with_loss.1} parent=1 // pred_check
      _
    $region27: #{forward_with_loss.1} parent=1 // pred_check_branch
      %39 = sbr.rel (0) target = $region29
    $region28: #{forward_with_loss.1} parent=1 // pred_region
      _
    $region29: #{forward_with_loss.1} parent=1 // pred_fallthru
      _
    // Predicated region
    $region30: #{forward_with_loss.1} parent=1 // pred_check
      _
    $region31: #{forward_with_loss.1} parent=1 // pred_check_branch
      %41 = sbr.rel (0) target = $region33
    $region32: #{forward_with_loss.1} parent=1 // pred_region
      _
    $region33: #{forward_with_loss.1} parent=1 // pred_fallthru
      _
    // Predicated region
    $region34: #{forward_with_loss.1} parent=1 // pred_check
      _
    $region35: #{forward_with_loss.1} parent=1 // pred_check_branch
      %43 = sbr.rel (0) target = $region37
    $region36: #{forward_with_loss.1} parent=1 // pred_region
      _
    $region37: #{forward_with_loss.1} parent=1 // pred_fallthru
      _
    // Predicated region
    $region38: #{forward_with_loss.1} parent=1 // pred_check
      _
    $region39: #{forward_with_loss.1} parent=1 // pred_check_branch
      %45 = sbr.rel (0) target = $region41
    $region40: #{forward_with_loss.1} parent=1 // pred_region
      _
    $region41: #{forward_with_loss.1} parent=1 // pred_fallthru
      _
    // Predicated region
    $region42: #{forward_with_loss.1} parent=1 // pred_check
      _
    $region43: #{forward_with_loss.1} parent=1 // pred_check_branch
      %47 = sbr.rel (0) target = $region45
    $region44: #{forward_with_loss.1} parent=1 // pred_region
      _
    $region45: #{forward_with_loss.1} parent=1 // pred_fallthru
      _
    // Predicated region
    $region46: #{forward_with_loss.1} parent=1 // pred_check
      _
    $region47: #{forward_with_loss.1} parent=1 // pred_check_branch
      %49 = sbr.rel (0) target = $region49
    $region48: #{forward_with_loss.1} parent=1 // pred_region
      _
    $region49: #{forward_with_loss.1} parent=1 // pred_fallthru
      _
    // Predicated region
    $region50: #{forward_with_loss.1} parent=1 // pred_check
      _
    $region51: #{forward_with_loss.1} parent=1 // pred_check_branch
      %51 = sbr.rel (0) target = $region53
    $region52: #{forward_with_loss.1} parent=1 // pred_region
      _
    $region53: #{forward_with_loss.1} parent=1 // pred_fallthru
      _
    // Predicated region
    $region54: #{forward_with_loss.1} parent=1 // pred_check
      _
    $region55: #{forward_with_loss.1} parent=1 // pred_check_branch
      %53 = sbr.rel (0) target = $region57
    $region56: #{forward_with_loss.1} parent=1 // pred_region
      _
    $region57: #{forward_with_loss.1} parent=1 // pred_fallthru
      _
    // Predicated region
    $region58: #{forward_with_loss.1} parent=1 // pred_check
      _
    $region59: #{forward_with_loss.1} parent=1 // pred_check_branch
      %55 = sbr.rel (0) target = $region61
    $region60: #{forward_with_loss.1} parent=1 // pred_region
      _
    $region61: #{forward_with_loss.1} parent=1 // pred_fallthru
      _
    // Predicated region
    $region62: #{forward_with_loss.1} parent=1 // pred_check
      _
    $region63: #{forward_with_loss.1} parent=1 // pred_check_branch
      %57 = sbr.rel (0) target = $region65
    $region64: #{forward_with_loss.1} parent=1 // pred_region
      _
    $region65: #{forward_with_loss.1} parent=1 // pred_fallthru
      _
    // Predicated region
    $region66: #{forward_with_loss.1} parent=1 // pred_check
      _
    $region67: #{forward_with_loss.1} parent=1 // pred_check_branch
      %59 = sbr.rel (0) target = $region69
    $region68: #{forward_with_loss.1} parent=1 // pred_region
      _
    $region69: #{forward_with_loss.1} parent=1 // pred_fallthru
      _
    // Predicated region
    $region70: #{forward_with_loss.1} parent=1 // pred_check
      _
    $region71: #{forward_with_loss.1} parent=1 // pred_check_branch
      %61 = sbr.rel (0) target = $region73
    $region72: #{forward_with_loss.1} parent=1 // pred_region
      _
    $region73: #{forward_with_loss.1} parent=1 // pred_fallthru
      _
    %v63 = vld [vmem:[%s0] sm:$0xff]
    %v64 = vld [vmem:[%s0 + $0x8] sm:$0xff]
    %v65 = vld [vmem:[%s2] sm:$0xff]
    %v66 = vld [vmem:[%s2 + $0x8] sm:$0xff]
    %v67 = vld [vmem:[%s3] sm:$0xff]
    %v68 = vld [vmem:[%s3 + $0x8] sm:$0xff]
    %v69 = vld [vmem:[%s1] sm:$0xff]
    %v70 = vld [vmem:[%s1 + $0x8] sm:$0xff]
    %v71 = vld [vmem:[%s4] sm:$0x1]
    %v72 = vmul.f32 %v63, %v63
    %v73 = vmul.f32 %v64, %v64
    %vm74 = vcmask 261120
    %v75 = vsel %vm74, %v72, 0.0
    %76 = vadd.xlane.f32.xlu0 %v75
    %v77 = vpop.xlane.xlu0 %76
    %v78 = vsel %vm74, %v73, 0.0
    %79 = vadd.xlane.f32.xlu0 %v78
    %v80 = vpop.xlane.xlu0 %79
    %v81 = vrcp.pop 32.0
    %v82 = vmul.f32 %v77, %v81
    %v83 = vmul.f32 %v80, %v81
    %v84 = vadd.f32 %v82, 1e-06
    %v85 = vadd.f32 %v83, 1e-06
    %v86 = vrsqrt.pop %v84
    %v87 = vrsqrt.pop %v85
    %v88 = vmul.f32 %v63, %v86
    %v89 = vmul.f32 %v64, %v87
    %v91 = vlaneseq
    %v92 = vshrl.u32 %v91, 7
    %v93 = vsub.s32 0, %v92
    %v94 = vrot.slane %v71, %v93
    %v96 = vmul.f32 %v88, %v94
    %v97 = vmul.f32 %v89, %v94
    %v98 = vpack.c.bf16 %v97, %v96
    %v99 = vld [vmem:[%s5] sm:$0xf]
    %v100 = vld [vmem:[%s5 + $0x4] sm:$0xf]
    %v101 = vld [vmem:[%s5 + $0x8] sm:$0xf]
    %v102 = vld [vmem:[%s5 + $0xc] sm:$0xf]
    %v107 = vunpack.c.l.b16 %v99
    %v108 = vunpack.c.l.b16 %v100
    %v109 = vunpack.c.l.b16 %v101
    %v110 = vunpack.c.l.b16 %v102
    %v111 = vpack.c.b16 %v108, %v107
    %v112 = vpack.c.b16 %v110, %v109
    %v116 = vsel %vm74, %v98, 0
    %118 = vmatprep.subr.bf16.mxu0 0
    %119 = vmatpush1.bf16.msra.mxu0 %v111
    %120 = vmatprep.subr.bf16.mxu0 0
    %121 = vmatpush1.bf16.msra.mxu0 %v112
    %122 = vmatprep.subr.bf16.mxu0 0
    %123 = vmatpush1.bf16.msra.mxu0 0
    %124 = vmatprep.subr.bf16.mxu0 0
    %125 = vmatpush1.bf16.msra.mxu0 0
    %126 = vmatprep.subr.bf16.mxu0 0
    %127 = vmatpush1.bf16.msra.mxu0 0
    %128 = vmatprep.subr.bf16.mxu0 0
    %129 = vmatpush1.bf16.msra.mxu0 0
    %130 = vmatprep.subr.bf16.mxu0 0
    %131 = vmatpush1.bf16.msra.mxu0 0
    %132 = vmatprep.subr.bf16.mxu0 0
    %133 = vmatpush1.bf16.msra.mxu0 0
    %134 = vmatprep.subr.bf16.mxu0 0
    %135 = vmatpush1.bf16.msra.mxu0 0
    %136 = vmatprep.subr.bf16.mxu0 0
    %137 = vmatpush1.bf16.msra.mxu0 0
    %138 = vmatprep.subr.bf16.mxu0 0
    %139 = vmatpush1.bf16.msra.mxu0 0
    %140 = vmatprep.subr.bf16.mxu0 0
    %141 = vmatpush1.bf16.msra.mxu0 0
    %142 = vmatprep.subr.bf16.mxu0 0
    %143 = vmatpush1.bf16.msra.mxu0 0
    %144 = vmatprep.subr.bf16.mxu0 0
    %145 = vmatpush1.bf16.msra.mxu0 0
    %146 = vmatprep.subr.bf16.mxu0 0
    %147 = vmatpush1.bf16.msra.mxu0 0
    %148 = vmatprep.subr.bf16.mxu0 0
    %149 = vmatpush1.bf16.msra.mxu0 0
    %150 = vmatprep.mubr.bf16.mxu0 0
    %151 = vmatmul.mubr.bf16.gmra.mrb[0].mxu0 %v116
    %v152 = vpop.f32.mrb[0].mxu0
    %v153 = vadd.f32 0.0, %v152
    %v154 = vpop.f32.mrb[0].mxu0
    %v155 = vpop.f32.mrb[0].mxu0
    %v156 = vadd.f32 0.0, %v155
    %v157 = vpop.f32.mrb[0].mxu0
    %158 = vdwg.mxu0
    %v159 = vld [vmem:[%s6] sm:$0xf]
    %v160 = vld [vmem:[%s6 + $0x4] sm:$0xf]
    %v161 = vld [vmem:[%s6 + $0x8] sm:$0xf]
    %v162 = vld [vmem:[%s6 + $0xc] sm:$0xf]
    %v167 = vunpack.c.l.b16 %v159
    %v168 = vunpack.c.l.b16 %v160
    %v169 = vunpack.c.l.b16 %v161
    %v170 = vunpack.c.l.b16 %v162
    %v171 = vpack.c.b16 %v168, %v167
    %v172 = vpack.c.b16 %v170, %v169
    %175 = vmatprep.subr.bf16.mxu0 0
    %176 = vmatpush1.bf16.msra.mxu0 %v171
    %177 = vmatprep.subr.bf16.mxu0 0
    %178 = vmatpush1.bf16.msra.mxu0 %v172
    %179 = vmatprep.subr.bf16.mxu0 0
    %180 = vmatpush1.bf16.msra.mxu0 0
    %181 = vmatprep.subr.bf16.mxu0 0
    %182 = vmatpush1.bf16.msra.mxu0 0
    %183 = vmatprep.subr.bf16.mxu0 0
    %184 = vmatpush1.bf16.msra.mxu0 0
    %185 = vmatprep.subr.bf16.mxu0 0
    %186 = vmatpush1.bf16.msra.mxu0 0
    %187 = vmatprep.subr.bf16.mxu0 0
    %188 = vmatpush1.bf16.msra.mxu0 0
    %189 = vmatprep.subr.bf16.mxu0 0
    %190 = vmatpush1.bf16.msra.mxu0 0
    %191 = vmatprep.subr.bf16.mxu0 0
    %192 = vmatpush1.bf16.msra.mxu0 0
    %193 = vmatprep.subr.bf16.mxu0 0
    %194 = vmatpush1.bf16.msra.mxu0 0
    %195 = vmatprep.subr.bf16.mxu0 0
    %196 = vmatpush1.bf16.msra.mxu0 0
    %197 = vmatprep.subr.bf16.mxu0 0
    %198 = vmatpush1.bf16.msra.mxu0 0
    %199 = vmatprep.subr.bf16.mxu0 0
    %200 = vmatpush1.bf16.msra.mxu0 0
    %201 = vmatprep.subr.bf16.mxu0 0
    %202 = vmatpush1.bf16.msra.mxu0 0
    %203 = vmatprep.subr.bf16.mxu0 0
    %204 = vmatpush1.bf16.msra.mxu0 0
    %205 = vmatprep.subr.bf16.mxu0 0
    %206 = vmatpush1.bf16.msra.mxu0 0
    %207 = vmatprep.mubr.bf16.mxu0 0
    %208 = vmatmul.mubr.bf16.gmra.mrb[0].mxu0 %v116
    %v209 = vpop.f32.mrb[0].mxu0
    %v210 = vadd.f32 0.0, %v209
    %v211 = vpop.f32.mrb[0].mxu0
    %v212 = vpop.f32.mrb[0].mxu0
    %v213 = vadd.f32 0.0, %v212
    %v214 = vpop.f32.mrb[0].mxu0
    %215 = vdwg.mxu0
    %v216 = vmul.f32 %v153, %v65
    %v217 = vmul.f32 %v156, %v66
    %220 = vrot.lane.b32.xlu0 %v67, 32
    %v221 = vpop.permute.xlu0 %220
    %222 = vrot.lane.b32.xlu0 %v68, 32
    %v223 = vpop.permute.xlu0 %222
    %v226 = vmul.f32 %v153, %v221
    %v227 = vmul.f32 %v156, %v223
    %230 = vrot.lane.b32.xlu0 %v226, 96
    %v231 = vpop.permute.xlu0 %230
    %232 = vrot.lane.b32.xlu0 %v227, 96
    %v233 = vpop.permute.xlu0 %232
    %v236 = vadd.f32 %v216, %v231
    %v237 = vadd.f32 %v217, %v233
    %240 = vrot.lane.b32.xlu0 %v65, 64
    %v241 = vpop.permute.xlu0 %240
    %242 = vrot.lane.b32.xlu0 %v66, 64
    %v243 = vpop.permute.xlu0 %242
    %v246 = vmul.f32 %v153, %v241
    %v247 = vmul.f32 %v156, %v243
    %248 = vrot.lane.b32.xlu0 %v67, 96
    %v249 = vpop.permute.xlu0 %248
    %250 = vrot.lane.b32.xlu0 %v68, 96
    %v251 = vpop.permute.xlu0 %250
    %v254 = vmul.f32 %v153, %v249
    %v255 = vmul.f32 %v156, %v251
    %258 = vrot.lane.b32.xlu0 %v254, 96
    %v259 = vpop.permute.xlu0 %258
    %260 = vrot.lane.b32.xlu0 %v255, 96
    %v261 = vpop.permute.xlu0 %260
    %v264 = vadd.f32 %v246, %v259
    %v265 = vadd.f32 %v247, %v261
    %v266 = vpack.c.bf16 %v237, %v236
    %v267 = vpack.c.bf16 %v265, %v264
    %v268 = vpack.c.bf16 %v213, %v210
    %270 = vrot.lane.b32.xlu0 %v267, 64
    %v271 = vpop.permute.xlu0 %270
    %vm272 = vcmask 64512
    %v274 = vsel %vm272, %v266, 0
    %v277 = vsel %vm272, %v271, 0
    %279 = vmatprep.subr.bf16.mxu0 0
    %280 = vmatpush1.bf16.xpose.msra.mxu0 %v277
    %281 = vmatprep.subr.bf16.mxu0 0
    %282 = vmatpush1.bf16.xpose.msra.mxu0 0
    %283 = vmatprep.subr.bf16.mxu0 0
    %284 = vmatpush1.bf16.xpose.msra.mxu0 0
    %285 = vmatprep.subr.bf16.mxu0 0
    %286 = vmatpush1.bf16.xpose.msra.mxu0 0
    %287 = vmatprep.subr.bf16.mxu0 0
    %288 = vmatpush1.bf16.xpose.msra.mxu0 0
    %289 = vmatprep.subr.bf16.mxu0 0
    %290 = vmatpush1.bf16.xpose.msra.mxu0 0
    %291 = vmatprep.subr.bf16.mxu0 0
    %292 = vmatpush1.bf16.xpose.msra.mxu0 0
    %293 = vmatprep.subr.bf16.mxu0 0
    %294 = vmatpush1.bf16.xpose.msra.mxu0 0
    %295 = vmatprep.subr.bf16.mxu0 0
    %296 = vmatpush1.bf16.xpose.msra.mxu0 0
    %297 = vmatprep.subr.bf16.mxu0 0
    %298 = vmatpush1.bf16.xpose.msra.mxu0 0
    %299 = vmatprep.subr.bf16.mxu0 0
    %300 = vmatpush1.bf16.xpose.msra.mxu0 0
    %301 = vmatprep.subr.bf16.mxu0 0
    %302 = vmatpush1.bf16.xpose.msra.mxu0 0
    %303 = vmatprep.subr.bf16.mxu0 0
    %304 = vmatpush1.bf16.xpose.msra.mxu0 0
    %305 = vmatprep.subr.bf16.mxu0 0
    %306 = vmatpush1.bf16.xpose.msra.mxu0 0
    %307 = vmatprep.subr.bf16.mxu0 0
    %308 = vmatpush1.bf16.xpose.msra.mxu0 0
    %309 = vmatprep.subr.bf16.mxu0 0
    %310 = vmatpush1.bf16.xpose.msra.mxu0 0
    %311 = vmatprep.mubr.bf16.mxu0 0
    %312 = vmatmul.mubr.bf16.gmra.mrb[0].mxu0 %v274
    %v313 = vpop.f32.mrb[0].mxu0
    %v314 = vadd.f32 0.0, %v313
    %v315 = vpop.f32.mrb[0].mxu0
    %v316 = vpop.f32.mrb[0].mxu0
    %v317 = vadd.f32 0.0, %v316
    %v318 = vpop.f32.mrb[0].mxu0
    %319 = vdwg.mxu0
    %321 = vrot.lane.b32.xlu0 %v266, 120
    %v322 = vpop.permute.xlu0 %321
    %323 = vrot.lane.b32.xlu0 %v267, 56
    %v324 = vpop.permute.xlu0 %323
    %v326 = vsel %vm272, %v322, 0
    %v329 = vsel %vm272, %v324, 0
    %331 = vmatprep.subr.bf16.mxu0 0
    %332 = vmatpush1.bf16.xpose.msra.mxu0 %v329
    %333 = vmatprep.subr.bf16.mxu0 0
    %334 = vmatpush1.bf16.xpose.msra.mxu0 0
    %335 = vmatprep.subr.bf16.mxu0 0
    %336 = vmatpush1.bf16.xpose.msra.mxu0 0
    %337 = vmatprep.subr.bf16.mxu0 0
    %338 = vmatpush1.bf16.xpose.msra.mxu0 0
    %339 = vmatprep.subr.bf16.mxu0 0
    %340 = vmatpush1.bf16.xpose.msra.mxu0 0
    %341 = vmatprep.subr.bf16.mxu0 0
    %342 = vmatpush1.bf16.xpose.msra.mxu0 0
    %343 = vmatprep.subr.bf16.mxu0 0
    %344 = vmatpush1.bf16.xpose.msra.mxu0 0
    %345 = vmatprep.subr.bf16.mxu0 0
    %346 = vmatpush1.bf16.xpose.msra.mxu0 0
    %347 = vmatprep.subr.bf16.mxu0 0
    %348 = vmatpush1.bf16.xpose.msra.mxu0 0
    %349 = vmatprep.subr.bf16.mxu0 0
    %350 = vmatpush1.bf16.xpose.msra.mxu0 0
    %351 = vmatprep.subr.bf16.mxu0 0
    %352 = vmatpush1.bf16.xpose.msra.mxu0 0
    %353 = vmatprep.subr.bf16.mxu0 0
    %354 = vmatpush1.bf16.xpose.msra.mxu0 0
    %355 = vmatprep.subr.bf16.mxu0 0
    %356 = vmatpush1.bf16.xpose.msra.mxu0 0
    %357 = vmatprep.subr.bf16.mxu0 0
    %358 = vmatpush1.bf16.xpose.msra.mxu0 0
    %359 = vmatprep.subr.bf16.mxu0 0
    %360 = vmatpush1.bf16.xpose.msra.mxu0 0
    %361 = vmatprep.subr.bf16.mxu0 0
    %362 = vmatpush1.bf16.xpose.msra.mxu0 0
    %363 = vmatprep.mubr.bf16.mxu0 0
    %364 = vmatmul.mubr.bf16.gmra.mrb[0].mxu0 %v326
    %v365 = vpop.f32.mrb[0].mxu0
    %v366 = vadd.f32 0.0, %v365
    %v367 = vpop.f32.mrb[0].mxu0
    %v368 = vpop.f32.mrb[0].mxu0
    %v369 = vadd.f32 0.0, %v368
    %v370 = vpop.f32.mrb[0].mxu0
    %371 = vdwg.mxu0
    %372 = vrot.lane.b32.xlu0 %v266, 112
    %v373 = vpop.permute.xlu0 %372
    %374 = vrot.lane.b32.xlu0 %v267, 48
    %v375 = vpop.permute.xlu0 %374
    %v377 = vsel %vm272, %v373, 0
    %v380 = vsel %vm272, %v375, 0
    %382 = vmatprep.subr.bf16.mxu0 0
    %383 = vmatpush1.bf16.xpose.msra.mxu0 %v380
    %384 = vmatprep.subr.bf16.mxu0 0
    %385 = vmatpush1.bf16.xpose.msra.mxu0 0
    %386 = vmatprep.subr.bf16.mxu0 0
    %387 = vmatpush1.bf16.xpose.msra.mxu0 0
    %388 = vmatprep.subr.bf16.mxu0 0
    %389 = vmatpush1.bf16.xpose.msra.mxu0 0
    %390 = vmatprep.subr.bf16.mxu0 0
    %391 = vmatpush1.bf16.xpose.msra.mxu0 0
    %392 = vmatprep.subr.bf16.mxu0 0
    %393 = vmatpush1.bf16.xpose.msra.mxu0 0
    %394 = vmatprep.subr.bf16.mxu0 0
    %395 = vmatpush1.bf16.xpose.msra.mxu0 0
    %396 = vmatprep.subr.bf16.mxu0 0
    %397 = vmatpush1.bf16.xpose.msra.mxu0 0
    %398 = vmatprep.subr.bf16.mxu0 0
    %399 = vmatpush1.bf16.xpose.msra.mxu0 0
    %400 = vmatprep.subr.bf16.mxu0 0
    %401 = vmatpush1.bf16.xpose.msra.mxu0 0
    %402 = vmatprep.subr.bf16.mxu0 0
    %403 = vmatpush1.bf16.xpose.msra.mxu0 0
    %404 = vmatprep.subr.bf16.mxu0 0
    %405 = vmatpush1.bf16.xpose.msra.mxu0 0
    %406 = vmatprep.subr.bf16.mxu0 0
    %407 = vmatpush1.bf16.xpose.msra.mxu0 0
    %408 = vmatprep.subr.bf16.mxu0 0
    %409 = vmatpush1.bf16.xpose.msra.mxu0 0
    %410 = vmatprep.subr.bf16.mxu0 0
    %411 = vmatpush1.bf16.xpose.msra.mxu0 0
    %412 = vmatprep.subr.bf16.mxu0 0
    %413 = vmatpush1.bf16.xpose.msra.mxu0 0
    %414 = vmatprep.mubr.bf16.mxu0 0
    %415 = vmatmul.mubr.bf16.gmra.mrb[0].mxu0 %v377
    %v416 = vpop.f32.mrb[0].mxu0
    %v417 = vadd.f32 0.0, %v416
    %v418 = vpop.f32.mrb[0].mxu0
    %v419 = vpop.f32.mrb[0].mxu0
    %v420 = vadd.f32 0.0, %v419
    %v421 = vpop.f32.mrb[0].mxu0
    %422 = vdwg.mxu0
    %423 = vrot.lane.b32.xlu0 %v266, 104
    %v424 = vpop.permute.xlu0 %423
    %425 = vrot.lane.b32.xlu0 %v267, 40
    %v426 = vpop.permute.xlu0 %425
    %v428 = vsel %vm272, %v424, 0
    %v431 = vsel %vm272, %v426, 0
    %433 = vmatprep.subr.bf16.mxu0 0
    %434 = vmatpush1.bf16.xpose.msra.mxu0 %v431
    %435 = vmatprep.subr.bf16.mxu0 0
    %436 = vmatpush1.bf16.xpose.msra.mxu0 0
    %437 = vmatprep.subr.bf16.mxu0 0
    %438 = vmatpush1.bf16.xpose.msra.mxu0 0
    %439 = vmatprep.subr.bf16.mxu0 0
    %440 = vmatpush1.bf16.xpose.msra.mxu0 0
    %441 = vmatprep.subr.bf16.mxu0 0
    %442 = vmatpush1.bf16.xpose.msra.mxu0 0
    %443 = vmatprep.subr.bf16.mxu0 0
    %444 = vmatpush1.bf16.xpose.msra.mxu0 0
    %445 = vmatprep.subr.bf16.mxu0 0
    %446 = vmatpush1.bf16.xpose.msra.mxu0 0
    %447 = vmatprep.subr.bf16.mxu0 0
    %448 = vmatpush1.bf16.xpose.msra.mxu0 0
    %449 = vmatprep.subr.bf16.mxu0 0
    %450 = vmatpush1.bf16.xpose.msra.mxu0 0
    %451 = vmatprep.subr.bf16.mxu0 0
    %452 = vmatpush1.bf16.xpose.msra.mxu0 0
    %453 = vmatprep.subr.bf16.mxu0 0
    %454 = vmatpush1.bf16.xpose.msra.mxu0 0
    %455 = vmatprep.subr.bf16.mxu0 0
    %456 = vmatpush1.bf16.xpose.msra.mxu0 0
    %457 = vmatprep.subr.bf16.mxu0 0
    %458 = vmatpush1.bf16.xpose.msra.mxu0 0
    %459 = vmatprep.subr.bf16.mxu0 0
    %460 = vmatpush1.bf16.xpose.msra.mxu0 0
    %461 = vmatprep.subr.bf16.mxu0 0
    %462 = vmatpush1.bf16.xpose.msra.mxu0 0
    %463 = vmatprep.subr.bf16.mxu0 0
    %464 = vmatpush1.bf16.xpose.msra.mxu0 0
    %465 = vmatprep.mubr.bf16.mxu0 0
    %466 = vmatmul.mubr.bf16.gmra.mrb[0].mxu0 %v428
    %v467 = vpop.f32.mrb[0].mxu0
    %v468 = vadd.f32 0.0, %v467
    %v469 = vpop.f32.mrb[0].mxu0
    %v470 = vpop.f32.mrb[0].mxu0
    %v471 = vadd.f32 0.0, %v470
    %v472 = vpop.f32.mrb[0].mxu0
    %473 = vdwg.mxu0
    %vm474 = vcmask 130048
    %v475 = vsel %vm474, %v314, -inf
    %476 = vmax.xlane.f32.xlu0 %v475
    %v477 = vpop.xlane.xlu0 %476
    %v478 = vsel %vm474, %v317, -inf
    %479 = vmax.xlane.f32.xlu0 %v478
    %v480 = vpop.xlane.xlu0 %479
    %v481 = vsel %vm474, %v366, -inf
    %482 = vmax.xlane.f32.xlu0 %v481
    %v483 = vpop.xlane.xlu0 %482
    %v484 = vsel %vm474, %v369, -inf
    %485 = vmax.xlane.f32.xlu0 %v484
    %v486 = vpop.xlane.xlu0 %485
    %v487 = vsel %vm474, %v417, -inf
    %488 = vmax.xlane.f32.xlu0 %v487
    %v489 = vpop.xlane.xlu0 %488
    %v490 = vsel %vm474, %v420, -inf
    %491 = vmax.xlane.f32.xlu0 %v490
    %v492 = vpop.xlane.xlu0 %491
    %v493 = vsel %vm474, %v468, -inf
    %494 = vmax.xlane.f32.xlu0 %v493
    %v495 = vpop.xlane.xlu0 %494
    %v496 = vsel %vm474, %v471, -inf
    %497 = vmax.xlane.f32.xlu0 %v496
    %v498 = vpop.xlane.xlu0 %497
    %v499 = vsub.f32 %v314, %v477
    %v500 = vsub.f32 %v317, %v480
    %v501 = vsub.f32 %v366, %v483
    %v502 = vsub.f32 %v369, %v486
    %v503 = vsub.f32 %v417, %v489
    %v504 = vsub.f32 %v420, %v492
    %v505 = vsub.f32 %v468, %v495
    %v506 = vsub.f32 %v471, %v498
    %v507 = vmul.f32 %v499, 1.442695
    %v508 = vpow.pop %v507
    %v509 = vmul.f32 %v500, 1.442695
    %v510 = vpow.pop %v509
    %v511 = vmul.f32 %v501, 1.442695
    %v512 = vpow.pop %v511
    %v513 = vmul.f32 %v502, 1.442695
    %v514 = vpow.pop %v513
    %v515 = vmul.f32 %v503, 1.442695
    %v516 = vpow.pop %v515
    %v517 = vmul.f32 %v504, 1.442695
    %v518 = vpow.pop %v517
    %v519 = vmul.f32 %v505, 1.442695
    %v520 = vpow.pop %v519
    %v521 = vmul.f32 %v506, 1.442695
    %v522 = vpow.pop %v521
    %v523 = vmul.f32 %v508, %v69
    %v524 = vmul.f32 %v510, %v70
    %v525 = vmul.f32 %v512, %v69
    %v526 = vmul.f32 %v514, %v70
    %v527 = vmul.f32 %v516, %v69
    %v528 = vmul.f32 %v518, %v70
    %v529 = vmul.f32 %v520, %v69
    %v530 = vmul.f32 %v522, %v70
    %v531 = vsel %vm474, %v523, 0.0
    %532 = vadd.xlane.f32.xlu0 %v531
    %v533 = vpop.xlane.xlu0 %532
    %v534 = vsel %vm474, %v524, 0.0
    %535 = vadd.xlane.f32.xlu0 %v534
    %v536 = vpop.xlane.xlu0 %535
    %v537 = vsel %vm474, %v525, 0.0
    %538 = vadd.xlane.f32.xlu0 %v537
    %v539 = vpop.xlane.xlu0 %538
    %v540 = vsel %vm474, %v526, 0.0
    %541 = vadd.xlane.f32.xlu0 %v540
    %v542 = vpop.xlane.xlu0 %541
    %v543 = vsel %vm474, %v527, 0.0
    %544 = vadd.xlane.f32.xlu0 %v543
    %v545 = vpop.xlane.xlu0 %544
    %v546 = vsel %vm474, %v528, 0.0
    %547 = vadd.xlane.f32.xlu0 %v546
    %v548 = vpop.xlane.xlu0 %547
    %v549 = vsel %vm474, %v529, 0.0
    %550 = vadd.xlane.f32.xlu0 %v549
    %v551 = vpop.xlane.xlu0 %550
    %v552 = vsel %vm474, %v530, 0.0
    %553 = vadd.xlane.f32.xlu0 %v552
    %v554 = vpop.xlane.xlu0 %553
    %v555 = vadd.f32 %v533, 1e-09
    %v556 = vadd.f32 %v536, 1e-09
    %v557 = vadd.f32 %v539, 1e-09
    %v558 = vadd.f32 %v542, 1e-09
    %v559 = vadd.f32 %v545, 1e-09
    %v560 = vadd.f32 %v548, 1e-09
    %v561 = vadd.f32 %v551, 1e-09
    %v562 = vadd.f32 %v554, 1e-09
    %v563 = vrcp.pop %v555
    %v564 = vrcp.pop %v556
    %v565 = vrcp.pop %v557
    %v566 = vrcp.pop %v558
    %v567 = vrcp.pop %v559
    %v568 = vrcp.pop %v560
    %v569 = vrcp.pop %v561
    %v570 = vrcp.pop %v562
    %v571 = vmul.f32 %v523, %v563
    %v572 = vmul.f32 %v524, %v564
    %v573 = vmul.f32 %v525, %v565
    %v574 = vmul.f32 %v526, %v566
    %v575 = vmul.f32 %v527, %v567
    %v576 = vmul.f32 %v528, %v568
    %v577 = vmul.f32 %v529, %v569
    %v578 = vmul.f32 %v530, %v570
    %v579 = vpack.c.bf16 %v572, %v571
    %v580 = vpack.c.bf16 %v574, %v573
    %v581 = vpack.c.bf16 %v576, %v575
    %v582 = vpack.c.bf16 %v578, %v577
    %v583 = vld [vmem:[%s7] sm:$0xf]
    %v584 = vld [vmem:[%s7 + $0x4] sm:$0xf]
    %v585 = vld [vmem:[%s7 + $0x8] sm:$0xf]
    %v586 = vld [vmem:[%s7 + $0xc] sm:$0xf]
    %v588 = vsel %vm474, %v579, 0
    %590 = vmatprep.subr.bf16.mxu0 0
    %591 = vmatpush1.bf16.msra.mxu0 %v268
    %592 = vmatprep.subr.bf16.mxu0 0
    %593 = vmatpush1.bf16.msra.mxu0 0
    %594 = vmatprep.subr.bf16.mxu0 0
    %595 = vmatpush1.bf16.msra.mxu0 0
    %596 = vmatprep.subr.bf16.mxu0 0
    %597 = vmatpush1.bf16.msra.mxu0 0
    %598 = vmatprep.subr.bf16.mxu0 0
    %599 = vmatpush1.bf16.msra.mxu0 0
    %600 = vmatprep.subr.bf16.mxu0 0
    %601 = vmatpush1.bf16.msra.mxu0 0
    %602 = vmatprep.subr.bf16.mxu0 0
    %603 = vmatpush1.bf16.msra.mxu0 0
    %604 = vmatprep.subr.bf16.mxu0 0
    %605 = vmatpush1.bf16.msra.mxu0 0
    %606 = vmatprep.subr.bf16.mxu0 0
    %607 = vmatpush1.bf16.msra.mxu0 0
    %608 = vmatprep.subr.bf16.mxu0 0
    %609 = vmatpush1.bf16.msra.mxu0 0
    %610 = vmatprep.subr.bf16.mxu0 0
    %611 = vmatpush1.bf16.msra.mxu0 0
    %612 = vmatprep.subr.bf16.mxu0 0
    %613 = vmatpush1.bf16.msra.mxu0 0
    %614 = vmatprep.subr.bf16.mxu0 0
    %615 = vmatpush1.bf16.msra.mxu0 0
    %616 = vmatprep.subr.bf16.mxu0 0
    %617 = vmatpush1.bf16.msra.mxu0 0
    %618 = vmatprep.subr.bf16.mxu0 0
    %619 = vmatpush1.bf16.msra.mxu0 0
    %620 = vmatprep.subr.bf16.mxu0 0
    %621 = vmatpush1.bf16.msra.mxu0 0
    %622 = vmatprep.mubr.bf16.mxu0 0
    %623 = vmatmul.mubr.bf16.gmra.mrb[0].mxu0 %v588
    %v624 = vpop.f32.mrb[0].mxu0
    %v625 = vadd.f32 0.0, %v624
    %v626 = vpop.f32.mrb[0].mxu0
    %v627 = vpop.f32.mrb[0].mxu0
    %v628 = vadd.f32 0.0, %v627
    %v629 = vpop.f32.mrb[0].mxu0
    %630 = vdwg.mxu0
    %v631 = vpack.c.bf16 %v628, %v625
    %v633 = vsel %vm272, %v631, 0
    %vm635 = vcmask 1043456
    %v637 = vsel %vm635, %v583, 0
    %639 = vmatprep.subr.bf16.mxu0 0
    %640 = vmatpush1.bf16.msra.mxu0 %v637
    %641 = vmatprep.subr.bf16.mxu0 0
    %642 = vmatpush1.bf16.msra.mxu0 0
    %643 = vmatprep.subr.bf16.mxu0 0
    %644 = vmatpush1.bf16.msra.mxu0 0
    %645 = vmatprep.subr.bf16.mxu0 0
    %646 = vmatpush1.bf16.msra.mxu0 0
    %647 = vmatprep.subr.bf16.mxu0 0
    %648 = vmatpush1.bf16.msra.mxu0 0
    %649 = vmatprep.subr.bf16.mxu0 0
    %650 = vmatpush1.bf16.msra.mxu0 0
    %651 = vmatprep.subr.bf16.mxu0 0
    %652 = vmatpush1.bf16.msra.mxu0 0
    %653 = vmatprep.subr.bf16.mxu0 0
    %654 = vmatpush1.bf16.msra.mxu0 0
    %655 = vmatprep.subr.bf16.mxu0 0
    %656 = vmatpush1.bf16.msra.mxu0 0
    %657 = vmatprep.subr.bf16.mxu0 0
    %658 = vmatpush1.bf16.msra.mxu0 0
    %659 = vmatprep.subr.bf16.mxu0 0
    %660 = vmatpush1.bf16.msra.mxu0 0
    %661 = vmatprep.subr.bf16.mxu0 0
    %662 = vmatpush1.bf16.msra.mxu0 0
    %663 = vmatprep.subr.bf16.mxu0 0
    %664 = vmatpush1.bf16.msra.mxu0 0
    %665 = vmatprep.subr.bf16.mxu0 0
    %666 = vmatpush1.bf16.msra.mxu0 0
    %667 = vmatprep.subr.bf16.mxu0 0
    %668 = vmatpush1.bf16.msra.mxu0 0
    %669 = vmatprep.subr.bf16.mxu0 0
    %670 = vmatpush1.bf16.msra.mxu0 0
    %671 = vmatprep.mubr.bf16.mxu0 0
    %672 = vmatmul.mubr.bf16.gmra.mrb[0].mxu0 %v633
    %v673 = vpop.f32.mrb[0].mxu0
    %v674 = vadd.f32 0.0, %v673
    %v675 = vpop.f32.mrb[0].mxu0
    %v676 = vpop.f32.mrb[0].mxu0
    %v677 = vadd.f32 0.0, %v676
    %v678 = vpop.f32.mrb[0].mxu0
    %679 = vdwg.mxu0
    %v680 = vadd.f32 %v63, %v674
    %v681 = vadd.f32 %v64, %v677
    %683 = vrot.lane.b32.xlu0 %v268, 120
    %v684 = vpop.permute.xlu0 %683
    %v687 = vsel %vm474, %v580, 0
    %689 = vmatprep.subr.bf16.mxu0 0
    %690 = vmatpush1.bf16.msra.mxu0 %v684
    %691 = vmatprep.subr.bf16.mxu0 0
    %692 = vmatpush1.bf16.msra.mxu0 0
    %693 = vmatprep.subr.bf16.mxu0 0
    %694 = vmatpush1.bf16.msra.mxu0 0
    %695 = vmatprep.subr.bf16.mxu0 0
    %696 = vmatpush1.bf16.msra.mxu0 0
    %697 = vmatprep.subr.bf16.mxu0 0
    %698 = vmatpush1.bf16.msra.mxu0 0
    %699 = vmatprep.subr.bf16.mxu0 0
    %700 = vmatpush1.bf16.msra.mxu0 0
    %701 = vmatprep.subr.bf16.mxu0 0
    %702 = vmatpush1.bf16.msra.mxu0 0
    %703 = vmatprep.subr.bf16.mxu0 0
    %704 = vmatpush1.bf16.msra.mxu0 0
    %705 = vmatprep.subr.bf16.mxu0 0
    %706 = vmatpush1.bf16.msra.mxu0 0
    %707 = vmatprep.subr.bf16.mxu0 0
    %708 = vmatpush1.bf16.msra.mxu0 0
    %709 = vmatprep.subr.bf16.mxu0 0
    %710 = vmatpush1.bf16.msra.mxu0 0
    %711 = vmatprep.subr.bf16.mxu0 0
    %712 = vmatpush1.bf16.msra.mxu0 0
    %713 = vmatprep.subr.bf16.mxu0 0
    %714 = vmatpush1.bf16.msra.mxu0 0
    %715 = vmatprep.subr.bf16.mxu0 0
    %716 = vmatpush1.bf16.msra.mxu0 0
    %717 = vmatprep.subr.bf16.mxu0 0
    %718 = vmatpush1.bf16.msra.mxu0 0
    %719 = vmatprep.subr.bf16.mxu0 0
    %720 = vmatpush1.bf16.msra.mxu0 0
    %721 = vmatprep.mubr.bf16.mxu0 0
    %722 = vmatmul.mubr.bf16.gmra.mrb[0].mxu0 %v687
    %v723 = vpop.f32.mrb[0].mxu0
    %v724 = vadd.f32 0.0, %v723
    %v725 = vpop.f32.mrb[0].mxu0
    %v726 = vpop.f32.mrb[0].mxu0
    %v727 = vadd.f32 0.0, %v726
    %v728 = vpop.f32.mrb[0].mxu0
    %729 = vdwg.mxu0
    %v730 = vpack.c.bf16 %v727, %v724
    %v732 = vsel %vm272, %v730, 0
    %v735 = vsel %vm635, %v584, 0
    %737 = vmatprep.subr.bf16.mxu0 0
    %738 = vmatpush1.bf16.msra.mxu0 %v735
    %739 = vmatprep.subr.bf16.mxu0 0
    %740 = vmatpush1.bf16.msra.mxu0 0
    %741 = vmatprep.subr.bf16.mxu0 0
    %742 = vmatpush1.bf16.msra.mxu0 0
    %743 = vmatprep.subr.bf16.mxu0 0
    %744 = vmatpush1.bf16.msra.mxu0 0
    %745 = vmatprep.subr.bf16.mxu0 0
    %746 = vmatpush1.bf16.msra.mxu0 0
    %747 = vmatprep.subr.bf16.mxu0 0
    %748 = vmatpush1.bf16.msra.mxu0 0
    %749 = vmatprep.subr.bf16.mxu0 0
    %750 = vmatpush1.bf16.msra.mxu0 0
    %751 = vmatprep.subr.bf16.mxu0 0
    %752 = vmatpush1.bf16.msra.mxu0 0
    %753 = vmatprep.subr.bf16.mxu0 0
    %754 = vmatpush1.bf16.msra.mxu0 0
    %755 = vmatprep.subr.bf16.mxu0 0
    %756 = vmatpush1.bf16.msra.mxu0 0
    %757 = vmatprep.subr.bf16.mxu0 0
    %758 = vmatpush1.bf16.msra.mxu0 0
    %759 = vmatprep.subr.bf16.mxu0 0
    %760 = vmatpush1.bf16.msra.mxu0 0
    %761 = vmatprep.subr.bf16.mxu0 0
    %762 = vmatpush1.bf16.msra.mxu0 0
    %763 = vmatprep.subr.bf16.mxu0 0
    %764 = vmatpush1.bf16.msra.mxu0 0
    %765 = vmatprep.subr.bf16.mxu0 0
    %766 = vmatpush1.bf16.msra.mxu0 0
    %767 = vmatprep.subr.bf16.mxu0 0
    %768 = vmatpush1.bf16.msra.mxu0 0
    %769 = vmatprep.mubr.bf16.mxu0 0
    %770 = vmatmul.mubr.bf16.gmra.mrb[0].mxu0 %v732
    %v771 = vpop.f32.mrb[0].mxu0
    %v772 = vadd.f32 0.0, %v771
    %v773 = vpop.f32.mrb[0].mxu0
    %v774 = vpop.f32.mrb[0].mxu0
    %v775 = vadd.f32 0.0, %v774
    %v776 = vpop.f32.mrb[0].mxu0
    %777 = vdwg.mxu0
    %v778 = vadd.f32 %v680, %v772
    %v779 = vadd.f32 %v681, %v775
    %780 = vrot.lane.b32.xlu0 %v268, 112
    %v781 = vpop.permute.xlu0 %780
    %v784 = vsel %vm474, %v581, 0
    %786 = vmatprep.subr.bf16.mxu0 0
    %787 = vmatpush1.bf16.msra.mxu0 %v781
    %788 = vmatprep.subr.bf16.mxu0 0
    %789 = vmatpush1.bf16.msra.mxu0 0
    %790 = vmatprep.subr.bf16.mxu0 0
    %791 = vmatpush1.bf16.msra.mxu0 0
    %792 = vmatprep.subr.bf16.mxu0 0
    %793 = vmatpush1.bf16.msra.mxu0 0
    %794 = vmatprep.subr.bf16.mxu0 0
    %795 = vmatpush1.bf16.msra.mxu0 0
    %796 = vmatprep.subr.bf16.mxu0 0
    %797 = vmatpush1.bf16.msra.mxu0 0
    %798 = vmatprep.subr.bf16.mxu0 0
    %799 = vmatpush1.bf16.msra.mxu0 0
    %800 = vmatprep.subr.bf16.mxu0 0
    %801 = vmatpush1.bf16.msra.mxu0 0
    %802 = vmatprep.subr.bf16.mxu0 0
    %803 = vmatpush1.bf16.msra.mxu0 0
    %804 = vmatprep.subr.bf16.mxu0 0
    %805 = vmatpush1.bf16.msra.mxu0 0
    %806 = vmatprep.subr.bf16.mxu0 0
    %807 = vmatpush1.bf16.msra.mxu0 0
    %808 = vmatprep.subr.bf16.mxu0 0
    %809 = vmatpush1.bf16.msra.mxu0 0
    %810 = vmatprep.subr.bf16.mxu0 0
    %811 = vmatpush1.bf16.msra.mxu0 0
    %812 = vmatprep.subr.bf16.mxu0 0
    %813 = vmatpush1.bf16.msra.mxu0 0
    %814 = vmatprep.subr.bf16.mxu0 0
    %815 = vmatpush1.bf16.msra.mxu0 0
    %816 = vmatprep.subr.bf16.mxu0 0
    %817 = vmatpush1.bf16.msra.mxu0 0
    %818 = vmatprep.mubr.bf16.mxu0 0
    %819 = vmatmul.mubr.bf16.gmra.mrb[0].mxu0 %v784
    %v820 = vpop.f32.mrb[0].mxu0
    %v821 = vadd.f32 0.0, %v820
    %v822 = vpop.f32.mrb[0].mxu0
    %v823 = vpop.f32.mrb[0].mxu0
    %v824 = vadd.f32 0.0, %v823
    %v825 = vpop.f32.mrb[0].mxu0
    %826 = vdwg.mxu0
    %v827 = vpack.c.bf16 %v824, %v821
    %v829 = vsel %vm272, %v827, 0
    %v832 = vsel %vm635, %v585, 0
    %834 = vmatprep.subr.bf16.mxu0 0
    %835 = vmatpush1.bf16.msra.mxu0 %v832
    %836 = vmatprep.subr.bf16.mxu0 0
    %837 = vmatpush1.bf16.msra.mxu0 0
    %838 = vmatprep.subr.bf16.mxu0 0
    %839 = vmatpush1.bf16.msra.mxu0 0
    %840 = vmatprep.subr.bf16.mxu0 0
    %841 = vmatpush1.bf16.msra.mxu0 0
    %842 = vmatprep.subr.bf16.mxu0 0
    %843 = vmatpush1.bf16.msra.mxu0 0
    %844 = vmatprep.subr.bf16.mxu0 0
    %845 = vmatpush1.bf16.msra.mxu0 0
    %846 = vmatprep.subr.bf16.mxu0 0
    %847 = vmatpush1.bf16.msra.mxu0 0
    %848 = vmatprep.subr.bf16.mxu0 0
    %849 = vmatpush1.bf16.msra.mxu0 0
    %850 = vmatprep.subr.bf16.mxu0 0
    %851 = vmatpush1.bf16.msra.mxu0 0
    %852 = vmatprep.subr.bf16.mxu0 0
    %853 = vmatpush1.bf16.msra.mxu0 0
    %854 = vmatprep.subr.bf16.mxu0 0
    %855 = vmatpush1.bf16.msra.mxu0 0
    %856 = vmatprep.subr.bf16.mxu0 0
    %857 = vmatpush1.bf16.msra.mxu0 0
    %858 = vmatprep.subr.bf16.mxu0 0
    %859 = vmatpush1.bf16.msra.mxu0 0
    %860 = vmatprep.subr.bf16.mxu0 0
    %861 = vmatpush1.bf16.msra.mxu0 0
    %862 = vmatprep.subr.bf16.mxu0 0
    %863 = vmatpush1.bf16.msra.mxu0 0
    %864 = vmatprep.subr.bf16.mxu0 0
    %865 = vmatpush1.bf16.msra.mxu0 0
    %866 = vmatprep.mubr.bf16.mxu0 0
    %867 = vmatmul.mubr.bf16.gmra.mrb[0].mxu0 %v829
    %v868 = vpop.f32.mrb[0].mxu0
    %v869 = vadd.f32 0.0, %v868
    %v870 = vpop.f32.mrb[0].mxu0
    %v871 = vpop.f32.mrb[0].mxu0
    %v872 = vadd.f32 0.0, %v871
    %v873 = vpop.f32.mrb[0].mxu0
    %874 = vdwg.mxu0
    %v875 = vadd.f32 %v778, %v869
    %v876 = vadd.f32 %v779, %v872
    %877 = vrot.lane.b32.xlu0 %v268, 104
    %v878 = vpop.permute.xlu0 %877
    %v881 = vsel %vm474, %v582, 0
    %883 = vmatprep.subr.bf16.mxu0 0
    %884 = vmatpush1.bf16.msra.mxu0 %v878
    %885 = vmatprep.subr.bf16.mxu0 0
    %886 = vmatpush1.bf16.msra.mxu0 0
    %887 = vmatprep.subr.bf16.mxu0 0
    %888 = vmatpush1.bf16.msra.mxu0 0
    %889 = vmatprep.subr.bf16.mxu0 0
    %890 = vmatpush1.bf16.msra.mxu0 0
    %891 = vmatprep.subr.bf16.mxu0 0
    %892 = vmatpush1.bf16.msra.mxu0 0
    %893 = vmatprep.subr.bf16.mxu0 0
    %894 = vmatpush1.bf16.msra.mxu0 0
    %895 = vmatprep.subr.bf16.mxu0 0
    %896 = vmatpush1.bf16.msra.mxu0 0
    %897 = vmatprep.subr.bf16.mxu0 0
    %898 = vmatpush1.bf16.msra.mxu0 0
    %899 = vmatprep.subr.bf16.mxu0 0
    %900 = vmatpush1.bf16.msra.mxu0 0
    %901 = vmatprep.subr.bf16.mxu0 0
    %902 = vmatpush1.bf16.msra.mxu0 0
    %903 = vmatprep.subr.bf16.mxu0 0
    %904 = vmatpush1.bf16.msra.mxu0 0
    %905 = vmatprep.subr.bf16.mxu0 0
    %906 = vmatpush1.bf16.msra.mxu0 0
    %907 = vmatprep.subr.bf16.mxu0 0
    %908 = vmatpush1.bf16.msra.mxu0 0
    %909 = vmatprep.subr.bf16.mxu0 0
    %910 = vmatpush1.bf16.msra.mxu0 0
    %911 = vmatprep.subr.bf16.mxu0 0
    %912 = vmatpush1.bf16.msra.mxu0 0
    %913 = vmatprep.subr.bf16.mxu0 0
    %914 = vmatpush1.bf16.msra.mxu0 0
    %915 = vmatprep.mubr.bf16.mxu0 0
    %916 = vmatmul.mubr.bf16.gmra.mrb[0].mxu0 %v881
    %v917 = vpop.f32.mrb[0].mxu0
    %v918 = vadd.f32 0.0, %v917
    %v919 = vpop.f32.mrb[0].mxu0
    %v920 = vpop.f32.mrb[0].mxu0
    %v921 = vadd.f32 0.0, %v920
    %v922 = vpop.f32.mrb[0].mxu0
    %923 = vdwg.mxu0
    %v924 = vpack.c.bf16 %v921, %v918
    %v926 = vsel %vm272, %v924, 0
    %v929 = vsel %vm635, %v586, 0
    %931 = vmatprep.subr.bf16.mxu0 0
    %932 = vmatpush1.bf16.msra.mxu0 %v929
    %933 = vmatprep.subr.bf16.mxu0 0
    %934 = vmatpush1.bf16.msra.mxu0 0
    %935 = vmatprep.subr.bf16.mxu0 0
    %936 = vmatpush1.bf16.msra.mxu0 0
    %937 = vmatprep.subr.bf16.mxu0 0
    %938 = vmatpush1.bf16.msra.mxu0 0
    %939 = vmatprep.subr.bf16.mxu0 0
    %940 = vmatpush1.bf16.msra.mxu0 0
    %941 = vmatprep.subr.bf16.mxu0 0
    %942 = vmatpush1.bf16.msra.mxu0 0
    %943 = vmatprep.subr.bf16.mxu0 0
    %944 = vmatpush1.bf16.msra.mxu0 0
    %945 = vmatprep.subr.bf16.mxu0 0
    %946 = vmatpush1.bf16.msra.mxu0 0
    %947 = vmatprep.subr.bf16.mxu0 0
    %948 = vmatpush1.bf16.msra.mxu0 0
    %949 = vmatprep.subr.bf16.mxu0 0
    %950 = vmatpush1.bf16.msra.mxu0 0
    %951 = vmatprep.subr.bf16.mxu0 0
    %952 = vmatpush1.bf16.msra.mxu0 0
    %953 = vmatprep.subr.bf16.mxu0 0
    %954 = vmatpush1.bf16.msra.mxu0 0
    %955 = vmatprep.subr.bf16.mxu0 0
    %956 = vmatpush1.bf16.msra.mxu0 0
    %957 = vmatprep.subr.bf16.mxu0 0
    %958 = vmatpush1.bf16.msra.mxu0 0
    %959 = vmatprep.subr.bf16.mxu0 0
    %960 = vmatpush1.bf16.msra.mxu0 0
    %961 = vmatprep.subr.bf16.mxu0 0
    %962 = vmatpush1.bf16.msra.mxu0 0
    %963 = vmatprep.mubr.bf16.mxu0 0
    %964 = vmatmul.mubr.bf16.gmra.mrb[0].mxu0 %v926
    %v965 = vpop.f32.mrb[0].mxu0
    %v966 = vadd.f32 0.0, %v965
    %v967 = vpop.f32.mrb[0].mxu0
    %v968 = vpop.f32.mrb[0].mxu0
    %v969 = vadd.f32 0.0, %v968
    %v970 = vpop.f32.mrb[0].mxu0
    %971 = vdwg.mxu0
    %v972 = vadd.f32 %v875, %v966
    %v973 = vadd.f32 %v876, %v969
    %v974 = vld [vmem:[%s8] sm:$0x1]
    %v975 = vmul.f32 %v972, %v972
    %v976 = vmul.f32 %v973, %v973
    %v977 = vsel %vm74, %v975, 0.0
    %978 = vadd.xlane.f32.xlu0 %v977
    %v979 = vpop.xlane.xlu0 %978
    %v980 = vsel %vm74, %v976, 0.0
    %981 = vadd.xlane.f32.xlu0 %v980
    %v982 = vpop.xlane.xlu0 %981
    %v983 = vmul.f32 %v979, %v81
    %v984 = vmul.f32 %v982, %v81
    %v985 = vadd.f32 %v983, 1e-06
    %v986 = vadd.f32 %v984, 1e-06
    %v987 = vrsqrt.pop %v985
    %v988 = vrsqrt.pop %v986
    %v989 = vmul.f32 %v972, %v987
    %v990 = vmul.f32 %v973, %v988
    %v992 = vlaneseq
    %v993 = vshrl.u32 %v992, 7
    %v994 = vsub.s32 0, %v993
    %v995 = vrot.slane %v974, %v994
    %v997 = vmul.f32 %v989, %v995
    %v998 = vmul.f32 %v990, %v995
    %v999 = vpack.c.bf16 %v998, %v997
    %v1000 = vld [vmem:[%s9] sm:$0xf]
    %v1001 = vld [vmem:[%s9 + $0x4] sm:$0xf]
    %v1002 = vld [vmem:[%s9 + $0x8] sm:$0xf]
    %v1003 = vld [vmem:[%s9 + $0xc] sm:$0xf]
    %v1008 = vunpack.c.l.b16 %v1000
    %v1009 = vunpack.c.l.b16 %v1001
    %v1010 = vunpack.c.l.b16 %v1002
    %v1011 = vunpack.c.l.b16 %v1003
    %v1012 = vpack.c.b16 %v1009, %v1008
    %v1013 = vpack.c.b16 %v1011, %v1010
    %v1017 = vsel %vm74, %v999, 0
    %1019 = vmatprep.subr.bf16.mxu0 0
    %1020 = vmatpush1.bf16.msra.mxu0 %v1012
    %1021 = vmatprep.subr.bf16.mxu0 0
    %1022 = vmatpush1.bf16.msra.mxu0 %v1013
    %1023 = vmatprep.subr.bf16.mxu0 0
    %1024 = vmatpush1.bf16.msra.mxu0 0
    %1025 = vmatprep.subr.bf16.mxu0 0
    %1026 = vmatpush1.bf16.msra.mxu0 0
    %1027 = vmatprep.subr.bf16.mxu0 0
    %1028 = vmatpush1.bf16.msra.mxu0 0
    %1029 = vmatprep.subr.bf16.mxu0 0
    %1030 = vmatpush1.bf16.msra.mxu0 0
    %1031 = vmatprep.subr.bf16.mxu0 0
    %1032 = vmatpush1.bf16.msra.mxu0 0
    %1033 = vmatprep.subr.bf16.mxu0 0
    %1034 = vmatpush1.bf16.msra.mxu0 0
    %1035 = vmatprep.subr.bf16.mxu0 0
    %1036 = vmatpush1.bf16.msra.mxu0 0
    %1037 = vmatprep.subr.bf16.mxu0 0
    %1038 = vmatpush1.bf16.msra.mxu0 0
    %1039 = vmatprep.subr.bf16.mxu0 0
    %1040 = vmatpush1.bf16.msra.mxu0 0
    %1041 = vmatprep.subr.bf16.mxu0 0
    %1042 = vmatpush1.bf16.msra.mxu0 0
    %1043 = vmatprep.subr.bf16.mxu0 0
    %1044 = vmatpush1.bf16.msra.mxu0 0
    %1045 = vmatprep.subr.bf16.mxu0 0
    %1046 = vmatpush1.bf16.msra.mxu0 0
    %1047 = vmatprep.subr.bf16.mxu0 0
    %1048 = vmatpush1.bf16.msra.mxu0 0
    %1049 = vmatprep.subr.bf16.mxu0 0
    %1050 = vmatpush1.bf16.msra.mxu0 0
    %1051 = vmatprep.mubr.bf16.mxu0 0
    %1052 = vmatmul.mubr.bf16.gmra.mrb[0].mxu0 %v1017
    %v1053 = vpop.f32.mrb[0].mxu0
    %v1054 = vadd.f32 0.0, %v1053
    %v1055 = vpop.f32.mrb[0].mxu0
    %v1056 = vpop.f32.mrb[0].mxu0
    %v1057 = vadd.f32 0.0, %v1056
    %v1058 = vpop.f32.mrb[0].mxu0
    %1059 = vdwg.mxu0
    %v1060 = vld [vmem:[%s10] sm:$0xf]
    %v1061 = vld [vmem:[%s10 + $0x4] sm:$0xf]
    %v1062 = vld [vmem:[%s10 + $0x8] sm:$0xf]
    %v1063 = vld [vmem:[%s10 + $0xc] sm:$0xf]
    %v1068 = vunpack.c.l.b16 %v1060
    %v1069 = vunpack.c.l.b16 %v1061
    %v1070 = vunpack.c.l.b16 %v1062
    %v1071 = vunpack.c.l.b16 %v1063
    %v1072 = vpack.c.b16 %v1069, %v1068
    %v1073 = vpack.c.b16 %v1071, %v1070
    %1076 = vmatprep.subr.bf16.mxu0 0
    %1077 = vmatpush1.bf16.msra.mxu0 %v1072
    %1078 = vmatprep.subr.bf16.mxu0 0
    %1079 = vmatpush1.bf16.msra.mxu0 %v1073
    %1080 = vmatprep.subr.bf16.mxu0 0
    %1081 = vmatpush1.bf16.msra.mxu0 0
    %1082 = vmatprep.subr.bf16.mxu0 0
    %1083 = vmatpush1.bf16.msra.mxu0 0
    %1084 = vmatprep.subr.bf16.mxu0 0
    %1085 = vmatpush1.bf16.msra.mxu0 0
    %1086 = vmatprep.subr.bf16.mxu0 0
    %1087 = vmatpush1.bf16.msra.mxu0 0
    %1088 = vmatprep.subr.bf16.mxu0 0
    %1089 = vmatpush1.bf16.msra.mxu0 0
    %1090 = vmatprep.subr.bf16.mxu0 0
    %1091 = vmatpush1.bf16.msra.mxu0 0
    %1092 = vmatprep.subr.bf16.mxu0 0
    %1093 = vmatpush1.bf16.msra.mxu0 0
    %1094 = vmatprep.subr.bf16.mxu0 0
    %1095 = vmatpush1.bf16.msra.mxu0 0
    %1096 = vmatprep.subr.bf16.mxu0 0
    %1097 = vmatpush1.bf16.msra.mxu0 0
    %1098 = vmatprep.subr.bf16.mxu0 0
    %1099 = vmatpush1.bf16.msra.mxu0 0
    %1100 = vmatprep.subr.bf16.mxu0 0
    %1101 = vmatpush1.bf16.msra.mxu0 0
    %1102 = vmatprep.subr.bf16.mxu0 0
    %1103 = vmatpush1.bf16.msra.mxu0 0
    %1104 = vmatprep.subr.bf16.mxu0 0
    %1105 = vmatpush1.bf16.msra.mxu0 0
    %1106 = vmatprep.subr.bf16.mxu0 0
    %1107 = vmatpush1.bf16.msra.mxu0 0
    %1108 = vmatprep.mubr.bf16.mxu0 0
    %1109 = vmatmul.mubr.bf16.gmra.mrb[0].mxu0 %v1017
    %v1110 = vpop.f32.mrb[0].mxu0
    %v1111 = vadd.f32 0.0, %v1110
    %v1112 = vpop.f32.mrb[0].mxu0
    %v1113 = vpop.f32.mrb[0].mxu0
    %v1114 = vadd.f32 0.0, %v1113
    %v1115 = vpop.f32.mrb[0].mxu0
    %1116 = vdwg.mxu0
    %v1117 = vxor.u32 %v1054, 2147483648
    %v1118 = vxor.u32 %v1057, 2147483648
    %v1119 = vmul.f32 %v1117, 1.442695
    %v1120 = vpow.pop %v1119
    %v1121 = vmul.f32 %v1118, 1.442695
    %v1122 = vpow.pop %v1121
    %v1123 = vadd.f32 %v1120, 1.0
    %v1124 = vadd.f32 %v1122, 1.0
    %v1125 = vrcp.pop %v1123
    %v1126 = vmul.f32 1.0, %v1125
    %v1127 = vrcp.pop %v1124
    %v1128 = vmul.f32 1.0, %v1127
    %v1129 = vmul.f32 %v1054, %v1126
    %v1130 = vmul.f32 %v1057, %v1128
    %v1131 = vmul.f32 %v1129, %v1111
    %v1132 = vmul.f32 %v1130, %v1114
    %v1133 = vpack.c.bf16 %v1132, %v1131
    %v1134 = vld [vmem:[%s11] sm:$0xf]
    %v1135 = vld [vmem:[%s11 + $0x4] sm:$0xf]
    %v1136 = vld [vmem:[%s11 + $0x8] sm:$0xf]
    %v1137 = vld [vmem:[%s11 + $0xc] sm:$0xf]
    %v1138 = vld [vmem:[%s11 + $0x10] sm:$0xf]
    %v1139 = vld [vmem:[%s11 + $0x14] sm:$0xf]
    %v1140 = vld [vmem:[%s11 + $0x18] sm:$0xf]
    %v1141 = vld [vmem:[%s11 + $0x1c] sm:$0xf]
    %v1150 = vunpack.c.l.b16 %v1134
    %v1151 = vunpack.c.l.b16 %v1135
    %v1152 = vunpack.c.l.b16 %v1136
    %v1153 = vunpack.c.l.b16 %v1137
    %v1154 = vunpack.c.l.b16 %v1138
    %v1155 = vunpack.c.l.b16 %v1139
    %v1156 = vunpack.c.l.b16 %v1140
    %v1157 = vunpack.c.l.b16 %v1141
    %v1158 = vpack.c.b16 %v1151, %v1150
    %v1159 = vpack.c.b16 %v1153, %v1152
    %v1160 = vpack.c.b16 %v1155, %v1154
    %v1161 = vpack.c.b16 %v1157, %v1156
    %vm1166 = vcmask 523264
    %v1168 = vsel %vm1166, %v1133, 0
    %1170 = vmatprep.subr.bf16.mxu0 0
    %1171 = vmatpush1.bf16.msra.mxu0 %v1158
    %1172 = vmatprep.subr.bf16.mxu0 0
    %1173 = vmatpush1.bf16.msra.mxu0 %v1159
    %1174 = vmatprep.subr.bf16.mxu0 0
    %1175 = vmatpush1.bf16.msra.mxu0 %v1160
    %1176 = vmatprep.subr.bf16.mxu0 0
    %1177 = vmatpush1.bf16.msra.mxu0 %v1161
    %1178 = vmatprep.subr.bf16.mxu0 0
    %1179 = vmatpush1.bf16.msra.mxu0 0
    %1180 = vmatprep.subr.bf16.mxu0 0
    %1181 = vmatpush1.bf16.msra.mxu0 0
    %1182 = vmatprep.subr.bf16.mxu0 0
    %1183 = vmatpush1.bf16.msra.mxu0 0
    %1184 = vmatprep.subr.bf16.mxu0 0
    %1185 = vmatpush1.bf16.msra.mxu0 0
    %1186 = vmatprep.subr.bf16.mxu0 0
    %1187 = vmatpush1.bf16.msra.mxu0 0
    %1188 = vmatprep.subr.bf16.mxu0 0
    %1189 = vmatpush1.bf16.msra.mxu0 0
    %1190 = vmatprep.subr.bf16.mxu0 0
    %1191 = vmatpush1.bf16.msra.mxu0 0
    %1192 = vmatprep.subr.bf16.mxu0 0
    %1193 = vmatpush1.bf16.msra.mxu0 0
    %1194 = vmatprep.subr.bf16.mxu0 0
    %1195 = vmatpush1.bf16.msra.mxu0 0
    %1196 = vmatprep.subr.bf16.mxu0 0
    %1197 = vmatpush1.bf16.msra.mxu0 0
    %1198 = vmatprep.subr.bf16.mxu0 0
    %1199 = vmatpush1.bf16.msra.mxu0 0
    %1200 = vmatprep.subr.bf16.mxu0 0
    %1201 = vmatpush1.bf16.msra.mxu0 0
    %1202 = vmatprep.mubr.bf16.mxu0 0
    %1203 = vmatmul.mubr.bf16.gmra.mrb[0].mxu0 %v1168
    %v1204 = vpop.f32.mrb[0].mxu0
    %v1205 = vadd.f32 0.0, %v1204
    %v1206 = vpop.f32.mrb[0].mxu0
    %v1207 = vpop.f32.mrb[0].mxu0
    %v1208 = vadd.f32 0.0, %v1207
    %v1209 = vpop.f32.mrb[0].mxu0
    %1210 = vdwg.mxu0
    %v1211 = vadd.f32 %v972, %v1205
    %v1212 = vadd.f32 %v973, %v1208
    %s1213 = scalar_lea.vmem %s4, 1
    %v1214 = vld [vmem:[%s1213] sm:$0x1]
    %v1215 = vmul.f32 %v1211, %v1211
    %v1216 = vmul.f32 %v1212, %v1212
    %v1217 = vsel %vm74, %v1215, 0.0
    %1218 = vadd.xlane.f32.xlu0 %v1217
    %v1219 = vpop.xlane.xlu0 %1218
    %v1220 = vsel %vm74, %v1216, 0.0
    %1221 = vadd.xlane.f32.xlu0 %v1220
    %v1222 = vpop.xlane.xlu0 %1221
    %v1223 = vmul.f32 %v1219, %v81
    %v1224 = vmul.f32 %v1222, %v81
    %v1225 = vadd.f32 %v1223, 1e-06
    %v1226 = vadd.f32 %v1224, 1e-06
    %v1227 = vrsqrt.pop %v1225
    %v1228 = vrsqrt.pop %v1226
    %v1229 = vmul.f32 %v1211, %v1227
    %v1230 = vmul.f32 %v1212, %v1228
    %v1232 = vlaneseq
    %v1233 = vshrl.u32 %v1232, 7
    %v1234 = vsub.s32 0, %v1233
    %v1235 = vrot.slane %v1214, %v1234
    %v1237 = vmul.f32 %v1229, %v1235
    %v1238 = vmul.f32 %v1230, %v1235
    %v1239 = vpack.c.bf16 %v1238, %v1237
    %s1240 = scalar_lea.vmem %s5, 16
    %v1241 = vld [vmem:[%s1240] sm:$0xf]
    %v1242 = vld [vmem:[%s1240 + $0x4] sm:$0xf]
    %v1243 = vld [vmem:[%s1240 + $0x8] sm:$0xf]
    %v1244 = vld [vmem:[%s1240 + $0xc] sm:$0xf]
    %v1249 = vunpack.c.l.b16 %v1241
    %v1250 = vunpack.c.l.b16 %v1242
    %v1251 = vunpack.c.l.b16 %v1243
    %v1252 = vunpack.c.l.b16 %v1244
    %v1253 = vpack.c.b16 %v1250, %v1249
    %v1254 = vpack.c.b16 %v1252, %v1251
    %v1258 = vsel %vm74, %v1239, 0
    %1260 = vmatprep.subr.bf16.mxu0 0
    %1261 = vmatpush1.bf16.msra.mxu0 %v1253
    %1262 = vmatprep.subr.bf16.mxu0 0
    %1263 = vmatpush1.bf16.msra.mxu0 %v1254
    %1264 = vmatprep.subr.bf16.mxu0 0
    %1265 = vmatpush1.bf16.msra.mxu0 0
    %1266 = vmatprep.subr.bf16.mxu0 0
    %1267 = vmatpush1.bf16.msra.mxu0 0
    %1268 = vmatprep.subr.bf16.mxu0 0
    %1269 = vmatpush1.bf16.msra.mxu0 0
    %1270 = vmatprep.subr.bf16.mxu0 0
    %1271 = vmatpush1.bf16.msra.mxu0 0
    %1272 = vmatprep.subr.bf16.mxu0 0
    %1273 = vmatpush1.bf16.msra.mxu0 0
    %1274 = vmatprep.subr.bf16.mxu0 0
    %1275 = vmatpush1.bf16.msra.mxu0 0
    %1276 = vmatprep.subr.bf16.mxu0 0
    %1277 = vmatpush1.bf16.msra.mxu0 0
    %1278 = vmatprep.subr.bf16.mxu0 0
    %1279 = vmatpush1.bf16.msra.mxu0 0
    %1280 = vmatprep.subr.bf16.mxu0 0
    %1281 = vmatpush1.bf16.msra.mxu0 0
    %1282 = vmatprep.subr.bf16.mxu0 0
    %1283 = vmatpush1.bf16.msra.mxu0 0
    %1284 = vmatprep.subr.bf16.mxu0 0
    %1285 = vmatpush1.bf16.msra.mxu0 0
    %1286 = vmatprep.subr.bf16.mxu0 0
    %1287 = vmatpush1.bf16.msra.mxu0 0
    %1288 = vmatprep.subr.bf16.mxu0 0
    %1289 = vmatpush1.bf16.msra.mxu0 0
    %1290 = vmatprep.subr.bf16.mxu0 0
    %1291 = vmatpush1.bf16.msra.mxu0 0
    %1292 = vmatprep.mubr.bf16.mxu0 0
    %1293 = vmatmul.mubr.bf16.gmra.mrb[0].mxu0 %v1258
    %v1294 = vpop.f32.mrb[0].mxu0
    %v1295 = vadd.f32 0.0, %v1294
    %v1296 = vpop.f32.mrb[0].mxu0
    %v1297 = vpop.f32.mrb[0].mxu0
    %v1298 = vadd.f32 0.0, %v1297
    %v1299 = vpop.f32.mrb[0].mxu0
    %1300 = vdwg.mxu0
    %s1301 = scalar_lea.vmem %s6, 16
    %v1302 = vld [vmem:[%s1301] sm:$0xf]
    %v1303 = vld [vmem:[%s1301 + $0x4] sm:$0xf]
    %v1304 = vld [vmem:[%s1301 + $0x8] sm:$0xf]
    %v1305 = vld [vmem:[%s1301 + $0xc] sm:$0xf]
    %v1310 = vunpack.c.l.b16 %v1302
    %v1311 = vunpack.c.l.b16 %v1303
    %v1312 = vunpack.c.l.b16 %v1304
    %v1313 = vunpack.c.l.b16 %v1305
    %v1314 = vpack.c.b16 %v1311, %v1310
    %v1315 = vpack.c.b16 %v1313, %v1312
    %1318 = vmatprep.subr.bf16.mxu0 0
    %1319 = vmatpush1.bf16.msra.mxu0 %v1314
    %1320 = vmatprep.subr.bf16.mxu0 0
    %1321 = vmatpush1.bf16.msra.mxu0 %v1315
    %1322 = vmatprep.subr.bf16.mxu0 0
    %1323 = vmatpush1.bf16.msra.mxu0 0
    %1324 = vmatprep.subr.bf16.mxu0 0
    %1325 = vmatpush1.bf16.msra.mxu0 0
    %1326 = vmatprep.subr.bf16.mxu0 0
    %1327 = vmatpush1.bf16.msra.mxu0 0
    %1328 = vmatprep.subr.bf16.mxu0 0
    %1329 = vmatpush1.bf16.msra.mxu0 0
    %1330 = vmatprep.subr.bf16.mxu0 0
    %1331 = vmatpush1.bf16.msra.mxu0 0
    %1332 = vmatprep.subr.bf16.mxu0 0
    %1333 = vmatpush1.bf16.msra.mxu0 0
    %1334 = vmatprep.subr.bf16.mxu0 0
    %1335 = vmatpush1.bf16.msra.mxu0 0
    %1336 = vmatprep.subr.bf16.mxu0 0
    %1337 = vmatpush1.bf16.msra.mxu0 0
    %1338 = vmatprep.subr.bf16.mxu0 0
    %1339 = vmatpush1.bf16.msra.mxu0 0
    %1340 = vmatprep.subr.bf16.mxu0 0
    %1341 = vmatpush1.bf16.msra.mxu0 0
    %1342 = vmatprep.subr.bf16.mxu0 0
    %1343 = vmatpush1.bf16.msra.mxu0 0
    %1344 = vmatprep.subr.bf16.mxu0 0
    %1345 = vmatpush1.bf16.msra.mxu0 0
    %1346 = vmatprep.subr.bf16.mxu0 0
    %1347 = vmatpush1.bf16.msra.mxu0 0
    %1348 = vmatprep.subr.bf16.mxu0 0
    %1349 = vmatpush1.bf16.msra.mxu0 0
    %1350 = vmatprep.mubr.bf16.mxu0 0
    %1351 = vmatmul.mubr.bf16.gmra.mrb[0].mxu0 %v1258
    %v1352 = vpop.f32.mrb[0].mxu0
    %v1353 = vadd.f32 0.0, %v1352
    %v1354 = vpop.f32.mrb[0].mxu0
    %v1355 = vpop.f32.mrb[0].mxu0
    %v1356 = vadd.f32 0.0, %v1355
    %v1357 = vpop.f32.mrb[0].mxu0
    %1358 = vdwg.mxu0
    %v1359 = vmul.f32 %v1295, %v65
    %v1360 = vmul.f32 %v1298, %v66
    %v1361 = vmul.f32 %v1295, %v221
    %v1362 = vmul.f32 %v1298, %v223
    %1365 = vrot.lane.b32.xlu0 %v1361, 96
    %v1366 = vpop.permute.xlu0 %1365
    %1367 = vrot.lane.b32.xlu0 %v1362, 96
    %v1368 = vpop.permute.xlu0 %1367
    %v1371 = vadd.f32 %v1359, %v1366
    %v1372 = vadd.f32 %v1360, %v1368
    %v1373 = vmul.f32 %v1295, %v241
    %v1374 = vmul.f32 %v1298, %v243
    %v1375 = vmul.f32 %v1295, %v249
    %v1376 = vmul.f32 %v1298, %v251
    %1379 = vrot.lane.b32.xlu0 %v1375, 96
    %v1380 = vpop.permute.xlu0 %1379
    %1381 = vrot.lane.b32.xlu0 %v1376, 96
    %v1382 = vpop.permute.xlu0 %1381
    %v1385 = vadd.f32 %v1373, %v1380
    %v1386 = vadd.f32 %v1374, %v1382
    %v1387 = vpack.c.bf16 %v1372, %v1371
    %v1388 = vpack.c.bf16 %v1386, %v1385
    %v1389 = vpack.c.bf16 %v1356, %v1353
    %1391 = vrot.lane.b32.xlu0 %v1388, 64
    %v1392 = vpop.permute.xlu0 %1391
    %v1394 = vsel %vm272, %v1387, 0
    %v1397 = vsel %vm272, %v1392, 0
    %1399 = vmatprep.subr.bf16.mxu0 0
    %1400 = vmatpush1.bf16.xpose.msra.mxu0 %v1397
    %1401 = vmatprep.subr.bf16.mxu0 0
    %1402 = vmatpush1.bf16.xpose.msra.mxu0 0
    %1403 = vmatprep.subr.bf16.mxu0 0
    %1404 = vmatpush1.bf16.xpose.msra.mxu0 0
    %1405 = vmatprep.subr.bf16.mxu0 0
    %1406 = vmatpush1.bf16.xpose.msra.mxu0 0
    %1407 = vmatprep.subr.bf16.mxu0 0
    %1408 = vmatpush1.bf16.xpose.msra.mxu0 0
    %1409 = vmatprep.subr.bf16.mxu0 0
    %1410 = vmatpush1.bf16.xpose.msra.mxu0 0
    %1411 = vmatprep.subr.bf16.mxu0 0
    %1412 = vmatpush1.bf16.xpose.msra.mxu0 0
    %1413 = vmatprep.subr.bf16.mxu0 0
    %1414 = vmatpush1.bf16.xpose.msra.mxu0 0
    %1415 = vmatprep.subr.bf16.mxu0 0
    %1416 = vmatpush1.bf16.xpose.msra.mxu0 0
    %1417 = vmatprep.subr.bf16.mxu0 0
    %1418 = vmatpush1.bf16.xpose.msra.mxu0 0
    %1419 = vmatprep.subr.bf16.mxu0 0
    %1420 = vmatpush1.bf16.xpose.msra.mxu0 0
    %1421 = vmatprep.subr.bf16.mxu0 0
    %1422 = vmatpush1.bf16.xpose.msra.mxu0 0
    %1423 = vmatprep.subr.bf16.mxu0 0
    %1424 = vmatpush1.bf16.xpose.msra.mxu0 0
    %1425 = vmatprep.subr.bf16.mxu0 0
    %1426 = vmatpush1.bf16.xpose.msra.mxu0 0
    %1427 = vmatprep.subr.bf16.mxu0 0
    %1428 = vmatpush1.bf16.xpose.msra.mxu0 0
    %1429 = vmatprep.subr.bf16.mxu0 0
    %1430 = vmatpush1.bf16.xpose.msra.mxu0 0
    %1431 = vmatprep.mubr.bf16.mxu0 0
    %1432 = vmatmul.mubr.bf16.gmra.mrb[0].mxu0 %v1394
    %v1433 = vpop.f32.mrb[0].mxu0
    %v1434 = vadd.f32 0.0, %v1433
    %v1435 = vpop.f32.mrb[0].mxu0
    %v1436 = vpop.f32.mrb[0].mxu0
    %v1437 = vadd.f32 0.0, %v1436
    %v1438 = vpop.f32.mrb[0].mxu0
    %1439 = vdwg.mxu0
    %1441 = vrot.lane.b32.xlu0 %v1387, 120
    %v1442 = vpop.permute.xlu0 %1441
    %1443 = vrot.lane.b32.xlu0 %v1388, 56
    %v1444 = vpop.permute.xlu0 %1443
    %v1446 = vsel %vm272, %v1442, 0
    %v1449 = vsel %vm272, %v1444, 0
    %1451 = vmatprep.subr.bf16.mxu0 0
    %1452 = vmatpush1.bf16.xpose.msra.mxu0 %v1449
    %1453 = vmatprep.subr.bf16.mxu0 0
    %1454 = vmatpush1.bf16.xpose.msra.mxu0 0
    %1455 = vmatprep.subr.bf16.mxu0 0
    %1456 = vmatpush1.bf16.xpose.msra.mxu0 0
    %1457 = vmatprep.subr.bf16.mxu0 0
    %1458 = vmatpush1.bf16.xpose.msra.mxu0 0
    %1459 = vmatprep.subr.bf16.mxu0 0
    %1460 = vmatpush1.bf16.xpose.msra.mxu0 0
    %1461 = vmatprep.subr.bf16.mxu0 0
    %1462 = vmatpush1.bf16.xpose.msra.mxu0 0
    %1463 = vmatprep.subr.bf16.mxu0 0
    %1464 = vmatpush1.bf16.xpose.msra.mxu0 0
    %1465 = vmatprep.subr.bf16.mxu0 0
    %1466 = vmatpush1.bf16.xpose.msra.mxu0 0
    %1467 = vmatprep.subr.bf16.mxu0 0
    %1468 = vmatpush1.bf16.xpose.msra.mxu0 0
    %1469 = vmatprep.subr.bf16.mxu0 0
    %1470 = vmatpush1.bf16.xpose.msra.mxu0 0
    %1471 = vmatprep.subr.bf16.mxu0 0
    %1472 = vmatpush1.bf16.xpose.msra.mxu0 0
    %1473 = vmatprep.subr.bf16.mxu0 0
    %1474 = vmatpush1.bf16.xpose.msra.mxu0 0
    %1475 = vmatprep.subr.bf16.mxu0 0
    %1476 = vmatpush1.bf16.xpose.msra.mxu0 0
    %1477 = vmatprep.subr.bf16.mxu0 0
    %1478 = vmatpush1.bf16.xpose.msra.mxu0 0
    %1479 = vmatprep.subr.bf16.mxu0 0
    %1480 = vmatpush1.bf16.xpose.msra.mxu0 0
    %1481 = vmatprep.subr.bf16.mxu0 0
    %1482 = vmatpush1.bf16.xpose.msra.mxu0 0
    %1483 = vmatprep.mubr.bf16.mxu0 0
    %1484 = vmatmul.mubr.bf16.gmra.mrb[0].mxu0 %v1446
    %v1485 = vpop.f32.mrb[0].mxu0
    %v1486 = vadd.f32 0.0, %v1485
    %v1487 = vpop.f32.mrb[0].mxu0
    %v1488 = vpop.f32.mrb[0].mxu0
    %v1489 = vadd.f32 0.0, %v1488
    %v1490 = vpop.f32.mrb[0].mxu0
    %1491 = vdwg.mxu0
    %1492 = vrot.lane.b32.xlu0 %v1387, 112
    %v1493 = vpop.permute.xlu0 %1492
    %1494 = vrot.lane.b32.xlu0 %v1388, 48
    %v1495 = vpop.permute.xlu0 %1494
    %v1497 = vsel %vm272, %v1493, 0
    %v1500 = vsel %vm272, %v1495, 0
    %1502 = vmatprep.subr.bf16.mxu0 0
    %1503 = vmatpush1.bf16.xpose.msra.mxu0 %v1500
    %1504 = vmatprep.subr.bf16.mxu0 0
    %1505 = vmatpush1.bf16.xpose.msra.mxu0 0
    %1506 = vmatprep.subr.bf16.mxu0 0
    %1507 = vmatpush1.bf16.xpose.msra.mxu0 0
    %1508 = vmatprep.subr.bf16.mxu0 0
    %1509 = vmatpush1.bf16.xpose.msra.mxu0 0
    %1510 = vmatprep.subr.bf16.mxu0 0
    %1511 = vmatpush1.bf16.xpose.msra.mxu0 0
    %1512 = vmatprep.subr.bf16.mxu0 0
    %1513 = vmatpush1.bf16.xpose.msra.mxu0 0
    %1514 = vmatprep.subr.bf16.mxu0 0
    %1515 = vmatpush1.bf16.xpose.msra.mxu0 0
    %1516 = vmatprep.subr.bf16.mxu0 0
    %1517 = vmatpush1.bf16.xpose.msra.mxu0 0
    %1518 = vmatprep.subr.bf16.mxu0 0
    %1519 = vmatpush1.bf16.xpose.msra.mxu0 0
    %1520 = vmatprep.subr.bf16.mxu0 0
    %1521 = vmatpush1.bf16.xpose.msra.mxu0 0
    %1522 = vmatprep.subr.bf16.mxu0 0
    %1523 = vmatpush1.bf16.xpose.msra.mxu0 0
    %1524 = vmatprep.subr.bf16.mxu0 0
    %1525 = vmatpush1.bf16.xpose.msra.mxu0 0
    %1526 = vmatprep.subr.bf16.mxu0 0
    %1527 = vmatpush1.bf16.xpose.msra.mxu0 0
    %1528 = vmatprep.subr.bf16.mxu0 0
    %1529 = vmatpush1.bf16.xpose.msra.mxu0 0
    %1530 = vmatprep.subr.bf16.mxu0 0
    %1531 = vmatpush1.bf16.xpose.msra.mxu0 0
    %1532 = vmatprep.subr.bf16.mxu0 0
    %1533 = vmatpush1.bf16.xpose.msra.mxu0 0
    %1534 = vmatprep.mubr.bf16.mxu0 0
    %1535 = vmatmul.mubr.bf16.gmra.mrb[0].mxu0 %v1497
    %v1536 = vpop.f32.mrb[0].mxu0
    %v1537 = vadd.f32 0.0, %v1536
    %v1538 = vpop.f32.mrb[0].mxu0
    %v1539 = vpop.f32.mrb[0].mxu0
    %v1540 = vadd.f32 0.0, %v1539
    %v1541 = vpop.f32.mrb[0].mxu0
    %1542 = vdwg.mxu0
    %1543 = vrot.lane.b32.xlu0 %v1387, 104
    %v1544 = vpop.permute.xlu0 %1543
    %1545 = vrot.lane.b32.xlu0 %v1388, 40
    %v1546 = vpop.permute.xlu0 %1545
    %v1548 = vsel %vm272, %v1544, 0
    %v1551 = vsel %vm272, %v1546, 0
    %1553 = vmatprep.subr.bf16.mxu0 0
    %1554 = vmatpush1.bf16.xpose.msra.mxu0 %v1551
    %1555 = vmatprep.subr.bf16.mxu0 0
    %1556 = vmatpush1.bf16.xpose.msra.mxu0 0
    %1557 = vmatprep.subr.bf16.mxu0 0
    %1558 = vmatpush1.bf16.xpose.msra.mxu0 0
    %1559 = vmatprep.subr.bf16.mxu0 0
    %1560 = vmatpush1.bf16.xpose.msra.mxu0 0
    %1561 = vmatprep.subr.bf16.mxu0 0
    %1562 = vmatpush1.bf16.xpose.msra.mxu0 0
    %1563 = vmatprep.subr.bf16.mxu0 0
    %1564 = vmatpush1.bf16.xpose.msra.mxu0 0
    %1565 = vmatprep.subr.bf16.mxu0 0
    %1566 = vmatpush1.bf16.xpose.msra.mxu0 0
    %1567 = vmatprep.subr.bf16.mxu0 0
    %1568 = vmatpush1.bf16.xpose.msra.mxu0 0
    %1569 = vmatprep.subr.bf16.mxu0 0
    %1570 = vmatpush1.bf16.xpose.msra.mxu0 0
    %1571 = vmatprep.subr.bf16.mxu0 0
    %1572 = vmatpush1.bf16.xpose.msra.mxu0 0
    %1573 = vmatprep.subr.bf16.mxu0 0
    %1574 = vmatpush1.bf16.xpose.msra.mxu0 0
    %1575 = vmatprep.subr.bf16.mxu0 0
    %1576 = vmatpush1.bf16.xpose.msra.mxu0 0
    %1577 = vmatprep.subr.bf16.mxu0 0
    %1578 = vmatpush1.bf16.xpose.msra.mxu0 0
    %1579 = vmatprep.subr.bf16.mxu0 0
    %1580 = vmatpush1.bf16.xpose.msra.mxu0 0
    %1581 = vmatprep.subr.bf16.mxu0 0
    %1582 = vmatpush1.bf16.xpose.msra.mxu0 0
    %1583 = vmatprep.subr.bf16.mxu0 0
    %1584 = vmatpush1.bf16.xpose.msra.mxu0 0
    %1585 = vmatprep.mubr.bf16.mxu0 0
    %1586 = vmatmul.mubr.bf16.gmra.mrb[0].mxu0 %v1548
    %v1587 = vpop.f32.mrb[0].mxu0
    %v1588 = vadd.f32 0.0, %v1587
    %v1589 = vpop.f32.mrb[0].mxu0
    %v1590 = vpop.f32.mrb[0].mxu0
    %v1591 = vadd.f32 0.0, %v1590
    %v1592 = vpop.f32.mrb[0].mxu0
    %1593 = vdwg.mxu0
    %v1594 = vsel %vm474, %v1434, -inf
    %1595 = vmax.xlane.f32.xlu0 %v1594
    %v1596 = vpop.xlane.xlu0 %1595
    %v1597 = vsel %vm474, %v1437, -inf
    %1598 = vmax.xlane.f32.xlu0 %v1597
    %v1599 = vpop.xlane.xlu0 %1598
    %v1600 = vsel %vm474, %v1486, -inf
    %1601 = vmax.xlane.f32.xlu0 %v1600
    %v1602 = vpop.xlane.xlu0 %1601
    %v1603 = vsel %vm474, %v1489, -inf
    %1604 = vmax.xlane.f32.xlu0 %v1603
    %v1605 = vpop.xlane.xlu0 %1604
    %v1606 = vsel %vm474, %v1537, -inf
    %1607 = vmax.xlane.f32.xlu0 %v1606
    %v1608 = vpop.xlane.xlu0 %1607
    %v1609 = vsel %vm474, %v1540, -inf
    %1610 = vmax.xlane.f32.xlu0 %v1609
    %v1611 = vpop.xlane.xlu0 %1610
    %v1612 = vsel %vm474, %v1588, -inf
    %1613 = vmax.xlane.f32.xlu0 %v1612
    %v1614 = vpop.xlane.xlu0 %1613
    %v1615 = vsel %vm474, %v1591, -inf
    %1616 = vmax.xlane.f32.xlu0 %v1615
    %v1617 = vpop.xlane.xlu0 %1616
    %v1618 = vsub.f32 %v1434, %v1596
    %v1619 = vsub.f32 %v1437, %v1599
    %v1620 = vsub.f32 %v1486, %v1602
    %v1621 = vsub.f32 %v1489, %v1605
    %v1622 = vsub.f32 %v1537, %v1608
    %v1623 = vsub.f32 %v1540, %v1611
    %v1624 = vsub.f32 %v1588, %v1614
    %v1625 = vsub.f32 %v1591, %v1617
    %v1626 = vmul.f32 %v1618, 1.442695
    %v1627 = vpow.pop %v1626
    %v1628 = vmul.f32 %v1619, 1.442695
    %v1629 = vpow.pop %v1628
    %v1630 = vmul.f32 %v1620, 1.442695
    %v1631 = vpow.pop %v1630
    %v1632 = vmul.f32 %v1621, 1.442695
    %v1633 = vpow.pop %v1632
    %v1634 = vmul.f32 %v1622, 1.442695
    %v1635 = vpow.pop %v1634
    %v1636 = vmul.f32 %v1623, 1.442695
    %v1637 = vpow.pop %v1636
    %v1638 = vmul.f32 %v1624, 1.442695
    %v1639 = vpow.pop %v1638
    %v1640 = vmul.f32 %v1625, 1.442695
    %v1641 = vpow.pop %v1640
    %v1642 = vmul.f32 %v1627, %v69
    %v1643 = vmul.f32 %v1629, %v70
    %v1644 = vmul.f32 %v1631, %v69
    %v1645 = vmul.f32 %v1633, %v70
    %v1646 = vmul.f32 %v1635, %v69
    %v1647 = vmul.f32 %v1637, %v70
    %v1648 = vmul.f32 %v1639, %v69
    %v1649 = vmul.f32 %v1641, %v70
    %v1650 = vsel %vm474, %v1642, 0.0
    %1651 = vadd.xlane.f32.xlu0 %v1650
    %v1652 = vpop.xlane.xlu0 %1651
    %v1653 = vsel %vm474, %v1643, 0.0
    %1654 = vadd.xlane.f32.xlu0 %v1653
    %v1655 = vpop.xlane.xlu0 %1654
    %v1656 = vsel %vm474, %v1644, 0.0
    %1657 = vadd.xlane.f32.xlu0 %v1656
    %v1658 = vpop.xlane.xlu0 %1657
    %v1659 = vsel %vm474, %v1645, 0.0
    %1660 = vadd.xlane.f32.xlu0 %v1659
    %v1661 = vpop.xlane.xlu0 %1660
    %v1662 = vsel %vm474, %v1646, 0.0
    %1663 = vadd.xlane.f32.xlu0 %v1662
    %v1664 = vpop.xlane.xlu0 %1663
    %v1665 = vsel %vm474, %v1647, 0.0
    %1666 = vadd.xlane.f32.xlu0 %v1665
    %v1667 = vpop.xlane.xlu0 %1666
    %v1668 = vsel %vm474, %v1648, 0.0
    %1669 = vadd.xlane.f32.xlu0 %v1668
    %v1670 = vpop.xlane.xlu0 %1669
    %v1671 = vsel %vm474, %v1649, 0.0
    %1672 = vadd.xlane.f32.xlu0 %v1671
    %v1673 = vpop.xlane.xlu0 %1672
    %v1674 = vadd.f32 %v1652, 1e-09
    %v1675 = vadd.f32 %v1655, 1e-09
    %v1676 = vadd.f32 %v1658, 1e-09
    %v1677 = vadd.f32 %v1661, 1e-09
    %v1678 = vadd.f32 %v1664, 1e-09
    %v1679 = vadd.f32 %v1667, 1e-09
    %v1680 = vadd.f32 %v1670, 1e-09
    %v1681 = vadd.f32 %v1673, 1e-09
    %v1682 = vrcp.pop %v1674
    %v1683 = vrcp.pop %v1675
    %v1684 = vrcp.pop %v1676
    %v1685 = vrcp.pop %v1677
    %v1686 = vrcp.pop %v1678
    %v1687 = vrcp.pop %v1679
    %v1688 = vrcp.pop %v1680
    %v1689 = vrcp.pop %v1681
    %v1690 = vmul.f32 %v1642, %v1682
    %v1691 = vmul.f32 %v1643, %v1683
    %v1692 = vmul.f32 %v1644, %v1684
    %v1693 = vmul.f32 %v1645, %v1685
    %v1694 = vmul.f32 %v1646, %v1686
    %v1695 = vmul.f32 %v1647, %v1687
    %v1696 = vmul.f32 %v1648, %v1688
    %v1697 = vmul.f32 %v1649, %v1689
    %v1698 = vpack.c.bf16 %v1691, %v1690
    %v1699 = vpack.c.bf16 %v1693, %v1692
    %v1700 = vpack.c.bf16 %v1695, %v1694
    %v1701 = vpack.c.bf16 %v1697, %v1696
    %s1702 = scalar_lea.vmem %s7, 16
    %v1703 = vld [vmem:[%s1702] sm:$0xf]
    %v1704 = vld [vmem:[%s1702 + $0x4] sm:$0xf]
    %v1705 = vld [vmem:[%s1702 + $0x8] sm:$0xf]
    %v1706 = vld [vmem:[%s1702 + $0xc] sm:$0xf]
    %v1708 = vsel %vm474, %v1698, 0
    %1710 = vmatprep.subr.bf16.mxu0 0
    %1711 = vmatpush1.bf16.msra.mxu0 %v1389
    %1712 = vmatprep.subr.bf16.mxu0 0
    %1713 = vmatpush1.bf16.msra.mxu0 0
    %1714 = vmatprep.subr.bf16.mxu0 0
    %1715 = vmatpush1.bf16.msra.mxu0 0
    %1716 = vmatprep.subr.bf16.mxu0 0
    %1717 = vmatpush1.bf16.msra.mxu0 0
    %1718 = vmatprep.subr.bf16.mxu0 0
    %1719 = vmatpush1.bf16.msra.mxu0 0
    %1720 = vmatprep.subr.bf16.mxu0 0
    %1721 = vmatpush1.bf16.msra.mxu0 0
    %1722 = vmatprep.subr.bf16.mxu0 0
    %1723 = vmatpush1.bf16.msra.mxu0 0
    %1724 = vmatprep.subr.bf16.mxu0 0
    %1725 = vmatpush1.bf16.msra.mxu0 0
    %1726 = vmatprep.subr.bf16.mxu0 0
    %1727 = vmatpush1.bf16.msra.mxu0 0
    %1728 = vmatprep.subr.bf16.mxu0 0
    %1729 = vmatpush1.bf16.msra.mxu0 0
    %1730 = vmatprep.subr.bf16.mxu0 0
    %1731 = vmatpush1.bf16.msra.mxu0 0
    %1732 = vmatprep.subr.bf16.mxu0 0
    %1733 = vmatpush1.bf16.msra.mxu0 0
    %1734 = vmatprep.subr.bf16.mxu0 0
    %1735 = vmatpush1.bf16.msra.mxu0 0
    %1736 = vmatprep.subr.bf16.mxu0 0
    %1737 = vmatpush1.bf16.msra.mxu0 0
    %1738 = vmatprep.subr.bf16.mxu0 0
    %1739 = vmatpush1.bf16.msra.mxu0 0
    %1740 = vmatprep.subr.bf16.mxu0 0
    %1741 = vmatpush1.bf16.msra.mxu0 0
    %1742 = vmatprep.mubr.bf16.mxu0 0
    %1743 = vmatmul.mubr.bf16.gmra.mrb[0].mxu0 %v1708
    %v1744 = vpop.f32.mrb[0].mxu0
    %v1745 = vadd.f32 0.0, %v1744
    %v1746 = vpop.f32.mrb[0].mxu0
    %v1747 = vpop.f32.mrb[0].mxu0
    %v1748 = vadd.f32 0.0, %v1747
    %v1749 = vpop.f32.mrb[0].mxu0
    %1750 = vdwg.mxu0
    %v1751 = vpack.c.bf16 %v1748, %v1745
    %v1753 = vsel %vm272, %v1751, 0
    %v1756 = vsel %vm635, %v1703, 0
    %1758 = vmatprep.subr.bf16.mxu0 0
    %1759 = vmatpush1.bf16.msra.mxu0 %v1756
    %1760 = vmatprep.subr.bf16.mxu0 0
    %1761 = vmatpush1.bf16.msra.mxu0 0
    %1762 = vmatprep.subr.bf16.mxu0 0
    %1763 = vmatpush1.bf16.msra.mxu0 0
    %1764 = vmatprep.subr.bf16.mxu0 0
    %1765 = vmatpush1.bf16.msra.mxu0 0
    %1766 = vmatprep.subr.bf16.mxu0 0
    %1767 = vmatpush1.bf16.msra.mxu0 0
    %1768 = vmatprep.subr.bf16.mxu0 0
    %1769 = vmatpush1.bf16.msra.mxu0 0
    %1770 = vmatprep.subr.bf16.mxu0 0
    %1771 = vmatpush1.bf16.msra.mxu0 0
    %1772 = vmatprep.subr.bf16.mxu0 0
    %1773 = vmatpush1.bf16.msra.mxu0 0
    %1774 = vmatprep.subr.bf16.mxu0 0
    %1775 = vmatpush1.bf16.msra.mxu0 0
    %1776 = vmatprep.subr.bf16.mxu0 0
    %1777 = vmatpush1.bf16.msra.mxu0 0
    %1778 = vmatprep.subr.bf16.mxu0 0
    %1779 = vmatpush1.bf16.msra.mxu0 0
    %1780 = vmatprep.subr.bf16.mxu0 0
    %1781 = vmatpush1.bf16.msra.mxu0 0
    %1782 = vmatprep.subr.bf16.mxu0 0
    %1783 = vmatpush1.bf16.msra.mxu0 0
    %1784 = vmatprep.subr.bf16.mxu0 0
    %1785 = vmatpush1.bf16.msra.mxu0 0
    %1786 = vmatprep.subr.bf16.mxu0 0
    %1787 = vmatpush1.bf16.msra.mxu0 0
    %1788 = vmatprep.subr.bf16.mxu0 0
    %1789 = vmatpush1.bf16.msra.mxu0 0
    %1790 = vmatprep.mubr.bf16.mxu0 0
    %1791 = vmatmul.mubr.bf16.gmra.mrb[0].mxu0 %v1753
    %v1792 = vpop.f32.mrb[0].mxu0
    %v1793 = vadd.f32 0.0, %v1792
    %v1794 = vpop.f32.mrb[0].mxu0
    %v1795 = vpop.f32.mrb[0].mxu0
    %v1796 = vadd.f32 0.0, %v1795
    %v1797 = vpop.f32.mrb[0].mxu0
    %1798 = vdwg.mxu0
    %v1799 = vadd.f32 %v1211, %v1793
    %v1800 = vadd.f32 %v1212, %v1796
    %1802 = vrot.lane.b32.xlu0 %v1389, 120
    %v1803 = vpop.permute.xlu0 %1802
    %v1806 = vsel %vm474, %v1699, 0
    %1808 = vmatprep.subr.bf16.mxu0 0
    %1809 = vmatpush1.bf16.msra.mxu0 %v1803
    %1810 = vmatprep.subr.bf16.mxu0 0
    %1811 = vmatpush1.bf16.msra.mxu0 0
    %1812 = vmatprep.subr.bf16.mxu0 0
    %1813 = vmatpush1.bf16.msra.mxu0 0
    %1814 = vmatprep.subr.bf16.mxu0 0
    %1815 = vmatpush1.bf16.msra.mxu0 0
    %1816 = vmatprep.subr.bf16.mxu0 0
    %1817 = vmatpush1.bf16.msra.mxu0 0
    %1818 = vmatprep.subr.bf16.mxu0 0
    %1819 = vmatpush1.bf16.msra.mxu0 0
    %1820 = vmatprep.subr.bf16.mxu0 0
    %1821 = vmatpush1.bf16.msra.mxu0 0
    %1822 = vmatprep.subr.bf16.mxu0 0
    %1823 = vmatpush1.bf16.msra.mxu0 0
    %1824 = vmatprep.subr.bf16.mxu0 0
    %1825 = vmatpush1.bf16.msra.mxu0 0
    %1826 = vmatprep.subr.bf16.mxu0 0
    %1827 = vmatpush1.bf16.msra.mxu0 0
    %1828 = vmatprep.subr.bf16.mxu0 0
    %1829 = vmatpush1.bf16.msra.mxu0 0
    %1830 = vmatprep.subr.bf16.mxu0 0
    %1831 = vmatpush1.bf16.msra.mxu0 0
    %1832 = vmatprep.subr.bf16.mxu0 0
    %1833 = vmatpush1.bf16.msra.mxu0 0
    %1834 = vmatprep.subr.bf16.mxu0 0
    %1835 = vmatpush1.bf16.msra.mxu0 0
    %1836 = vmatprep.subr.bf16.mxu0 0
    %1837 = vmatpush1.bf16.msra.mxu0 0
    %1838 = vmatprep.subr.bf16.mxu0 0
    %1839 = vmatpush1.bf16.msra.mxu0 0
    %1840 = vmatprep.mubr.bf16.mxu0 0
    %1841 = vmatmul.mubr.bf16.gmra.mrb[0].mxu0 %v1806
    %v1842 = vpop.f32.mrb[0].mxu0
    %v1843 = vadd.f32 0.0, %v1842
    %v1844 = vpop.f32.mrb[0].mxu0
    %v1845 = vpop.f32.mrb[0].mxu0
    %v1846 = vadd.f32 0.0, %v1845
    %v1847 = vpop.f32.mrb[0].mxu0
    %1848 = vdwg.mxu0
    %v1849 = vpack.c.bf16 %v1846, %v1843
    %v1851 = vsel %vm272, %v1849, 0
    %v1854 = vsel %vm635, %v1704, 0
    %1856 = vmatprep.subr.bf16.mxu0 0
    %1857 = vmatpush1.bf16.msra.mxu0 %v1854
    %1858 = vmatprep.subr.bf16.mxu0 0
    %1859 = vmatpush1.bf16.msra.mxu0 0
    %1860 = vmatprep.subr.bf16.mxu0 0
    %1861 = vmatpush1.bf16.msra.mxu0 0
    %1862 = vmatprep.subr.bf16.mxu0 0
    %1863 = vmatpush1.bf16.msra.mxu0 0
    %1864 = vmatprep.subr.bf16.mxu0 0
    %1865 = vmatpush1.bf16.msra.mxu0 0
    %1866 = vmatprep.subr.bf16.mxu0 0
    %1867 = vmatpush1.bf16.msra.mxu0 0
    %1868 = vmatprep.subr.bf16.mxu0 0
    %1869 = vmatpush1.bf16.msra.mxu0 0
    %1870 = vmatprep.subr.bf16.mxu0 0
    %1871 = vmatpush1.bf16.msra.mxu0 0
    %1872 = vmatprep.subr.bf16.mxu0 0
    %1873 = vmatpush1.bf16.msra.mxu0 0
    %1874 = vmatprep.subr.bf16.mxu0 0
    %1875 = vmatpush1.bf16.msra.mxu0 0
    %1876 = vmatprep.subr.bf16.mxu0 0
    %1877 = vmatpush1.bf16.msra.mxu0 0
    %1878 = vmatprep.subr.bf16.mxu0 0
    %1879 = vmatpush1.bf16.msra.mxu0 0
    %1880 = vmatprep.subr.bf16.mxu0 0
    %1881 = vmatpush1.bf16.msra.mxu0 0
    %1882 = vmatprep.subr.bf16.mxu0 0
    %1883 = vmatpush1.bf16.msra.mxu0 0
    %1884 = vmatprep.subr.bf16.mxu0 0
    %1885 = vmatpush1.bf16.msra.mxu0 0
    %1886 = vmatprep.subr.bf16.mxu0 0
    %1887 = vmatpush1.bf16.msra.mxu0 0
    %1888 = vmatprep.mubr.bf16.mxu0 0
    %1889 = vmatmul.mubr.bf16.gmra.mrb[0].mxu0 %v1851
    %v1890 = vpop.f32.mrb[0].mxu0
    %v1891 = vadd.f32 0.0, %v1890
    %v1892 = vpop.f32.mrb[0].mxu0
    %v1893 = vpop.f32.mrb[0].mxu0
    %v1894 = vadd.f32 0.0, %v1893
    %v1895 = vpop.f32.mrb[0].mxu0
    %1896 = vdwg.mxu0
    %v1897 = vadd.f32 %v1799, %v1891
    %v1898 = vadd.f32 %v1800, %v1894
    %1899 = vrot.lane.b32.xlu0 %v1389, 112
    %v1900 = vpop.permute.xlu0 %1899
    %v1903 = vsel %vm474, %v1700, 0
    %1905 = vmatprep.subr.bf16.mxu0 0
    %1906 = vmatpush1.bf16.msra.mxu0 %v1900
    %1907 = vmatprep.subr.bf16.mxu0 0
    %1908 = vmatpush1.bf16.msra.mxu0 0
    %1909 = vmatprep.subr.bf16.mxu0 0
    %1910 = vmatpush1.bf16.msra.mxu0 0
    %1911 = vmatprep.subr.bf16.mxu0 0
    %1912 = vmatpush1.bf16.msra.mxu0 0
    %1913 = vmatprep.subr.bf16.mxu0 0
    %1914 = vmatpush1.bf16.msra.mxu0 0
    %1915 = vmatprep.subr.bf16.mxu0 0
    %1916 = vmatpush1.bf16.msra.mxu0 0
    %1917 = vmatprep.subr.bf16.mxu0 0
    %1918 = vmatpush1.bf16.msra.mxu0 0
    %1919 = vmatprep.subr.bf16.mxu0 0
    %1920 = vmatpush1.bf16.msra.mxu0 0
    %1921 = vmatprep.subr.bf16.mxu0 0
    %1922 = vmatpush1.bf16.msra.mxu0 0
    %1923 = vmatprep.subr.bf16.mxu0 0
    %1924 = vmatpush1.bf16.msra.mxu0 0
    %1925 = vmatprep.subr.bf16.mxu0 0
    %1926 = vmatpush1.bf16.msra.mxu0 0
    %1927 = vmatprep.subr.bf16.mxu0 0
    %1928 = vmatpush1.bf16.msra.mxu0 0
    %1929 = vmatprep.subr.bf16.mxu0 0
    %1930 = vmatpush1.bf16.msra.mxu0 0
    %1931 = vmatprep.subr.bf16.mxu0 0
    %1932 = vmatpush1.bf16.msra.mxu0 0
    %1933 = vmatprep.subr.bf16.mxu0 0
    %1934 = vmatpush1.bf16.msra.mxu0 0
    %1935 = vmatprep.subr.bf16.mxu0 0
    %1936 = vmatpush1.bf16.msra.mxu0 0
    %1937 = vmatprep.mubr.bf16.mxu0 0
    %1938 = vmatmul.mubr.bf16.gmra.mrb[0].mxu0 %v1903
    %v1939 = vpop.f32.mrb[0].mxu0
    %v1940 = vadd.f32 0.0, %v1939
    %v1941 = vpop.f32.mrb[0].mxu0
    %v1942 = vpop.f32.mrb[0].mxu0
    %v1943 = vadd.f32 0.0, %v1942
    %v1944 = vpop.f32.mrb[0].mxu0
    %1945 = vdwg.mxu0
    %v1946 = vpack.c.bf16 %v1943, %v1940
    %v1948 = vsel %vm272, %v1946, 0
    %v1951 = vsel %vm635, %v1705, 0
    %1953 = vmatprep.subr.bf16.mxu0 0
    %1954 = vmatpush1.bf16.msra.mxu0 %v1951
    %1955 = vmatprep.subr.bf16.mxu0 0
    %1956 = vmatpush1.bf16.msra.mxu0 0
    %1957 = vmatprep.subr.bf16.mxu0 0
    %1958 = vmatpush1.bf16.msra.mxu0 0
    %1959 = vmatprep.subr.bf16.mxu0 0
    %1960 = vmatpush1.bf16.msra.mxu0 0
    %1961 = vmatprep.subr.bf16.mxu0 0
    %1962 = vmatpush1.bf16.msra.mxu0 0
    %1963 = vmatprep.subr.bf16.mxu0 0
    %1964 = vmatpush1.bf16.msra.mxu0 0
    %1965 = vmatprep.subr.bf16.mxu0 0
    %1966 = vmatpush1.bf16.msra.mxu0 0
    %1967 = vmatprep.subr.bf16.mxu0 0
    %1968 = vmatpush1.bf16.msra.mxu0 0
    %1969 = vmatprep.subr.bf16.mxu0 0
    %1970 = vmatpush1.bf16.msra.mxu0 0
    %1971 = vmatprep.subr.bf16.mxu0 0
    %1972 = vmatpush1.bf16.msra.mxu0 0
    %1973 = vmatprep.subr.bf16.mxu0 0
    %1974 = vmatpush1.bf16.msra.mxu0 0
    %1975 = vmatprep.subr.bf16.mxu0 0
    %1976 = vmatpush1.bf16.msra.mxu0 0
    %1977 = vmatprep.subr.bf16.mxu0 0
    %1978 = vmatpush1.bf16.msra.mxu0 0
    %1979 = vmatprep.subr.bf16.mxu0 0
    %1980 = vmatpush1.bf16.msra.mxu0 0
    %1981 = vmatprep.subr.bf16.mxu0 0
    %1982 = vmatpush1.bf16.msra.mxu0 0
    %1983 = vmatprep.subr.bf16.mxu0 0
    %1984 = vmatpush1.bf16.msra.mxu0 0
    %1985 = vmatprep.mubr.bf16.mxu0 0
    %1986 = vmatmul.mubr.bf16.gmra.mrb[0].mxu0 %v1948
    %v1987 = vpop.f32.mrb[0].mxu0
    %v1988 = vadd.f32 0.0, %v1987
    %v1989 = vpop.f32.mrb[0].mxu0
    %v1990 = vpop.f32.mrb[0].mxu0
    %v1991 = vadd.f32 0.0, %v1990
    %v1992 = vpop.f32.mrb[0].mxu0
    %1993 = vdwg.mxu0
    %v1994 = vadd.f32 %v1897, %v1988
    %v1995 = vadd.f32 %v1898, %v1991
    %1996 = vrot.lane.b32.xlu0 %v1389, 104
    %v1997 = vpop.permute.xlu0 %1996
    %v2000 = vsel %vm474, %v1701, 0
    %2002 = vmatprep.subr.bf16.mxu0 0
    %2003 = vmatpush1.bf16.msra.mxu0 %v1997
    %2004 = vmatprep.subr.bf16.mxu0 0
    %2005 = vmatpush1.bf16.msra.mxu0 0
    %2006 = vmatprep.subr.bf16.mxu0 0
    %2007 = vmatpush1.bf16.msra.mxu0 0
    %2008 = vmatprep.subr.bf16.mxu0 0
    %2009 = vmatpush1.bf16.msra.mxu0 0
    %2010 = vmatprep.subr.bf16.mxu0 0
    %2011 = vmatpush1.bf16.msra.mxu0 0
    %2012 = vmatprep.subr.bf16.mxu0 0
    %2013 = vmatpush1.bf16.msra.mxu0 0
    %2014 = vmatprep.subr.bf16.mxu0 0
    %2015 = vmatpush1.bf16.msra.mxu0 0
    %2016 = vmatprep.subr.bf16.mxu0 0
    %2017 = vmatpush1.bf16.msra.mxu0 0
    %2018 = vmatprep.subr.bf16.mxu0 0
    %2019 = vmatpush1.bf16.msra.mxu0 0
    %2020 = vmatprep.subr.bf16.mxu0 0
    %2021 = vmatpush1.bf16.msra.mxu0 0
    %2022 = vmatprep.subr.bf16.mxu0 0
    %2023 = vmatpush1.bf16.msra.mxu0 0
    %2024 = vmatprep.subr.bf16.mxu0 0
    %2025 = vmatpush1.bf16.msra.mxu0 0
    %2026 = vmatprep.subr.bf16.mxu0 0
    %2027 = vmatpush1.bf16.msra.mxu0 0
    %2028 = vmatprep.subr.bf16.mxu0 0
    %2029 = vmatpush1.bf16.msra.mxu0 0
    %2030 = vmatprep.subr.bf16.mxu0 0
    %2031 = vmatpush1.bf16.msra.mxu0 0
    %2032 = vmatprep.subr.bf16.mxu0 0
    %2033 = vmatpush1.bf16.msra.mxu0 0
    %2034 = vmatprep.mubr.bf16.mxu0 0
    %2035 = vmatmul.mubr.bf16.gmra.mrb[0].mxu0 %v2000
    %v2036 = vpop.f32.mrb[0].mxu0
    %v2037 = vadd.f32 0.0, %v2036
    %v2038 = vpop.f32.mrb[0].mxu0
    %v2039 = vpop.f32.mrb[0].mxu0
    %v2040 = vadd.f32 0.0, %v2039
    %v2041 = vpop.f32.mrb[0].mxu0
    %2042 = vdwg.mxu0
    %v2043 = vpack.c.bf16 %v2040, %v2037
    %v2045 = vsel %vm272, %v2043, 0
    %v2048 = vsel %vm635, %v1706, 0
    %2050 = vmatprep.subr.bf16.mxu0 0
    %2051 = vmatpush1.bf16.msra.mxu0 %v2048
    %2052 = vmatprep.subr.bf16.mxu0 0
    %2053 = vmatpush1.bf16.msra.mxu0 0
    %2054 = vmatprep.subr.bf16.mxu0 0
    %2055 = vmatpush1.bf16.msra.mxu0 0
    %2056 = vmatprep.subr.bf16.mxu0 0
    %2057 = vmatpush1.bf16.msra.mxu0 0
    %2058 = vmatprep.subr.bf16.mxu0 0
    %2059 = vmatpush1.bf16.msra.mxu0 0
    %2060 = vmatprep.subr.bf16.mxu0 0
    %2061 = vmatpush1.bf16.msra.mxu0 0
    %2062 = vmatprep.subr.bf16.mxu0 0
    %2063 = vmatpush1.bf16.msra.mxu0 0
    %2064 = vmatprep.subr.bf16.mxu0 0
    %2065 = vmatpush1.bf16.msra.mxu0 0
    %2066 = vmatprep.subr.bf16.mxu0 0
    %2067 = vmatpush1.bf16.msra.mxu0 0
    %2068 = vmatprep.subr.bf16.mxu0 0
    %2069 = vmatpush1.bf16.msra.mxu0 0
    %2070 = vmatprep.subr.bf16.mxu0 0
    %2071 = vmatpush1.bf16.msra.mxu0 0
    %2072 = vmatprep.subr.bf16.mxu0 0
    %2073 = vmatpush1.bf16.msra.mxu0 0
    %2074 = vmatprep.subr.bf16.mxu0 0
    %2075 = vmatpush1.bf16.msra.mxu0 0
    %2076 = vmatprep.subr.bf16.mxu0 0
    %2077 = vmatpush1.bf16.msra.mxu0 0
    %2078 = vmatprep.subr.bf16.mxu0 0
    %2079 = vmatpush1.bf16.msra.mxu0 0
    %2080 = vmatprep.subr.bf16.mxu0 0
    %2081 = vmatpush1.bf16.msra.mxu0 0
    %2082 = vmatprep.mubr.bf16.mxu0 0
    %2083 = vmatmul.mubr.bf16.gmra.mrb[0].mxu0 %v2045
    %v2084 = vpop.f32.mrb[0].mxu0
    %v2085 = vadd.f32 0.0, %v2084
    %v2086 = vpop.f32.mrb[0].mxu0
    %v2087 = vpop.f32.mrb[0].mxu0
    %v2088 = vadd.f32 0.0, %v2087
    %v2089 = vpop.f32.mrb[0].mxu0
    %2090 = vdwg.mxu0
    %v2091 = vadd.f32 %v1994, %v2085
    %v2092 = vadd.f32 %v1995, %v2088
    %s2093 = scalar_lea.vmem %s8, 1
    %v2094 = vld [vmem:[%s2093] sm:$0x1]
    %v2095 = vmul.f32 %v2091, %v2091
    %v2096 = vmul.f32 %v2092, %v2092
    %v2097 = vsel %vm74, %v2095, 0.0
    %2098 = vadd.xlane.f32.xlu0 %v2097
    %v2099 = vpop.xlane.xlu0 %2098
    %v2100 = vsel %vm74, %v2096, 0.0
    %2101 = vadd.xlane.f32.xlu0 %v2100
    %v2102 = vpop.xlane.xlu0 %2101
    %v2103 = vmul.f32 %v2099, %v81
    %v2104 = vmul.f32 %v2102, %v81
    %v2105 = vadd.f32 %v2103, 1e-06
    %v2106 = vadd.f32 %v2104, 1e-06
    %v2107 = vrsqrt.pop %v2105
    %v2108 = vrsqrt.pop %v2106
    %v2109 = vmul.f32 %v2091, %v2107
    %v2110 = vmul.f32 %v2092, %v2108
    %v2112 = vlaneseq
    %v2113 = vshrl.u32 %v2112, 7
    %v2114 = vsub.s32 0, %v2113
    %v2115 = vrot.slane %v2094, %v2114
    %v2117 = vmul.f32 %v2109, %v2115
    %v2118 = vmul.f32 %v2110, %v2115
    %v2119 = vpack.c.bf16 %v2118, %v2117
    %s2120 = scalar_lea.vmem %s9, 16
    %v2121 = vld [vmem:[%s2120] sm:$0xf]
    %v2122 = vld [vmem:[%s2120 + $0x4] sm:$0xf]
    %v2123 = vld [vmem:[%s2120 + $0x8] sm:$0xf]
    %v2124 = vld [vmem:[%s2120 + $0xc] sm:$0xf]
    %v2129 = vunpack.c.l.b16 %v2121
    %v2130 = vunpack.c.l.b16 %v2122
    %v2131 = vunpack.c.l.b16 %v2123
    %v2132 = vunpack.c.l.b16 %v2124
    %v2133 = vpack.c.b16 %v2130, %v2129
    %v2134 = vpack.c.b16 %v2132, %v2131
    %v2138 = vsel %vm74, %v2119, 0
    %2140 = vmatprep.subr.bf16.mxu0 0
    %2141 = vmatpush1.bf16.msra.mxu0 %v2133
    %2142 = vmatprep.subr.bf16.mxu0 0
    %2143 = vmatpush1.bf16.msra.mxu0 %v2134
    %2144 = vmatprep.subr.bf16.mxu0 0
    %2145 = vmatpush1.bf16.msra.mxu0 0
    %2146 = vmatprep.subr.bf16.mxu0 0
    %2147 = vmatpush1.bf16.msra.mxu0 0
    %2148 = vmatprep.subr.bf16.mxu0 0
    %2149 = vmatpush1.bf16.msra.mxu0 0
    %2150 = vmatprep.subr.bf16.mxu0 0
    %2151 = vmatpush1.bf16.msra.mxu0 0
    %2152 = vmatprep.subr.bf16.mxu0 0
    %2153 = vmatpush1.bf16.msra.mxu0 0
    %2154 = vmatprep.subr.bf16.mxu0 0
    %2155 = vmatpush1.bf16.msra.mxu0 0
    %2156 = vmatprep.subr.bf16.mxu0 0
    %2157 = vmatpush1.bf16.msra.mxu0 0
    %2158 = vmatprep.subr.bf16.mxu0 0
    %2159 = vmatpush1.bf16.msra.mxu0 0
    %2160 = vmatprep.subr.bf16.mxu0 0
    %2161 = vmatpush1.bf16.msra.mxu0 0
    %2162 = vmatprep.subr.bf16.mxu0 0
    %2163 = vmatpush1.bf16.msra.mxu0 0
    %2164 = vmatprep.subr.bf16.mxu0 0
    %2165 = vmatpush1.bf16.msra.mxu0 0
    %2166 = vmatprep.subr.bf16.mxu0 0
    %2167 = vmatpush1.bf16.msra.mxu0 0
    %2168 = vmatprep.subr.bf16.mxu0 0
    %2169 = vmatpush1.bf16.msra.mxu0 0
    %2170 = vmatprep.subr.bf16.mxu0 0
    %2171 = vmatpush1.bf16.msra.mxu0 0
    %2172 = vmatprep.mubr.bf16.mxu0 0
    %2173 = vmatmul.mubr.bf16.gmra.mrb[0].mxu0 %v2138
    %v2174 = vpop.f32.mrb[0].mxu0
    %v2175 = vadd.f32 0.0, %v2174
    %v2176 = vpop.f32.mrb[0].mxu0
    %v2177 = vpop.f32.mrb[0].mxu0
    %v2178 = vadd.f32 0.0, %v2177
    %v2179 = vpop.f32.mrb[0].mxu0
    %2180 = vdwg.mxu0
    %s2181 = scalar_lea.vmem %s10, 16
    %v2182 = vld [vmem:[%s2181] sm:$0xf]
    %v2183 = vld [vmem:[%s2181 + $0x4] sm:$0xf]
    %v2184 = vld [vmem:[%s2181 + $0x8] sm:$0xf]
    %v2185 = vld [vmem:[%s2181 + $0xc] sm:$0xf]
    %v2190 = vunpack.c.l.b16 %v2182
    %v2191 = vunpack.c.l.b16 %v2183
    %v2192 = vunpack.c.l.b16 %v2184
    %v2193 = vunpack.c.l.b16 %v2185
    %v2194 = vpack.c.b16 %v2191, %v2190
    %v2195 = vpack.c.b16 %v2193, %v2192
    %2198 = vmatprep.subr.bf16.mxu0 0
    %2199 = vmatpush1.bf16.msra.mxu0 %v2194
    %2200 = vmatprep.subr.bf16.mxu0 0
    %2201 = vmatpush1.bf16.msra.mxu0 %v2195
    %2202 = vmatprep.subr.bf16.mxu0 0
    %2203 = vmatpush1.bf16.msra.mxu0 0
    %2204 = vmatprep.subr.bf16.mxu0 0
    %2205 = vmatpush1.bf16.msra.mxu0 0
    %2206 = vmatprep.subr.bf16.mxu0 0
    %2207 = vmatpush1.bf16.msra.mxu0 0
    %2208 = vmatprep.subr.bf16.mxu0 0
    %2209 = vmatpush1.bf16.msra.mxu0 0
    %2210 = vmatprep.subr.bf16.mxu0 0
    %2211 = vmatpush1.bf16.msra.mxu0 0
    %2212 = vmatprep.subr.bf16.mxu0 0
    %2213 = vmatpush1.bf16.msra.mxu0 0
    %2214 = vmatprep.subr.bf16.mxu0 0
    %2215 = vmatpush1.bf16.msra.mxu0 0
    %2216 = vmatprep.subr.bf16.mxu0 0
    %2217 = vmatpush1.bf16.msra.mxu0 0
    %2218 = vmatprep.subr.bf16.mxu0 0
    %2219 = vmatpush1.bf16.msra.mxu0 0
    %2220 = vmatprep.subr.bf16.mxu0 0
    %2221 = vmatpush1.bf16.msra.mxu0 0
    %2222 = vmatprep.subr.bf16.mxu0 0
    %2223 = vmatpush1.bf16.msra.mxu0 0
    %2224 = vmatprep.subr.bf16.mxu0 0
    %2225 = vmatpush1.bf16.msra.mxu0 0
    %2226 = vmatprep.subr.bf16.mxu0 0
    %2227 = vmatpush1.bf16.msra.mxu0 0
    %2228 = vmatprep.subr.bf16.mxu0 0
    %2229 = vmatpush1.bf16.msra.mxu0 0
    %2230 = vmatprep.mubr.bf16.mxu0 0
    %2231 = vmatmul.mubr.bf16.gmra.mrb[0].mxu0 %v2138
    %v2232 = vpop.f32.mrb[0].mxu0
    %v2233 = vadd.f32 0.0, %v2232
    %v2234 = vpop.f32.mrb[0].mxu0
    %v2235 = vpop.f32.mrb[0].mxu0
    %v2236 = vadd.f32 0.0, %v2235
    %v2237 = vpop.f32.mrb[0].mxu0
    %2238 = vdwg.mxu0
    %v2239 = vxor.u32 %v2175, 2147483648
    %v2240 = vxor.u32 %v2178, 2147483648
    %v2241 = vmul.f32 %v2239, 1.442695
    %v2242 = vpow.pop %v2241
    %v2243 = vmul.f32 %v2240, 1.442695
    %v2244 = vpow.pop %v2243
    %v2245 = vadd.f32 %v2242, 1.0
    %v2246 = vadd.f32 %v2244, 1.0
    %v2247 = vrcp.pop %v2245
    %v2248 = vmul.f32 1.0, %v2247
    %v2249 = vrcp.pop %v2246
    %v2250 = vmul.f32 1.0, %v2249
    %v2251 = vmul.f32 %v2175, %v2248
    %v2252 = vmul.f32 %v2178, %v2250
    %v2253 = vmul.f32 %v2251, %v2233
    %v2254 = vmul.f32 %v2252, %v2236
    %v2255 = vpack.c.bf16 %v2254, %v2253
    %s2256 = scalar_lea.vmem %s11, 32
    %v2257 = vld [vmem:[%s2256] sm:$0xf]
    %v2258 = vld [vmem:[%s2256 + $0x4] sm:$0xf]
    %v2259 = vld [vmem:[%s2256 + $0x8] sm:$0xf]
    %v2260 = vld [vmem:[%s2256 + $0xc] sm:$0xf]
    %v2261 = vld [vmem:[%s2256 + $0x10] sm:$0xf]
    %v2262 = vld [vmem:[%s2256 + $0x14] sm:$0xf]
    %v2263 = vld [vmem:[%s2256 + $0x18] sm:$0xf]
    %v2264 = vld [vmem:[%s2256 + $0x1c] sm:$0xf]
    %v2273 = vunpack.c.l.b16 %v2257
    %v2274 = vunpack.c.l.b16 %v2258
    %v2275 = vunpack.c.l.b16 %v2259
    %v2276 = vunpack.c.l.b16 %v2260
    %v2277 = vunpack.c.l.b16 %v2261
    %v2278 = vunpack.c.l.b16 %v2262
    %v2279 = vunpack.c.l.b16 %v2263
    %v2280 = vunpack.c.l.b16 %v2264
    %v2281 = vpack.c.b16 %v2274, %v2273
    %v2282 = vpack.c.b16 %v2276, %v2275
    %v2283 = vpack.c.b16 %v2278, %v2277
    %v2284 = vpack.c.b16 %v2280, %v2279
    %v2290 = vsel %vm1166, %v2255, 0
    %2292 = vmatprep.subr.bf16.mxu0 0
    %2293 = vmatpush1.bf16.msra.mxu0 %v2281
    %2294 = vmatprep.subr.bf16.mxu0 0
    %2295 = vmatpush1.bf16.msra.mxu0 %v2282
    %2296 = vmatprep.subr.bf16.mxu0 0
    %2297 = vmatpush1.bf16.msra.mxu0 %v2283
    %2298 = vmatprep.subr.bf16.mxu0 0
    %2299 = vmatpush1.bf16.msra.mxu0 %v2284
    %2300 = vmatprep.subr.bf16.mxu0 0
    %2301 = vmatpush1.bf16.msra.mxu0 0
    %2302 = vmatprep.subr.bf16.mxu0 0
    %2303 = vmatpush1.bf16.msra.mxu0 0
    %2304 = vmatprep.subr.bf16.mxu0 0
    %2305 = vmatpush1.bf16.msra.mxu0 0
    %2306 = vmatprep.subr.bf16.mxu0 0
    %2307 = vmatpush1.bf16.msra.mxu0 0
    %2308 = vmatprep.subr.bf16.mxu0 0
    %2309 = vmatpush1.bf16.msra.mxu0 0
    %2310 = vmatprep.subr.bf16.mxu0 0
    %2311 = vmatpush1.bf16.msra.mxu0 0
    %2312 = vmatprep.subr.bf16.mxu0 0
    %2313 = vmatpush1.bf16.msra.mxu0 0
    %2314 = vmatprep.subr.bf16.mxu0 0
    %2315 = vmatpush1.bf16.msra.mxu0 0
    %2316 = vmatprep.subr.bf16.mxu0 0
    %2317 = vmatpush1.bf16.msra.mxu0 0
    %2318 = vmatprep.subr.bf16.mxu0 0
    %2319 = vmatpush1.bf16.msra.mxu0 0
    %2320 = vmatprep.subr.bf16.mxu0 0
    %2321 = vmatpush1.bf16.msra.mxu0 0
    %2322 = vmatprep.subr.bf16.mxu0 0
    %2323 = vmatpush1.bf16.msra.mxu0 0
    %2324 = vmatprep.mubr.bf16.mxu0 0
    %2325 = vmatmul.mubr.bf16.gmra.mrb[0].mxu0 %v2290
    %v2326 = vpop.f32.mrb[0].mxu0
    %v2327 = vadd.f32 0.0, %v2326
    %v2328 = vpop.f32.mrb[0].mxu0
    %v2329 = vpop.f32.mrb[0].mxu0
    %v2330 = vadd.f32 0.0, %v2329
    %v2331 = vpop.f32.mrb[0].mxu0
    %2332 = vdwg.mxu0
    %v2333 = vadd.f32 %v2091, %v2327
    %v2334 = vadd.f32 %v2092, %v2330
    %v2335 = vld [vmem:[%s13] sm:$0xff]
    %v2337 = vsel %vm474, %v2335, 0
    %2339 = vmatprep.subr.mxu0 0.0
    %2340 = vmatpush1.msra.mxu0 %v2333
    %2341 = vmatprep.subr.mxu0 0.0
    %2342 = vmatpush1.msra.mxu0 %v2334
    %2343 = vmatprep.subr.mxu0 0.0
    %2344 = vmatpush1.msra.mxu0 0.0
    %2345 = vmatprep.subr.mxu0 0.0
    %2346 = vmatpush1.msra.mxu0 0.0
    %2347 = vmatprep.subr.mxu0 0.0
    %2348 = vmatpush1.msra.mxu0 0.0
    %2349 = vmatprep.subr.mxu0 0.0
    %2350 = vmatpush1.msra.mxu0 0.0
    %2351 = vmatprep.subr.mxu0 0.0
    %2352 = vmatpush1.msra.mxu0 0.0
    %2353 = vmatprep.subr.mxu0 0.0
    %2354 = vmatpush1.msra.mxu0 0.0
    %2355 = vmatprep.subr.mxu0 0.0
    %2356 = vmatpush1.msra.mxu0 0.0
    %2357 = vmatprep.subr.mxu0 0.0
    %2358 = vmatpush1.msra.mxu0 0.0
    %2359 = vmatprep.subr.mxu0 0.0
    %2360 = vmatpush1.msra.mxu0 0.0
    %2361 = vmatprep.subr.mxu0 0.0
    %2362 = vmatpush1.msra.mxu0 0.0
    %2363 = vmatprep.subr.mxu0 0.0
    %2364 = vmatpush1.msra.mxu0 0.0
    %2365 = vmatprep.subr.mxu0 0.0
    %2366 = vmatpush1.msra.mxu0 0.0
    %2367 = vmatprep.subr.mxu0 0.0
    %2368 = vmatpush1.msra.mxu0 0.0
    %2369 = vmatprep.subr.mxu0 0.0
    %2370 = vmatpush1.msra.mxu0 0.0
    %2371 = vmatprep.subr.mxu0 0.0
    %2372 = vmatpush1.msra.mxu0 0.0
    %2373 = vmatprep.subr.mxu0 0.0
    %2374 = vmatpush1.msra.mxu0 0.0
    %2375 = vmatprep.subr.mxu0 0.0
    %2376 = vmatpush1.msra.mxu0 0.0
    %2377 = vmatprep.subr.mxu0 0.0
    %2378 = vmatpush1.msra.mxu0 0.0
    %2379 = vmatprep.subr.mxu0 0.0
    %2380 = vmatpush1.msra.mxu0 0.0
    %2381 = vmatprep.subr.mxu0 0.0
    %2382 = vmatpush1.msra.mxu0 0.0
    %2383 = vmatprep.subr.mxu0 0.0
    %2384 = vmatpush1.msra.mxu0 0.0
    %2385 = vmatprep.subr.mxu0 0.0
    %2386 = vmatpush1.msra.mxu0 0.0
    %2387 = vmatprep.subr.mxu0 0.0
    %2388 = vmatpush1.msra.mxu0 0.0
    %2389 = vmatprep.subr.mxu0 0.0
    %2390 = vmatpush1.msra.mxu0 0.0
    %2391 = vmatprep.subr.mxu0 0.0
    %2392 = vmatpush1.msra.mxu0 0.0
    %2393 = vmatprep.subr.mxu0 0.0
    %2394 = vmatpush1.msra.mxu0 0.0
    %2395 = vmatprep.subr.mxu0 0.0
    %2396 = vmatpush1.msra.mxu0 0.0
    %2397 = vmatprep.subr.mxu0 0.0
    %2398 = vmatpush1.msra.mxu0 0.0
    %2399 = vmatprep.subr.mxu0 0.0
    %2400 = vmatpush1.msra.mxu0 0.0
    %2401 = vmatprep.subr.mxu0 0.0
    %2402 = vmatpush1.msra.mxu0 0.0
    %2403 = vmatprep.mubr.f32.mxu0 0.0
    %2404 = vmatmul.mubr.f32.gmra.mrb[0].mxu0 %v2337
    %v2405 = vpop.f32.mrb[0].mxu0
    %v2406 = vadd.f32 0.0, %v2405
    %v2407 = vpop.f32.mrb[0].mxu0
    %2408 = vdwg.mxu0
    %v2409 = vld [vmem:[%s12] sm:$0x1]
    %v2410 = vmul.f32 %v2406, %v2406
    %v2411 = vsel %vm74, %v2410, 0.0
    %2412 = vadd.xlane.f32.xlu0 %v2411
    %v2413 = vpop.xlane.xlu0 %2412
    %v2414 = vmul.f32 %v2413, %v81
    %v2415 = vadd.f32 %v2414, 1e-06
    %v2416 = vrsqrt.pop %v2415
    %v2417 = vmul.f32 %v2406, %v2416
    %v2419 = vlaneseq
    %v2420 = vshrl.u32 %v2419, 7
    %v2421 = vsub.s32 0, %v2420
    %v2422 = vrot.slane %v2409, %v2421
    %v2424 = vmul.f32 %v2417, %v2422
    %v2425 = vpack.c.bf16 %v2424, %v2424
    %v2426 = vld [vmem:[%s14] sm:$0xf]
    %v2427 = vld [vmem:[%s14 + $0x4] sm:$0xf]
    %v2428 = vld [vmem:[%s14 + $0x8] sm:$0xf]
    %v2429 = vld [vmem:[%s14 + $0xc] sm:$0xf]
    %v2430 = vld [vmem:[%s15] sm:$0x1]
    %v2432 = vlaneseq
    %v2433 = vshrl.u32 %v2432, 7
    %v2434 = vsub.s32 0, %v2433
    %v2435 = vrot.slane %v2430, %v2434
    %v2441 = vunpack.c.l.b16 %v2426
    %v2442 = vunpack.c.l.b16 %v2427
    %v2443 = vunpack.c.l.b16 %v2428
    %v2444 = vunpack.c.l.b16 %v2429
    %v2445 = vpack.c.b16 %v2442, %v2441
    %v2446 = vpack.c.b16 %v2444, %v2443
    %v2450 = vsel %vm74, %v2425, 0
    %2452 = vmatprep.subr.bf16.mxu0 0
    %2453 = vmatpush1.bf16.msra.mxu0 %v2445
    %2454 = vmatprep.subr.bf16.mxu0 0
    %2455 = vmatpush1.bf16.msra.mxu0 %v2446
    %2456 = vmatprep.subr.bf16.mxu0 0
    %2457 = vmatpush1.bf16.msra.mxu0 0
    %2458 = vmatprep.subr.bf16.mxu0 0
    %2459 = vmatpush1.bf16.msra.mxu0 0
    %2460 = vmatprep.subr.bf16.mxu0 0
    %2461 = vmatpush1.bf16.msra.mxu0 0
    %2462 = vmatprep.subr.bf16.mxu0 0
    %2463 = vmatpush1.bf16.msra.mxu0 0
    %2464 = vmatprep.subr.bf16.mxu0 0
    %2465 = vmatpush1.bf16.msra.mxu0 0
    %2466 = vmatprep.subr.bf16.mxu0 0
    %2467 = vmatpush1.bf16.msra.mxu0 0
    %2468 = vmatprep.subr.bf16.mxu0 0
    %2469 = vmatpush1.bf16.msra.mxu0 0
    %2470 = vmatprep.subr.bf16.mxu0 0
    %2471 = vmatpush1.bf16.msra.mxu0 0
    %2472 = vmatprep.subr.bf16.mxu0 0
    %2473 = vmatpush1.bf16.msra.mxu0 0
    %2474 = vmatprep.subr.bf16.mxu0 0
    %2475 = vmatpush1.bf16.msra.mxu0 0
    %2476 = vmatprep.subr.bf16.mxu0 0
    %2477 = vmatpush1.bf16.msra.mxu0 0
    %2478 = vmatprep.subr.bf16.mxu0 0
    %2479 = vmatpush1.bf16.msra.mxu0 0
    %2480 = vmatprep.subr.bf16.mxu0 0
    %2481 = vmatpush1.bf16.msra.mxu0 0
    %2482 = vmatprep.subr.bf16.mxu0 0
    %2483 = vmatpush1.bf16.msra.mxu0 0
    %2484 = vmatprep.mubr.bf16.mxu0 0
    %2485 = vmatmul.mubr.bf16.gmra.mrb[0].mxu0 %v2450
    %v2486 = vpop.f32.mrb[0].mxu0
    %v2487 = vadd.f32 %v2435, %v2486
    %v2488 = vpop.f32.mrb[0].mxu0
    %v2489 = vpop.f32.mrb[0].mxu0
    %v2490 = vpop.f32.mrb[0].mxu0
    %2491 = vdwg.mxu0
    %2492 = vst [vmem:[%s18] sm:$0xff] %v2487
    %v2493 = vld [vmem:[%s16] sm:$0xff]
    %v2494 = vsub.f32 %v2487, %v2493
    %v2495 = vld [vmem:[%s17] sm:$0xff]
    %v2496 = vmul.f32 %v2494, %v2495
    %v2497 = vmul.f32 %v2496, %v2496
    %2498 = vadd.xlane.f32.xlu0 %v2497
    %v2499 = vpop.xlane.xlu0 %2498
    %v2500 = vrot.slane %v2499, 4
    %v2501 = vadd.f32 %v2499, %v2500
    %v2502 = vrot.slane %v2501, 2
    %v2503 = vadd.f32 %v2501, %v2502
    %v2504 = vrot.slane %v2503, 1
    %v2505 = vadd.f32 %v2503, %v2504
    %s2506 = vtos %v2505
    %v2507 = vstv %s2506
    %v2508 = vmul.f32 %v2507, 0.045454547
    %vm2509 = vcmask 0
    %2510 = vst.msk [vmem:[#allocation2] sm:$0x1] %vm2509, %v2508
    // Predicated region
    $region74: #{forward_with_loss.1} parent=1 // pred_check
      _
    $region75: #{forward_with_loss.1} parent=1 // pred_check_branch
      %2512 = sbr.rel (0) target = $region77
    $region76: #{forward_with_loss.1} parent=1 // pred_region
      _
    $region77: #{forward_with_loss.1} parent=1 // pred_fallthru
      _
    // Predicated region
    $region78: #{forward_with_loss.1} parent=1 // pred_check
      _
    $region79: #{forward_with_loss.1} parent=1 // pred_check_branch
      %2514 = sbr.rel (0) target = $region81
    $region80: #{forward_with_loss.1} parent=1 // pred_region
      %s2516 = ssub.s32 16, 16
      %2517 = vsyncadd [#allocation3], %s2516
      %s2519 = sshll.u32 [#allocation2], 4
      %s2520 = int_to_ptr.vmem [resolvable:$true] %s2519
      %2522 = dma.vmem_to_hbm [thread:$0]  %s2520, 16, %s19, [#allocation3]
    $region81: #{forward_with_loss.1} parent=1 // pred_fallthru
      _
    // Predicated region
    $region82: #{forward_with_loss.1} parent=1 // pred_check
      _
    $region83: #{forward_with_loss.1} parent=1 // pred_check_branch
      %2524 = sbr.rel (0) target = $region85
    $region84: #{forward_with_loss.1} parent=1 // pred_region
      _
    $region85: #{forward_with_loss.1} parent=1 // pred_fallthru
      _
    // Predicated region
    $region86: #{forward_with_loss.1} parent=1 // pred_check
      _
    $region87: #{forward_with_loss.1} parent=1 // pred_check_branch
      %2526 = sbr.rel (0) target = $region89
    $region88: #{forward_with_loss.1} parent=1 // pred_region
      %2527 = dma.done [#allocation3], 16
    $region89: #{forward_with_loss.1} parent=1 // pred_fallthru
      _
    %2528 = vsyncpa [#allocation3], 1

</llo_original>
